<compile_context>
chip_gen: v7x
topology: tpu7x:2x2x1
jax: 0.10.0
libtpu: 0.0.40
codegen_flags: <defaults>
</compile_context>

<pallas_src>
import math
from functools import partial

import jax
import jax.numpy as jnp
from jax.experimental import pallas as pl
from jax.experimental.pallas import tpu as pltpu

# ----------------------------- config (small, consistent with module) -----------------------------
PAD_IDX = 1
VOCAB = 32
NUM_LAYERS = 2
EMBED_DIM = 32
FFN_DIM = 64
NUM_HEADS = 4
HEAD_DIM = EMBED_DIM // NUM_HEADS
MAX_SEQ_LEN = 16
ATTN_SCALE_FACTOR = 2               # self.attn_scale_factor = 2
EPS = 1e-5                          # nn.LayerNorm default

POS_SCALING = float(EMBED_DIM / NUM_HEADS * ATTN_SCALE_FACTOR) ** (-0.5)
ATTN_SCALING = float(HEAD_DIM * ATTN_SCALE_FACTOR) ** (-0.5)

VMEM = pltpu.MemorySpace.VMEM


def _vspec():
    # full-array block resident in VMEM (entire problem is < 100 KiB; no tiling needed)
    return pl.BlockSpec(memory_space=VMEM)


# ----------------------------------------- fused kernel -------------------------------------------
def _ln(x, g, b):
    mu = jnp.mean(x, axis=-1, keepdims=True)
    d = x - mu
    var = jnp.mean(d * d, axis=-1, keepdims=True)
    return d * jax.lax.rsqrt(var + EPS) * g + b


def _fused_forward_kernel(
    # inputs
    x_ref, kbias_ref,
    posw_ref, pos_ln_g_ref, pos_ln_b_ref,
    pqw_ref, pqb_ref, pkw_ref, pkb_ref,
    qkvw_ref, qkvb_ref, ow_ref, ob_ref,
    ln1g_ref, ln1b_ref, f1w_ref, f1b_ref,
    f2w_ref, f2b_ref, ln2g_ref, ln2b_ref,
    # outputs
    states_ref, apb_ref,
    # scratch
    apb_full,
    *, B, T, C, H, D, F, L,
):
    f32 = jnp.float32

    # ---- TUPE absolute position bias: pos_ln -> pos_q/pos_k linears -> per-head "NT" bmm ----
    pw = _ln(posw_ref[...], pos_ln_g_ref[...], pos_ln_b_ref[...])                    # (T+1, C)
    pq = (jnp.dot(pw, pqw_ref[...], preferred_element_type=f32) + pqb_ref[...]) * POS_SCALING
    pk = jnp.dot(pw, pkw_ref[...], preferred_element_type=f32) + pkb_ref[...]
    for h in range(H):
        qh = pq[:, h * D:(h + 1) * D]                                                # (T+1, D)
        kh = pk[:, h * D:(h + 1) * D]
        apb_full[h] = jnp.einsum("id,jd->ij", qh, kh, preferred_element_type=f32)    # (T+1, T+1)

    # ---- CLS row/col surgery (in-kernel, no XLA scatter) + key-padding additive bias ----
    row = jax.lax.broadcasted_iota(jnp.int32, (T, T), 0)
    col = jax.lax.broadcasted_iota(jnp.int32, (T, T), 1)
    bias_heads = []
    for h in range(H):
        core = apb_full[h, pl.ds(1, T), pl.ds(1, T)]                                 # (T, T)
        c2o = apb_full[h, pl.ds(0, 1), pl.ds(0, 1)]                                  # (1, 1)
        o2c = apb_full[h, pl.ds(1, 1), pl.ds(1, 1)]                                  # (1, 1)
        b = jnp.where(col == 0, o2c, core)      # abs_pos_bias[:, :, 0] = other_2_cls
        b = jnp.where(row == 0, c2o, b)         # abs_pos_bias[:, 0, :] = cls_2_other
        apb_ref[h] = b
        bias_heads.append(b[None, :, :] + kbias_ref[...])                            # (B, T, T)

    # ---- encoder layers (post-LN, relu FFN), fully VMEM resident ----
    x = x_ref[...]                                                                   # (B*T, C)
    for l in range(L):
        # --- self-attention ---
        residual = x
        qkv = jnp.dot(x, qkvw_ref[l], preferred_element_type=f32) + qkvb_ref[l]      # (B*T, 3C)
        q = qkv[:, 0 * C:1 * C] * ATTN_SCALING
        k = qkv[:, 1 * C:2 * C]
        v = qkv[:, 2 * C:3 * C]
        heads = []
        for h in range(H):
            qh = q[:, h * D:(h + 1) * D].reshape(B, T, D)
            kh = k[:, h * D:(h + 1) * D].reshape(B, T, D)
            vh = v[:, h * D:(h + 1) * D].reshape(B, T, D)
            s = jnp.einsum("bqd,bkd->bqk", qh, kh, preferred_element_type=f32)       # (B, T, T)
            s = s + bias_heads[h]
            m = jnp.max(s, axis=-1, keepdims=True)
            p = jnp.exp(s - m)
            p = p * pl.reciprocal(jnp.sum(p, axis=-1, keepdims=True), approx=True)
            oh = jnp.einsum("bqk,bkd->bqd", p, vh, preferred_element_type=f32)       # (B, T, D)
            heads.append(oh.reshape(B * T, D))
        attn = jnp.concatenate(heads, axis=-1)                                       # (B*T, C)
        y = jnp.dot(attn, ow_ref[l], preferred_element_type=f32) + ob_ref[l]
        x = _ln(residual + y, ln1g_ref[l], ln1b_ref[l])

        # --- FFN ---
        residual = x
        h1 = jnp.dot(x, f1w_ref[l], preferred_element_type=f32) + f1b_ref[l]
        h1 = jnp.maximum(h1, 0.0)
        h2 = jnp.dot(h1, f2w_ref[l], preferred_element_type=f32) + f2b_ref[l]
        x = _ln(residual + h2, ln2g_ref[l], ln2b_ref[l])

        states_ref[l] = x


# --------------------------------------- parameter init -------------------------------------------
def init_params(key):
    """Weights are stored kernel-ready: pre-transposed (in, out), QKV concatenated,
    per-layer tensors stacked on a leading NUM_LAYERS axis."""
    keys = iter(jax.random.split(key, 64))

    def nrm(shape):
        return 0.02 * jax.random.normal(next(keys), shape, jnp.float32)

    C, F, L = EMBED_DIM, FFN_DIM, NUM_LAYERS
    p = {}
    emb = nrm((VOCAB, C))
    p["embed_tokens"] = emb.at[PAD_IDX].set(0.0)           # padding_idx row zeroed
    p["pos"] = nrm((MAX_SEQ_LEN + 1, C))                   # nn.Embedding(max_seq_len + 1, C)
    p["pos_q_w"] = nrm((C, C)); p["pos_q_b"] = jnp.zeros((1, C), jnp.float32)
    p["pos_k_w"] = nrm((C, C)); p["pos_k_b"] = jnp.zeros((1, C), jnp.float32)
    p["pos_ln_g"] = jnp.ones((1, C), jnp.float32)
    p["pos_ln_b"] = jnp.zeros((1, C), jnp.float32)

    p["qkv_w"] = nrm((L, C, 3 * C)); p["qkv_b"] = jnp.zeros((L, 1, 3 * C), jnp.float32)
    p["out_w"] = nrm((L, C, C));     p["out_b"] = jnp.zeros((L, 1, C), jnp.float32)
    p["ln1_g"] = jnp.ones((L, 1, C), jnp.float32); p["ln1_b"] = jnp.zeros((L, 1, C), jnp.float32)
    p["fc1_w"] = nrm((L, C, F));     p["fc1_b"] = jnp.zeros((L, 1, F), jnp.float32)
    p["fc2_w"] = nrm((L, F, C));     p["fc2_b"] = jnp.zeros((L, 1, C), jnp.float32)
    p["ln2_g"] = jnp.ones((L, 1, C), jnp.float32); p["ln2_b"] = jnp.zeros((L, 1, C), jnp.float32)
    return p


# ------------------------------------------- forward ----------------------------------------------
@partial(jax.jit, static_argnames=("last_state_only",))
def forward(params, tokens, last_state_only=False):
    # TODO(synk): dropout layers are identity (eval mode); rel_pos=False default branch -> no
    #             relative_attention_bias; the padding mask is always applied (all-zero mask is a
    #             no-op, matching the `padding_mask = None` shortcut of the reference).
    B, T = tokens.shape
    C, H, D, F, L = EMBED_DIM, NUM_HEADS, HEAD_DIM, FFN_DIM, NUM_LAYERS

    padding_mask = tokens == PAD_IDX
    pad_f = padding_mask.astype(jnp.float32)

    # token embedding gather + zero padded positions (glue; also serves as inner_states[0])
    x0 = params["embed_tokens"][tokens] * (1.0 - pad_f[..., None])                   # (B, T, C)
    x_in = x0.reshape(B * T, C)

    # additive key-padding bias, pre-broadcast ONCE (hoisted out of the per-layer kernel work)
    kbias = jnp.where(pad_f > 0.5, jnp.float32(-1e30), jnp.float32(0.0))[:, None, :]  # (B, 1, T)

    pos_rows = params["pos"][: T + 1]                                                # (T+1, C)

    kernel = partial(_fused_forward_kernel, B=B, T=T, C=C, H=H, D=D, F=F, L=L)
    states, abs_pos_bias = pl.pallas_call(
        kernel,
        out_shape=(
            jax.ShapeDtypeStruct((L, B * T, C), jnp.float32),   # per-layer outputs
            jax.ShapeDtypeStruct((H, T, T), jnp.float32),       # abs_pos_bias (after surgery)
        ),
        in_specs=[_vspec()] * 21,
        out_specs=(_vspec(), _vspec()),
        scratch_shapes=[pltpu.VMEM((H, T + 1, T + 1), jnp.float32)],
    )(
        x_in, kbias,
        pos_rows, params["pos_ln_g"], params["pos_ln_b"],
        params["pos_q_w"], params["pos_q_b"], params["pos_k_w"], params["pos_k_b"],
        params["qkv_w"], params["qkv_b"], params["out_w"], params["out_b"],
        params["ln1_g"], params["ln1_b"], params["fc1_w"], params["fc1_b"],
        params["fc2_w"], params["fc2_b"], params["ln2_g"], params["ln2_b"],
    )

    states = states.reshape(L, B, T, C)
    x_last = states[-1]
    sentence_rep = x_last[:, 0, :]                                                   # (B, C)
    if last_state_only:
        inner_states = [x_last]
    else:
        inner_states = [x0] + [states[l] for l in range(L)]
    return inner_states, sentence_rep, padding_mask, abs_pos_bias


# --------------------------------------------- main -----------------------------------------------
if __name__ == "__main__":
    key = jax.random.PRNGKey(0)
    pkey, tkey = jax.random.split(key)
    params = init_params(pkey)

    B, T = 2, 8
    tokens = jax.random.randint(tkey, (B, T), 3, VOCAB)   # avoid accidental pad tokens
    tokens = tokens.at[:, 0].set(2)                       # CLS-ish first token
    tokens = tokens.at[1, -2:].set(PAD_IDX)               # exercise the padding-mask path

    inner_states, sentence_rep, padding_mask, abs_pos_bias = forward(params, tokens)
    jax.block_until_ready(sentence_rep)
    jax.block_until_ready(inner_states[-1])
    jax.block_until_ready(abs_pos_bias)

    assert sentence_rep.shape == (B, EMBED_DIM)
    assert inner_states[-1].shape == (B, T, EMBED_DIM)
    assert len(inner_states) == NUM_LAYERS + 1
    assert abs_pos_bias.shape == (NUM_HEADS, T, T)
    assert bool(jnp.all(jnp.isfinite(sentence_rep)))
    assert bool(jnp.all(jnp.isfinite(inner_states[-1])))
    assert bool(jnp.all(jnp.isfinite(abs_pos_bias)))

    print("KERNEL_OK")
</pallas_src>

<mosaic_0001>
module attributes {stable_mosaic.version = 11 : i64} {
  func.func @_fused_forward_kernel(%arg0: memref<16x32xf32, #tpu.memory_space<vmem>>, %arg1: memref<2x1x8xf32, #tpu.memory_space<vmem>>, %arg2: memref<9x32xf32, #tpu.memory_space<vmem>>, %arg3: memref<1x32xf32, #tpu.memory_space<vmem>>, %arg4: memref<1x32xf32, #tpu.memory_space<vmem>>, %arg5: memref<32x32xf32, #tpu.memory_space<vmem>>, %arg6: memref<1x32xf32, #tpu.memory_space<vmem>>, %arg7: memref<32x32xf32, #tpu.memory_space<vmem>>, %arg8: memref<1x32xf32, #tpu.memory_space<vmem>>, %arg9: memref<2x32x96xf32, #tpu.memory_space<vmem>>, %arg10: memref<2x1x96xf32, #tpu.memory_space<vmem>>, %arg11: memref<2x32x32xf32, #tpu.memory_space<vmem>>, %arg12: memref<2x1x32xf32, #tpu.memory_space<vmem>>, %arg13: memref<2x1x32xf32, #tpu.memory_space<vmem>>, %arg14: memref<2x1x32xf32, #tpu.memory_space<vmem>>, %arg15: memref<2x32x64xf32, #tpu.memory_space<vmem>>, %arg16: memref<2x1x64xf32, #tpu.memory_space<vmem>>, %arg17: memref<2x64x32xf32, #tpu.memory_space<vmem>>, %arg18: memref<2x1x32xf32, #tpu.memory_space<vmem>>, %arg19: memref<2x1x32xf32, #tpu.memory_space<vmem>>, %arg20: memref<2x1x32xf32, #tpu.memory_space<vmem>>, %arg21: memref<2x16x32xf32, #tpu.memory_space<vmem>>, %arg22: memref<4x8x8xf32, #tpu.memory_space<vmem>>, %arg23: memref<4x9x9xf32, #tpu.memory_space<vmem>>) attributes {dimension_semantics = [], scalar_prefetch = 0 : i64, scratch_operands = 1 : i64, tpu.core_type = #tpu.core_type<tc>} {
    %c0 = arith.constant 0 : index
    %c0_0 = arith.constant 0 : index
    %0 = vector.load %arg2[%c0, %c0_0] : memref<9x32xf32, #tpu.memory_space<vmem>>, vector<9x32xf32>
    %c0_1 = arith.constant 0 : index
    %c0_2 = arith.constant 0 : index
    %1 = vector.load %arg3[%c0_1, %c0_2] : memref<1x32xf32, #tpu.memory_space<vmem>>, vector<1x32xf32>
    %c0_3 = arith.constant 0 : index
    %c0_4 = arith.constant 0 : index
    %2 = vector.load %arg4[%c0_3, %c0_4] : memref<1x32xf32, #tpu.memory_space<vmem>>, vector<1x32xf32>
    %cst = arith.constant dense<0.000000e+00> : vector<9xf32>
    %3 = vector.multi_reduction <add>, %0, %cst [1] : vector<9x32xf32> to vector<9xf32>
    %4 = vector.shape_cast %3 : vector<9xf32> to vector<9x1xf32>
    %cst_5 = arith.constant 3.200000e+01 : f32
    %5 = vector.broadcast %cst_5 : f32 to vector<9x1xf32>
    %6 = arith.divf %4, %5 : vector<9x1xf32>
    %7 = vector.broadcast %6 : vector<9x1xf32> to vector<9x32xf32>
    %8 = arith.subf %0, %7 : vector<9x32xf32>
    %9 = arith.mulf %8, %8 : vector<9x32xf32>
    %cst_6 = arith.constant dense<0.000000e+00> : vector<9xf32>
    %10 = vector.multi_reduction <add>, %9, %cst_6 [1] : vector<9x32xf32> to vector<9xf32>
    %11 = vector.shape_cast %10 : vector<9xf32> to vector<9x1xf32>
    %cst_7 = arith.constant 3.200000e+01 : f32
    %12 = vector.broadcast %cst_7 : f32 to vector<9x1xf32>
    %13 = arith.divf %11, %12 : vector<9x1xf32>
    %cst_8 = arith.constant 9.99999974E-6 : f32
    %14 = vector.broadcast %cst_8 : f32 to vector<9x1xf32>
    %15 = arith.addf %13, %14 : vector<9x1xf32>
    %16 = math.rsqrt %15 : vector<9x1xf32>
    %17 = vector.broadcast %16 : vector<9x1xf32> to vector<9x32xf32>
    %18 = arith.mulf %8, %17 : vector<9x32xf32>
    %19 = vector.broadcast %1 : vector<1x32xf32> to vector<9x32xf32>
    %20 = arith.mulf %18, %19 : vector<9x32xf32>
    %21 = vector.broadcast %2 : vector<1x32xf32> to vector<9x32xf32>
    %22 = arith.addf %20, %21 : vector<9x32xf32>
    %c0_9 = arith.constant 0 : index
    %c0_10 = arith.constant 0 : index
    %23 = vector.load %arg5[%c0_9, %c0_10] : memref<32x32xf32, #tpu.memory_space<vmem>>, vector<32x32xf32>
    %cst_11 = arith.constant dense<0.000000e+00> : vector<9x32xf32>
    %24 = tpu.matmul %22, %23, %cst_11 {dimension_numbers = #tpu.dot_dimension_numbers<[1], [0], [0], [1], [0, 0, 1, 1], [], []>} : vector<9x32xf32>, vector<32x32xf32>, vector<9x32xf32> -> vector<9x32xf32>
    %c0_12 = arith.constant 0 : index
    %c0_13 = arith.constant 0 : index
    %25 = vector.load %arg6[%c0_12, %c0_13] : memref<1x32xf32, #tpu.memory_space<vmem>>, vector<1x32xf32>
    %26 = vector.broadcast %25 : vector<1x32xf32> to vector<9x32xf32>
    %27 = arith.addf %24, %26 : vector<9x32xf32>
    %cst_14 = arith.constant 2.500000e-01 : f32
    %28 = vector.broadcast %cst_14 : f32 to vector<9x32xf32>
    %29 = arith.mulf %27, %28 : vector<9x32xf32>
    %c0_15 = arith.constant 0 : index
    %c0_16 = arith.constant 0 : index
    %30 = vector.load %arg7[%c0_15, %c0_16] : memref<32x32xf32, #tpu.memory_space<vmem>>, vector<32x32xf32>
    %cst_17 = arith.constant dense<0.000000e+00> : vector<9x32xf32>
    %31 = tpu.matmul %22, %30, %cst_17 {dimension_numbers = #tpu.dot_dimension_numbers<[1], [0], [0], [1], [0, 0, 1, 1], [], []>} : vector<9x32xf32>, vector<32x32xf32>, vector<9x32xf32> -> vector<9x32xf32>
    %c0_18 = arith.constant 0 : index
    %c0_19 = arith.constant 0 : index
    %32 = vector.load %arg8[%c0_18, %c0_19] : memref<1x32xf32, #tpu.memory_space<vmem>>, vector<1x32xf32>
    %33 = vector.broadcast %32 : vector<1x32xf32> to vector<9x32xf32>
    %34 = arith.addf %31, %33 : vector<9x32xf32>
    %35 = vector.extract_strided_slice %29 {offsets = [0, 0], sizes = [9, 8], strides = [1, 1]} : vector<9x32xf32> to vector<9x8xf32>
    %36 = vector.extract_strided_slice %34 {offsets = [0, 0], sizes = [9, 8], strides = [1, 1]} : vector<9x32xf32> to vector<9x8xf32>
    "tpu.trace_start"() <{level = 10 : i32, message = "id,jd->ij"}> : () -> ()
    %cst_20 = arith.constant dense<0.000000e+00> : vector<9x9xf32>
    %37 = tpu.matmul %35, %36, %cst_20 {dimension_numbers = #tpu.dot_dimension_numbers<[1], [1], [0], [0], [0, 0, 1, 0], [], []>} : vector<9x8xf32>, vector<9x8xf32>, vector<9x9xf32> -> vector<9x9xf32>
    "tpu.trace_stop"() : () -> ()
    %c0_21 = arith.constant 0 : index
    %c0_22 = arith.constant 0 : index
    %c0_23 = arith.constant 0 : index
    %38 = vector.load %arg23[%c0_21, %c0_22, %c0_23] : memref<4x9x9xf32, #tpu.memory_space<vmem>>, vector<1x9x9xf32>
    %39 = vector.shape_cast %38 : vector<1x9x9xf32> to vector<9x9xf32>
    %40 = vector.shape_cast %37 : vector<9x9xf32> to vector<1x9x9xf32>
    tpu.vector_store %arg23[%c0_21, %c0_22, %c0_23], %40 {strides = array<i32>} : memref<4x9x9xf32, #tpu.memory_space<vmem>>, vector<1x9x9xf32>,
    %41 = vector.extract_strided_slice %29 {offsets = [0, 8], sizes = [9, 8], strides = [1, 1]} : vector<9x32xf32> to vector<9x8xf32>
    %42 = vector.extract_strided_slice %34 {offsets = [0, 8], sizes = [9, 8], strides = [1, 1]} : vector<9x32xf32> to vector<9x8xf32>
    "tpu.trace_start"() <{level = 10 : i32, message = "id,jd->ij"}> : () -> ()
    %cst_24 = arith.constant dense<0.000000e+00> : vector<9x9xf32>
    %43 = tpu.matmul %41, %42, %cst_24 {dimension_numbers = #tpu.dot_dimension_numbers<[1], [1], [0], [0], [0, 0, 1, 0], [], []>} : vector<9x8xf32>, vector<9x8xf32>, vector<9x9xf32> -> vector<9x9xf32>
    "tpu.trace_stop"() : () -> ()
    %c1 = arith.constant 1 : index
    %c0_25 = arith.constant 0 : index
    %c0_26 = arith.constant 0 : index
    %44 = vector.load %arg23[%c1, %c0_25, %c0_26] : memref<4x9x9xf32, #tpu.memory_space<vmem>>, vector<1x9x9xf32>
    %45 = vector.shape_cast %44 : vector<1x9x9xf32> to vector<9x9xf32>
    %46 = vector.shape_cast %43 : vector<9x9xf32> to vector<1x9x9xf32>
    tpu.vector_store %arg23[%c1, %c0_25, %c0_26], %46 {strides = array<i32>} : memref<4x9x9xf32, #tpu.memory_space<vmem>>, vector<1x9x9xf32>,
    %47 = vector.extract_strided_slice %29 {offsets = [0, 16], sizes = [9, 8], strides = [1, 1]} : vector<9x32xf32> to vector<9x8xf32>
    %48 = vector.extract_strided_slice %34 {offsets = [0, 16], sizes = [9, 8], strides = [1, 1]} : vector<9x32xf32> to vector<9x8xf32>
    "tpu.trace_start"() <{level = 10 : i32, message = "id,jd->ij"}> : () -> ()
    %cst_27 = arith.constant dense<0.000000e+00> : vector<9x9xf32>
    %49 = tpu.matmul %47, %48, %cst_27 {dimension_numbers = #tpu.dot_dimension_numbers<[1], [1], [0], [0], [0, 0, 1, 0], [], []>} : vector<9x8xf32>, vector<9x8xf32>, vector<9x9xf32> -> vector<9x9xf32>
    "tpu.trace_stop"() : () -> ()
    %c2 = arith.constant 2 : index
    %c0_28 = arith.constant 0 : index
    %c0_29 = arith.constant 0 : index
    %50 = vector.load %arg23[%c2, %c0_28, %c0_29] : memref<4x9x9xf32, #tpu.memory_space<vmem>>, vector<1x9x9xf32>
    %51 = vector.shape_cast %50 : vector<1x9x9xf32> to vector<9x9xf32>
    %52 = vector.shape_cast %49 : vector<9x9xf32> to vector<1x9x9xf32>
    tpu.vector_store %arg23[%c2, %c0_28, %c0_29], %52 {strides = array<i32>} : memref<4x9x9xf32, #tpu.memory_space<vmem>>, vector<1x9x9xf32>,
    %53 = vector.extract_strided_slice %29 {offsets = [0, 24], sizes = [9, 8], strides = [1, 1]} : vector<9x32xf32> to vector<9x8xf32>
    %54 = vector.extract_strided_slice %34 {offsets = [0, 24], sizes = [9, 8], strides = [1, 1]} : vector<9x32xf32> to vector<9x8xf32>
    "tpu.trace_start"() <{level = 10 : i32, message = "id,jd->ij"}> : () -> ()
    %cst_30 = arith.constant dense<0.000000e+00> : vector<9x9xf32>
    %55 = tpu.matmul %53, %54, %cst_30 {dimension_numbers = #tpu.dot_dimension_numbers<[1], [1], [0], [0], [0, 0, 1, 0], [], []>} : vector<9x8xf32>, vector<9x8xf32>, vector<9x9xf32> -> vector<9x9xf32>
    "tpu.trace_stop"() : () -> ()
    %c3 = arith.constant 3 : index
    %c0_31 = arith.constant 0 : index
    %c0_32 = arith.constant 0 : index
    %56 = vector.load %arg23[%c3, %c0_31, %c0_32] : memref<4x9x9xf32, #tpu.memory_space<vmem>>, vector<1x9x9xf32>
    %57 = vector.shape_cast %56 : vector<1x9x9xf32> to vector<9x9xf32>
    %58 = vector.shape_cast %55 : vector<9x9xf32> to vector<1x9x9xf32>
    tpu.vector_store %arg23[%c3, %c0_31, %c0_32], %58 {strides = array<i32>} : memref<4x9x9xf32, #tpu.memory_space<vmem>>, vector<1x9x9xf32>,
    %59 = tpu.iota {dimensions = array<i32: 0>} : vector<8x8xi32>
    %60 = tpu.iota {dimensions = array<i32: 1>} : vector<8x8xi32>
    %c0_33 = arith.constant 0 : index
    %c1_34 = arith.constant 1 : index
    %c1_35 = arith.constant 1 : index
    %61 = vector.load %arg23[%c0_33, %c1_34, %c1_35] : memref<4x9x9xf32, #tpu.memory_space<vmem>>, vector<1x8x8xf32>
    %62 = vector.shape_cast %61 : vector<1x8x8xf32> to vector<8x8xf32>
    %c0_36 = arith.constant 0 : index
    %c0_37 = arith.constant 0 : index
    %c0_38 = arith.constant 0 : index
    %63 = vector.load %arg23[%c0_36, %c0_37, %c0_38] : memref<4x9x9xf32, #tpu.memory_space<vmem>>, vector<1x1x1xf32>
    %64 = vector.shape_cast %63 : vector<1x1x1xf32> to vector<1x1xf32>
    %c0_39 = arith.constant 0 : index
    %c1_40 = arith.constant 1 : index
    %c1_41 = arith.constant 1 : index
    %65 = vector.load %arg23[%c0_39, %c1_40, %c1_41] : memref<4x9x9xf32, #tpu.memory_space<vmem>>, vector<1x1x1xf32>
    %66 = vector.shape_cast %65 : vector<1x1x1xf32> to vector<1x1xf32>
    %c0_i32 = arith.constant 0 : i32
    %67 = vector.broadcast %c0_i32 : i32 to vector<8x8xi32>
    %68 = arith.cmpi eq, %60, %67 : vector<8x8xi32>
    %69 = vector.shape_cast %66 : vector<1x1xf32> to vector<1x1xf32>
    %70 = vector.broadcast %69 : vector<1x1xf32> to vector<8x8xf32>
    %71 = arith.select %68, %70, %62 : vector<8x8xi1>, vector<8x8xf32>
    %c0_i32_42 = arith.constant 0 : i32
    %72 = vector.broadcast %c0_i32_42 : i32 to vector<8x8xi32>
    %73 = arith.cmpi eq, %59, %72 : vector<8x8xi32>
    %74 = vector.shape_cast %64 : vector<1x1xf32> to vector<1x1xf32>
    %75 = vector.broadcast %74 : vector<1x1xf32> to vector<8x8xf32>
    %76 = arith.select %73, %75, %71 : vector<8x8xi1>, vector<8x8xf32>
    %c0_43 = arith.constant 0 : index
    %c0_44 = arith.constant 0 : index
    %c0_45 = arith.constant 0 : index
    %77 = vector.load %arg22[%c0_43, %c0_44, %c0_45] : memref<4x8x8xf32, #tpu.memory_space<vmem>>, vector<1x8x8xf32>
    %78 = vector.shape_cast %77 : vector<1x8x8xf32> to vector<8x8xf32>
    %79 = vector.shape_cast %76 : vector<8x8xf32> to vector<1x8x8xf32>
    tpu.vector_store %arg22[%c0_43, %c0_44, %c0_45], %79 {strides = array<i32>} : memref<4x8x8xf32, #tpu.memory_space<vmem>>, vector<1x8x8xf32>,
    %80 = vector.shape_cast %76 : vector<8x8xf32> to vector<1x8x8xf32>
    %c0_46 = arith.constant 0 : index
    %c0_47 = arith.constant 0 : index
    %c0_48 = arith.constant 0 : index
    %81 = vector.load %arg1[%c0_46, %c0_47, %c0_48] : memref<2x1x8xf32, #tpu.memory_space<vmem>>, vector<2x1x8xf32>
    %82 = vector.broadcast %80 : vector<1x8x8xf32> to vector<2x8x8xf32>
    %83 = vector.broadcast %81 : vector<2x1x8xf32> to vector<2x8x8xf32>
    %84 = arith.addf %82, %83 : vector<2x8x8xf32>
    %c1_49 = arith.constant 1 : index
    %c1_50 = arith.constant 1 : index
    %c1_51 = arith.constant 1 : index
    %85 = vector.load %arg23[%c1_49, %c1_50, %c1_51] : memref<4x9x9xf32, #tpu.memory_space<vmem>>, vector<1x8x8xf32>
    %86 = vector.shape_cast %85 : vector<1x8x8xf32> to vector<8x8xf32>
    %c1_52 = arith.constant 1 : index
    %c0_53 = arith.constant 0 : index
    %c0_54 = arith.constant 0 : index
    %87 = vector.load %arg23[%c1_52, %c0_53, %c0_54] : memref<4x9x9xf32, #tpu.memory_space<vmem>>, vector<1x1x1xf32>
    %88 = vector.shape_cast %87 : vector<1x1x1xf32> to vector<1x1xf32>
    %c1_55 = arith.constant 1 : index
    %c1_56 = arith.constant 1 : index
    %c1_57 = arith.constant 1 : index
    %89 = vector.load %arg23[%c1_55, %c1_56, %c1_57] : memref<4x9x9xf32, #tpu.memory_space<vmem>>, vector<1x1x1xf32>
    %90 = vector.shape_cast %89 : vector<1x1x1xf32> to vector<1x1xf32>
    %c0_i32_58 = arith.constant 0 : i32
    %91 = vector.broadcast %c0_i32_58 : i32 to vector<8x8xi32>
    %92 = arith.cmpi eq, %60, %91 : vector<8x8xi32>
    %93 = vector.shape_cast %90 : vector<1x1xf32> to vector<1x1xf32>
    %94 = vector.broadcast %93 : vector<1x1xf32> to vector<8x8xf32>
    %95 = arith.select %92, %94, %86 : vector<8x8xi1>, vector<8x8xf32>
    %c0_i32_59 = arith.constant 0 : i32
    %96 = vector.broadcast %c0_i32_59 : i32 to vector<8x8xi32>
    %97 = arith.cmpi eq, %59, %96 : vector<8x8xi32>
    %98 = vector.shape_cast %88 : vector<1x1xf32> to vector<1x1xf32>
    %99 = vector.broadcast %98 : vector<1x1xf32> to vector<8x8xf32>
    %100 = arith.select %97, %99, %95 : vector<8x8xi1>, vector<8x8xf32>
    %c1_60 = arith.constant 1 : index
    %c0_61 = arith.constant 0 : index
    %c0_62 = arith.constant 0 : index
    %101 = vector.load %arg22[%c1_60, %c0_61, %c0_62] : memref<4x8x8xf32, #tpu.memory_space<vmem>>, vector<1x8x8xf32>
    %102 = vector.shape_cast %101 : vector<1x8x8xf32> to vector<8x8xf32>
    %103 = vector.shape_cast %100 : vector<8x8xf32> to vector<1x8x8xf32>
    tpu.vector_store %arg22[%c1_60, %c0_61, %c0_62], %103 {strides = array<i32>} : memref<4x8x8xf32, #tpu.memory_space<vmem>>, vector<1x8x8xf32>,
    %104 = vector.shape_cast %100 : vector<8x8xf32> to vector<1x8x8xf32>
    %c0_63 = arith.constant 0 : index
    %c0_64 = arith.constant 0 : index
    %c0_65 = arith.constant 0 : index
    %105 = vector.load %arg1[%c0_63, %c0_64, %c0_65] : memref<2x1x8xf32, #tpu.memory_space<vmem>>, vector<2x1x8xf32>
    %106 = vector.broadcast %104 : vector<1x8x8xf32> to vector<2x8x8xf32>
    %107 = vector.broadcast %105 : vector<2x1x8xf32> to vector<2x8x8xf32>
    %108 = arith.addf %106, %107 : vector<2x8x8xf32>
    %c2_66 = arith.constant 2 : index
    %c1_67 = arith.constant 1 : index
    %c1_68 = arith.constant 1 : index
    %109 = vector.load %arg23[%c2_66, %c1_67, %c1_68] : memref<4x9x9xf32, #tpu.memory_space<vmem>>, vector<1x8x8xf32>
    %110 = vector.shape_cast %109 : vector<1x8x8xf32> to vector<8x8xf32>
    %c2_69 = arith.constant 2 : index
    %c0_70 = arith.constant 0 : index
    %c0_71 = arith.constant 0 : index
    %111 = vector.load %arg23[%c2_69, %c0_70, %c0_71] : memref<4x9x9xf32, #tpu.memory_space<vmem>>, vector<1x1x1xf32>
    %112 = vector.shape_cast %111 : vector<1x1x1xf32> to vector<1x1xf32>
    %c2_72 = arith.constant 2 : index
    %c1_73 = arith.constant 1 : index
    %c1_74 = arith.constant 1 : index
    %113 = vector.load %arg23[%c2_72, %c1_73, %c1_74] : memref<4x9x9xf32, #tpu.memory_space<vmem>>, vector<1x1x1xf32>
    %114 = vector.shape_cast %113 : vector<1x1x1xf32> to vector<1x1xf32>
    %c0_i32_75 = arith.constant 0 : i32
    %115 = vector.broadcast %c0_i32_75 : i32 to vector<8x8xi32>
    %116 = arith.cmpi eq, %60, %115 : vector<8x8xi32>
    %117 = vector.shape_cast %114 : vector<1x1xf32> to vector<1x1xf32>
    %118 = vector.broadcast %117 : vector<1x1xf32> to vector<8x8xf32>
    %119 = arith.select %116, %118, %110 : vector<8x8xi1>, vector<8x8xf32>
    %c0_i32_76 = arith.constant 0 : i32
    %120 = vector.broadcast %c0_i32_76 : i32 to vector<8x8xi32>
    %121 = arith.cmpi eq, %59, %120 : vector<8x8xi32>
    %122 = vector.shape_cast %112 : vector<1x1xf32> to vector<1x1xf32>
    %123 = vector.broadcast %122 : vector<1x1xf32> to vector<8x8xf32>
    %124 = arith.select %121, %123, %119 : vector<8x8xi1>, vector<8x8xf32>
    %c2_77 = arith.constant 2 : index
    %c0_78 = arith.constant 0 : index
    %c0_79 = arith.constant 0 : index
    %125 = vector.load %arg22[%c2_77, %c0_78, %c0_79] : memref<4x8x8xf32, #tpu.memory_space<vmem>>, vector<1x8x8xf32>
    %126 = vector.shape_cast %125 : vector<1x8x8xf32> to vector<8x8xf32>
    %127 = vector.shape_cast %124 : vector<8x8xf32> to vector<1x8x8xf32>
    tpu.vector_store %arg22[%c2_77, %c0_78, %c0_79], %127 {strides = array<i32>} : memref<4x8x8xf32, #tpu.memory_space<vmem>>, vector<1x8x8xf32>,
    %128 = vector.shape_cast %124 : vector<8x8xf32> to vector<1x8x8xf32>
    %c0_80 = arith.constant 0 : index
    %c0_81 = arith.constant 0 : index
    %c0_82 = arith.constant 0 : index
    %129 = vector.load %arg1[%c0_80, %c0_81, %c0_82] : memref<2x1x8xf32, #tpu.memory_space<vmem>>, vector<2x1x8xf32>
    %130 = vector.broadcast %128 : vector<1x8x8xf32> to vector<2x8x8xf32>
    %131 = vector.broadcast %129 : vector<2x1x8xf32> to vector<2x8x8xf32>
    %132 = arith.addf %130, %131 : vector<2x8x8xf32>
    %c3_83 = arith.constant 3 : index
    %c1_84 = arith.constant 1 : index
    %c1_85 = arith.constant 1 : index
    %133 = vector.load %arg23[%c3_83, %c1_84, %c1_85] : memref<4x9x9xf32, #tpu.memory_space<vmem>>, vector<1x8x8xf32>
    %134 = vector.shape_cast %133 : vector<1x8x8xf32> to vector<8x8xf32>
    %c3_86 = arith.constant 3 : index
    %c0_87 = arith.constant 0 : index
    %c0_88 = arith.constant 0 : index
    %135 = vector.load %arg23[%c3_86, %c0_87, %c0_88] : memref<4x9x9xf32, #tpu.memory_space<vmem>>, vector<1x1x1xf32>
    %136 = vector.shape_cast %135 : vector<1x1x1xf32> to vector<1x1xf32>
    %c3_89 = arith.constant 3 : index
    %c1_90 = arith.constant 1 : index
    %c1_91 = arith.constant 1 : index
    %137 = vector.load %arg23[%c3_89, %c1_90, %c1_91] : memref<4x9x9xf32, #tpu.memory_space<vmem>>, vector<1x1x1xf32>
    %138 = vector.shape_cast %137 : vector<1x1x1xf32> to vector<1x1xf32>
    %c0_i32_92 = arith.constant 0 : i32
    %139 = vector.broadcast %c0_i32_92 : i32 to vector<8x8xi32>
    %140 = arith.cmpi eq, %60, %139 : vector<8x8xi32>
    %141 = vector.shape_cast %138 : vector<1x1xf32> to vector<1x1xf32>
    %142 = vector.broadcast %141 : vector<1x1xf32> to vector<8x8xf32>
    %143 = arith.select %140, %142, %134 : vector<8x8xi1>, vector<8x8xf32>
    %c0_i32_93 = arith.constant 0 : i32
    %144 = vector.broadcast %c0_i32_93 : i32 to vector<8x8xi32>
    %145 = arith.cmpi eq, %59, %144 : vector<8x8xi32>
    %146 = vector.shape_cast %136 : vector<1x1xf32> to vector<1x1xf32>
    %147 = vector.broadcast %146 : vector<1x1xf32> to vector<8x8xf32>
    %148 = arith.select %145, %147, %143 : vector<8x8xi1>, vector<8x8xf32>
    %c3_94 = arith.constant 3 : index
    %c0_95 = arith.constant 0 : index
    %c0_96 = arith.constant 0 : index
    %149 = vector.load %arg22[%c3_94, %c0_95, %c0_96] : memref<4x8x8xf32, #tpu.memory_space<vmem>>, vector<1x8x8xf32>
    %150 = vector.shape_cast %149 : vector<1x8x8xf32> to vector<8x8xf32>
    %151 = vector.shape_cast %148 : vector<8x8xf32> to vector<1x8x8xf32>
    tpu.vector_store %arg22[%c3_94, %c0_95, %c0_96], %151 {strides = array<i32>} : memref<4x8x8xf32, #tpu.memory_space<vmem>>, vector<1x8x8xf32>,
    %152 = vector.shape_cast %148 : vector<8x8xf32> to vector<1x8x8xf32>
    %c0_97 = arith.constant 0 : index
    %c0_98 = arith.constant 0 : index
    %c0_99 = arith.constant 0 : index
    %153 = vector.load %arg1[%c0_97, %c0_98, %c0_99] : memref<2x1x8xf32, #tpu.memory_space<vmem>>, vector<2x1x8xf32>
    %154 = vector.broadcast %152 : vector<1x8x8xf32> to vector<2x8x8xf32>
    %155 = vector.broadcast %153 : vector<2x1x8xf32> to vector<2x8x8xf32>
    %156 = arith.addf %154, %155 : vector<2x8x8xf32>
    %c0_100 = arith.constant 0 : index
    %c0_101 = arith.constant 0 : index
    %157 = vector.load %arg0[%c0_100, %c0_101] : memref<16x32xf32, #tpu.memory_space<vmem>>, vector<16x32xf32>
    %c0_102 = arith.constant 0 : index
    %c0_103 = arith.constant 0 : index
    %c0_104 = arith.constant 0 : index
    %158 = vector.load %arg9[%c0_102, %c0_103, %c0_104] : memref<2x32x96xf32, #tpu.memory_space<vmem>>, vector<1x32x96xf32>
    %159 = vector.shape_cast %158 : vector<1x32x96xf32> to vector<32x96xf32>
    %cst_105 = arith.constant dense<0.000000e+00> : vector<16x96xf32>
    %160 = tpu.matmul %157, %159, %cst_105 {dimension_numbers = #tpu.dot_dimension_numbers<[1], [0], [0], [1], [0, 0, 1, 1], [], []>} : vector<16x32xf32>, vector<32x96xf32>, vector<16x96xf32> -> vector<16x96xf32>
    %c0_106 = arith.constant 0 : index
    %c0_107 = arith.constant 0 : index
    %c0_108 = arith.constant 0 : index
    %161 = vector.load %arg10[%c0_106, %c0_107, %c0_108] : memref<2x1x96xf32, #tpu.memory_space<vmem>>, vector<1x1x96xf32>
    %162 = vector.shape_cast %161 : vector<1x1x96xf32> to vector<1x96xf32>
    %163 = vector.broadcast %162 : vector<1x96xf32> to vector<16x96xf32>
    %164 = arith.addf %160, %163 : vector<16x96xf32>
    %165 = vector.extract_strided_slice %164 {offsets = [0, 0], sizes = [16, 32], strides = [1, 1]} : vector<16x96xf32> to vector<16x32xf32>
    %cst_109 = arith.constant 2.500000e-01 : f32
    %166 = vector.broadcast %cst_109 : f32 to vector<16x32xf32>
    %167 = arith.mulf %165, %166 : vector<16x32xf32>
    %168 = vector.extract_strided_slice %164 {offsets = [0, 32], sizes = [16, 32], strides = [1, 1]} : vector<16x96xf32> to vector<16x32xf32>
    %169 = vector.extract_strided_slice %164 {offsets = [0, 64], sizes = [16, 32], strides = [1, 1]} : vector<16x96xf32> to vector<16x32xf32>
    %170 = vector.extract_strided_slice %167 {offsets = [0, 0], sizes = [16, 8], strides = [1, 1]} : vector<16x32xf32> to vector<16x8xf32>
    %171 = vector.shape_cast %170 : vector<16x8xf32> to vector<2x8x8xf32>
    %172 = vector.extract_strided_slice %168 {offsets = [0, 0], sizes = [16, 8], strides = [1, 1]} : vector<16x32xf32> to vector<16x8xf32>
    %173 = vector.shape_cast %172 : vector<16x8xf32> to vector<2x8x8xf32>
    %174 = vector.extract_strided_slice %169 {offsets = [0, 0], sizes = [16, 8], strides = [1, 1]} : vector<16x32xf32> to vector<16x8xf32>
    %175 = vector.shape_cast %174 : vector<16x8xf32> to vector<2x8x8xf32>
    "tpu.trace_start"() <{level = 10 : i32, message = "bqd,bkd->bqk"}> : () -> ()
    %cst_110 = arith.constant dense<0.000000e+00> : vector<2x8x8xf32>
    %176 = tpu.matmul %171, %173, %cst_110 {dimension_numbers = #tpu.dot_dimension_numbers<[2], [2], [1], [1], [0, 0, 0, 1, 1, 1], [0], [0]>} : vector<2x8x8xf32>, vector<2x8x8xf32>, vector<2x8x8xf32> -> vector<2x8x8xf32>
    "tpu.trace_stop"() : () -> ()
    %177 = arith.addf %176, %84 : vector<2x8x8xf32>
    %cst_111 = arith.constant dense<0xFF800000> : vector<2x8xf32>
    %178 = vector.multi_reduction <maximumf>, %177, %cst_111 [2] : vector<2x8x8xf32> to vector<2x8xf32>
    %179 = vector.shape_cast %178 : vector<2x8xf32> to vector<2x8x1xf32>
    %180 = vector.broadcast %179 : vector<2x8x1xf32> to vector<2x8x8xf32>
    %181 = arith.subf %177, %180 : vector<2x8x8xf32>
    %182 = math.exp %181 : vector<2x8x8xf32>
    %cst_112 = arith.constant dense<0.000000e+00> : vector<2x8xf32>
    %183 = vector.multi_reduction <add>, %182, %cst_112 [2] : vector<2x8x8xf32> to vector<2x8xf32>
    %184 = vector.shape_cast %183 : vector<2x8xf32> to vector<2x8x1xf32>
    %185 = tpu.reciprocal %184 {approx = true} : vector<2x8x1xf32> -> vector<2x8x1xf32>
    %186 = vector.broadcast %185 : vector<2x8x1xf32> to vector<2x8x8xf32>
    %187 = arith.mulf %182, %186 : vector<2x8x8xf32>
    "tpu.trace_start"() <{level = 10 : i32, message = "bqk,bkd->bqd"}> : () -> ()
    %cst_113 = arith.constant dense<0.000000e+00> : vector<2x8x8xf32>
    %188 = tpu.matmul %187, %175, %cst_113 {dimension_numbers = #tpu.dot_dimension_numbers<[2], [1], [1], [2], [0, 0, 0, 1, 1, 2], [0], [0]>} : vector<2x8x8xf32>, vector<2x8x8xf32>, vector<2x8x8xf32> -> vector<2x8x8xf32>
    "tpu.trace_stop"() : () -> ()
    %189 = vector.shape_cast %188 : vector<2x8x8xf32> to vector<16x8xf32>
    %190 = vector.extract_strided_slice %167 {offsets = [0, 8], sizes = [16, 8], strides = [1, 1]} : vector<16x32xf32> to vector<16x8xf32>
    %191 = vector.shape_cast %190 : vector<16x8xf32> to vector<2x8x8xf32>
    %192 = vector.extract_strided_slice %168 {offsets = [0, 8], sizes = [16, 8], strides = [1, 1]} : vector<16x32xf32> to vector<16x8xf32>
    %193 = vector.shape_cast %192 : vector<16x8xf32> to vector<2x8x8xf32>
    %194 = vector.extract_strided_slice %169 {offsets = [0, 8], sizes = [16, 8], strides = [1, 1]} : vector<16x32xf32> to vector<16x8xf32>
    %195 = vector.shape_cast %194 : vector<16x8xf32> to vector<2x8x8xf32>
    "tpu.trace_start"() <{level = 10 : i32, message = "bqd,bkd->bqk"}> : () -> ()
    %cst_114 = arith.constant dense<0.000000e+00> : vector<2x8x8xf32>
    %196 = tpu.matmul %191, %193, %cst_114 {dimension_numbers = #tpu.dot_dimension_numbers<[2], [2], [1], [1], [0, 0, 0, 1, 1, 1], [0], [0]>} : vector<2x8x8xf32>, vector<2x8x8xf32>, vector<2x8x8xf32> -> vector<2x8x8xf32>
    "tpu.trace_stop"() : () -> ()
    %197 = arith.addf %196, %108 : vector<2x8x8xf32>
    %cst_115 = arith.constant dense<0xFF800000> : vector<2x8xf32>
    %198 = vector.multi_reduction <maximumf>, %197, %cst_115 [2] : vector<2x8x8xf32> to vector<2x8xf32>
    %199 = vector.shape_cast %198 : vector<2x8xf32> to vector<2x8x1xf32>
    %200 = vector.broadcast %199 : vector<2x8x1xf32> to vector<2x8x8xf32>
    %201 = arith.subf %197, %200 : vector<2x8x8xf32>
    %202 = math.exp %201 : vector<2x8x8xf32>
    %cst_116 = arith.constant dense<0.000000e+00> : vector<2x8xf32>
    %203 = vector.multi_reduction <add>, %202, %cst_116 [2] : vector<2x8x8xf32> to vector<2x8xf32>
    %204 = vector.shape_cast %203 : vector<2x8xf32> to vector<2x8x1xf32>
    %205 = tpu.reciprocal %204 {approx = true} : vector<2x8x1xf32> -> vector<2x8x1xf32>
    %206 = vector.broadcast %205 : vector<2x8x1xf32> to vector<2x8x8xf32>
    %207 = arith.mulf %202, %206 : vector<2x8x8xf32>
    "tpu.trace_start"() <{level = 10 : i32, message = "bqk,bkd->bqd"}> : () -> ()
    %cst_117 = arith.constant dense<0.000000e+00> : vector<2x8x8xf32>
    %208 = tpu.matmul %207, %195, %cst_117 {dimension_numbers = #tpu.dot_dimension_numbers<[2], [1], [1], [2], [0, 0, 0, 1, 1, 2], [0], [0]>} : vector<2x8x8xf32>, vector<2x8x8xf32>, vector<2x8x8xf32> -> vector<2x8x8xf32>
    "tpu.trace_stop"() : () -> ()
    %209 = vector.shape_cast %208 : vector<2x8x8xf32> to vector<16x8xf32>
    %210 = vector.extract_strided_slice %167 {offsets = [0, 16], sizes = [16, 8], strides = [1, 1]} : vector<16x32xf32> to vector<16x8xf32>
    %211 = vector.shape_cast %210 : vector<16x8xf32> to vector<2x8x8xf32>
    %212 = vector.extract_strided_slice %168 {offsets = [0, 16], sizes = [16, 8], strides = [1, 1]} : vector<16x32xf32> to vector<16x8xf32>
    %213 = vector.shape_cast %212 : vector<16x8xf32> to vector<2x8x8xf32>
    %214 = vector.extract_strided_slice %169 {offsets = [0, 16], sizes = [16, 8], strides = [1, 1]} : vector<16x32xf32> to vector<16x8xf32>
    %215 = vector.shape_cast %214 : vector<16x8xf32> to vector<2x8x8xf32>
    "tpu.trace_start"() <{level = 10 : i32, message = "bqd,bkd->bqk"}> : () -> ()
    %cst_118 = arith.constant dense<0.000000e+00> : vector<2x8x8xf32>
    %216 = tpu.matmul %211, %213, %cst_118 {dimension_numbers = #tpu.dot_dimension_numbers<[2], [2], [1], [1], [0, 0, 0, 1, 1, 1], [0], [0]>} : vector<2x8x8xf32>, vector<2x8x8xf32>, vector<2x8x8xf32> -> vector<2x8x8xf32>
    "tpu.trace_stop"() : () -> ()
    %217 = arith.addf %216, %132 : vector<2x8x8xf32>
    %cst_119 = arith.constant dense<0xFF800000> : vector<2x8xf32>
    %218 = vector.multi_reduction <maximumf>, %217, %cst_119 [2] : vector<2x8x8xf32> to vector<2x8xf32>
    %219 = vector.shape_cast %218 : vector<2x8xf32> to vector<2x8x1xf32>
    %220 = vector.broadcast %219 : vector<2x8x1xf32> to vector<2x8x8xf32>
    %221 = arith.subf %217, %220 : vector<2x8x8xf32>
    %222 = math.exp %221 : vector<2x8x8xf32>
    %cst_120 = arith.constant dense<0.000000e+00> : vector<2x8xf32>
    %223 = vector.multi_reduction <add>, %222, %cst_120 [2] : vector<2x8x8xf32> to vector<2x8xf32>
    %224 = vector.shape_cast %223 : vector<2x8xf32> to vector<2x8x1xf32>
    %225 = tpu.reciprocal %224 {approx = true} : vector<2x8x1xf32> -> vector<2x8x1xf32>
    %226 = vector.broadcast %225 : vector<2x8x1xf32> to vector<2x8x8xf32>
    %227 = arith.mulf %222, %226 : vector<2x8x8xf32>
    "tpu.trace_start"() <{level = 10 : i32, message = "bqk,bkd->bqd"}> : () -> ()
    %cst_121 = arith.constant dense<0.000000e+00> : vector<2x8x8xf32>
    %228 = tpu.matmul %227, %215, %cst_121 {dimension_numbers = #tpu.dot_dimension_numbers<[2], [1], [1], [2], [0, 0, 0, 1, 1, 2], [0], [0]>} : vector<2x8x8xf32>, vector<2x8x8xf32>, vector<2x8x8xf32> -> vector<2x8x8xf32>
    "tpu.trace_stop"() : () -> ()
    %229 = vector.shape_cast %228 : vector<2x8x8xf32> to vector<16x8xf32>
    %230 = vector.extract_strided_slice %167 {offsets = [0, 24], sizes = [16, 8], strides = [1, 1]} : vector<16x32xf32> to vector<16x8xf32>
    %231 = vector.shape_cast %230 : vector<16x8xf32> to vector<2x8x8xf32>
    %232 = vector.extract_strided_slice %168 {offsets = [0, 24], sizes = [16, 8], strides = [1, 1]} : vector<16x32xf32> to vector<16x8xf32>
    %233 = vector.shape_cast %232 : vector<16x8xf32> to vector<2x8x8xf32>
    %234 = vector.extract_strided_slice %169 {offsets = [0, 24], sizes = [16, 8], strides = [1, 1]} : vector<16x32xf32> to vector<16x8xf32>
    %235 = vector.shape_cast %234 : vector<16x8xf32> to vector<2x8x8xf32>
    "tpu.trace_start"() <{level = 10 : i32, message = "bqd,bkd->bqk"}> : () -> ()
    %cst_122 = arith.constant dense<0.000000e+00> : vector<2x8x8xf32>
    %236 = tpu.matmul %231, %233, %cst_122 {dimension_numbers = #tpu.dot_dimension_numbers<[2], [2], [1], [1], [0, 0, 0, 1, 1, 1], [0], [0]>} : vector<2x8x8xf32>, vector<2x8x8xf32>, vector<2x8x8xf32> -> vector<2x8x8xf32>
    "tpu.trace_stop"() : () -> ()
    %237 = arith.addf %236, %156 : vector<2x8x8xf32>
    %cst_123 = arith.constant dense<0xFF800000> : vector<2x8xf32>
    %238 = vector.multi_reduction <maximumf>, %237, %cst_123 [2] : vector<2x8x8xf32> to vector<2x8xf32>
    %239 = vector.shape_cast %238 : vector<2x8xf32> to vector<2x8x1xf32>
    %240 = vector.broadcast %239 : vector<2x8x1xf32> to vector<2x8x8xf32>
    %241 = arith.subf %237, %240 : vector<2x8x8xf32>
    %242 = math.exp %241 : vector<2x8x8xf32>
    %cst_124 = arith.constant dense<0.000000e+00> : vector<2x8xf32>
    %243 = vector.multi_reduction <add>, %242, %cst_124 [2] : vector<2x8x8xf32> to vector<2x8xf32>
    %244 = vector.shape_cast %243 : vector<2x8xf32> to vector<2x8x1xf32>
    %245 = tpu.reciprocal %244 {approx = true} : vector<2x8x1xf32> -> vector<2x8x1xf32>
    %246 = vector.broadcast %245 : vector<2x8x1xf32> to vector<2x8x8xf32>
    %247 = arith.mulf %242, %246 : vector<2x8x8xf32>
    "tpu.trace_start"() <{level = 10 : i32, message = "bqk,bkd->bqd"}> : () -> ()
    %cst_125 = arith.constant dense<0.000000e+00> : vector<2x8x8xf32>
    %248 = tpu.matmul %247, %235, %cst_125 {dimension_numbers = #tpu.dot_dimension_numbers<[2], [1], [1], [2], [0, 0, 0, 1, 1, 2], [0], [0]>} : vector<2x8x8xf32>, vector<2x8x8xf32>, vector<2x8x8xf32> -> vector<2x8x8xf32>
    "tpu.trace_stop"() : () -> ()
    %249 = vector.shape_cast %248 : vector<2x8x8xf32> to vector<16x8xf32>
    %250 = tpu.concatenate %189, %209, %229, %249 in 1 : vector<16x8xf32>, vector<16x8xf32>, vector<16x8xf32>, vector<16x8xf32> -> vector<16x32xf32>
    %c0_126 = arith.constant 0 : index
    %c0_127 = arith.constant 0 : index
    %c0_128 = arith.constant 0 : index
    %251 = vector.load %arg11[%c0_126, %c0_127, %c0_128] : memref<2x32x32xf32, #tpu.memory_space<vmem>>, vector<1x32x32xf32>
    %252 = vector.shape_cast %251 : vector<1x32x32xf32> to vector<32x32xf32>
    %cst_129 = arith.constant dense<0.000000e+00> : vector<16x32xf32>
    %253 = tpu.matmul %250, %252, %cst_129 {dimension_numbers = #tpu.dot_dimension_numbers<[1], [0], [0], [1], [0, 0, 1, 1], [], []>} : vector<16x32xf32>, vector<32x32xf32>, vector<16x32xf32> -> vector<16x32xf32>
    %c0_130 = arith.constant 0 : index
    %c0_131 = arith.constant 0 : index
    %c0_132 = arith.constant 0 : index
    %254 = vector.load %arg12[%c0_130, %c0_131, %c0_132] : memref<2x1x32xf32, #tpu.memory_space<vmem>>, vector<1x1x32xf32>
    %255 = vector.shape_cast %254 : vector<1x1x32xf32> to vector<1x32xf32>
    %256 = vector.broadcast %255 : vector<1x32xf32> to vector<16x32xf32>
    %257 = arith.addf %253, %256 : vector<16x32xf32>
    %258 = arith.addf %157, %257 : vector<16x32xf32>
    %c0_133 = arith.constant 0 : index
    %c0_134 = arith.constant 0 : index
    %c0_135 = arith.constant 0 : index
    %259 = vector.load %arg13[%c0_133, %c0_134, %c0_135] : memref<2x1x32xf32, #tpu.memory_space<vmem>>, vector<1x1x32xf32>
    %260 = vector.shape_cast %259 : vector<1x1x32xf32> to vector<1x32xf32>
    %c0_136 = arith.constant 0 : index
    %c0_137 = arith.constant 0 : index
    %c0_138 = arith.constant 0 : index
    %261 = vector.load %arg14[%c0_136, %c0_137, %c0_138] : memref<2x1x32xf32, #tpu.memory_space<vmem>>, vector<1x1x32xf32>
    %262 = vector.shape_cast %261 : vector<1x1x32xf32> to vector<1x32xf32>
    %cst_139 = arith.constant dense<0.000000e+00> : vector<16xf32>
    %263 = vector.multi_reduction <add>, %258, %cst_139 [1] : vector<16x32xf32> to vector<16xf32>
    %264 = vector.shape_cast %263 : vector<16xf32> to vector<16x1xf32>
    %cst_140 = arith.constant 3.200000e+01 : f32
    %265 = vector.broadcast %cst_140 : f32 to vector<16x1xf32>
    %266 = arith.divf %264, %265 : vector<16x1xf32>
    %267 = vector.broadcast %266 : vector<16x1xf32> to vector<16x32xf32>
    %268 = arith.subf %258, %267 : vector<16x32xf32>
    %269 = arith.mulf %268, %268 : vector<16x32xf32>
    %cst_141 = arith.constant dense<0.000000e+00> : vector<16xf32>
    %270 = vector.multi_reduction <add>, %269, %cst_141 [1] : vector<16x32xf32> to vector<16xf32>
    %271 = vector.shape_cast %270 : vector<16xf32> to vector<16x1xf32>
    %cst_142 = arith.constant 3.200000e+01 : f32
    %272 = vector.broadcast %cst_142 : f32 to vector<16x1xf32>
    %273 = arith.divf %271, %272 : vector<16x1xf32>
    %cst_143 = arith.constant 9.99999974E-6 : f32
    %274 = vector.broadcast %cst_143 : f32 to vector<16x1xf32>
    %275 = arith.addf %273, %274 : vector<16x1xf32>
    %276 = math.rsqrt %275 : vector<16x1xf32>
    %277 = vector.broadcast %276 : vector<16x1xf32> to vector<16x32xf32>
    %278 = arith.mulf %268, %277 : vector<16x32xf32>
    %279 = vector.broadcast %260 : vector<1x32xf32> to vector<16x32xf32>
    %280 = arith.mulf %278, %279 : vector<16x32xf32>
    %281 = vector.broadcast %262 : vector<1x32xf32> to vector<16x32xf32>
    %282 = arith.addf %280, %281 : vector<16x32xf32>
    %c0_144 = arith.constant 0 : index
    %c0_145 = arith.constant 0 : index
    %c0_146 = arith.constant 0 : index
    %283 = vector.load %arg15[%c0_144, %c0_145, %c0_146] : memref<2x32x64xf32, #tpu.memory_space<vmem>>, vector<1x32x64xf32>
    %284 = vector.shape_cast %283 : vector<1x32x64xf32> to vector<32x64xf32>
    %cst_147 = arith.constant dense<0.000000e+00> : vector<16x64xf32>
    %285 = tpu.matmul %282, %284, %cst_147 {dimension_numbers = #tpu.dot_dimension_numbers<[1], [0], [0], [1], [0, 0, 1, 1], [], []>} : vector<16x32xf32>, vector<32x64xf32>, vector<16x64xf32> -> vector<16x64xf32>
    %c0_148 = arith.constant 0 : index
    %c0_149 = arith.constant 0 : index
    %c0_150 = arith.constant 0 : index
    %286 = vector.load %arg16[%c0_148, %c0_149, %c0_150] : memref<2x1x64xf32, #tpu.memory_space<vmem>>, vector<1x1x64xf32>
    %287 = vector.shape_cast %286 : vector<1x1x64xf32> to vector<1x64xf32>
    %288 = vector.broadcast %287 : vector<1x64xf32> to vector<16x64xf32>
    %289 = arith.addf %285, %288 : vector<16x64xf32>
    %cst_151 = arith.constant 0.000000e+00 : f32
    %290 = vector.broadcast %cst_151 : f32 to vector<16x64xf32>
    %291 = arith.maximumf %289, %290 : vector<16x64xf32>
    %c0_152 = arith.constant 0 : index
    %c0_153 = arith.constant 0 : index
    %c0_154 = arith.constant 0 : index
    %292 = vector.load %arg17[%c0_152, %c0_153, %c0_154] : memref<2x64x32xf32, #tpu.memory_space<vmem>>, vector<1x64x32xf32>
    %293 = vector.shape_cast %292 : vector<1x64x32xf32> to vector<64x32xf32>
    %cst_155 = arith.constant dense<0.000000e+00> : vector<16x32xf32>
    %294 = tpu.matmul %291, %293, %cst_155 {dimension_numbers = #tpu.dot_dimension_numbers<[1], [0], [0], [1], [0, 0, 1, 1], [], []>} : vector<16x64xf32>, vector<64x32xf32>, vector<16x32xf32> -> vector<16x32xf32>
    %c0_156 = arith.constant 0 : index
    %c0_157 = arith.constant 0 : index
    %c0_158 = arith.constant 0 : index
    %295 = vector.load %arg18[%c0_156, %c0_157, %c0_158] : memref<2x1x32xf32, #tpu.memory_space<vmem>>, vector<1x1x32xf32>
    %296 = vector.shape_cast %295 : vector<1x1x32xf32> to vector<1x32xf32>
    %297 = vector.broadcast %296 : vector<1x32xf32> to vector<16x32xf32>
    %298 = arith.addf %294, %297 : vector<16x32xf32>
    %299 = arith.addf %282, %298 : vector<16x32xf32>
    %c0_159 = arith.constant 0 : index
    %c0_160 = arith.constant 0 : index
    %c0_161 = arith.constant 0 : index
    %300 = vector.load %arg19[%c0_159, %c0_160, %c0_161] : memref<2x1x32xf32, #tpu.memory_space<vmem>>, vector<1x1x32xf32>
    %301 = vector.shape_cast %300 : vector<1x1x32xf32> to vector<1x32xf32>
    %c0_162 = arith.constant 0 : index
    %c0_163 = arith.constant 0 : index
    %c0_164 = arith.constant 0 : index
    %302 = vector.load %arg20[%c0_162, %c0_163, %c0_164] : memref<2x1x32xf32, #tpu.memory_space<vmem>>, vector<1x1x32xf32>
    %303 = vector.shape_cast %302 : vector<1x1x32xf32> to vector<1x32xf32>
    %cst_165 = arith.constant dense<0.000000e+00> : vector<16xf32>
    %304 = vector.multi_reduction <add>, %299, %cst_165 [1] : vector<16x32xf32> to vector<16xf32>
    %305 = vector.shape_cast %304 : vector<16xf32> to vector<16x1xf32>
    %cst_166 = arith.constant 3.200000e+01 : f32
    %306 = vector.broadcast %cst_166 : f32 to vector<16x1xf32>
    %307 = arith.divf %305, %306 : vector<16x1xf32>
    %308 = vector.broadcast %307 : vector<16x1xf32> to vector<16x32xf32>
    %309 = arith.subf %299, %308 : vector<16x32xf32>
    %310 = arith.mulf %309, %309 : vector<16x32xf32>
    %cst_167 = arith.constant dense<0.000000e+00> : vector<16xf32>
    %311 = vector.multi_reduction <add>, %310, %cst_167 [1] : vector<16x32xf32> to vector<16xf32>
    %312 = vector.shape_cast %311 : vector<16xf32> to vector<16x1xf32>
    %cst_168 = arith.constant 3.200000e+01 : f32
    %313 = vector.broadcast %cst_168 : f32 to vector<16x1xf32>
    %314 = arith.divf %312, %313 : vector<16x1xf32>
    %cst_169 = arith.constant 9.99999974E-6 : f32
    %315 = vector.broadcast %cst_169 : f32 to vector<16x1xf32>
    %316 = arith.addf %314, %315 : vector<16x1xf32>
    %317 = math.rsqrt %316 : vector<16x1xf32>
    %318 = vector.broadcast %317 : vector<16x1xf32> to vector<16x32xf32>
    %319 = arith.mulf %309, %318 : vector<16x32xf32>
    %320 = vector.broadcast %301 : vector<1x32xf32> to vector<16x32xf32>
    %321 = arith.mulf %319, %320 : vector<16x32xf32>
    %322 = vector.broadcast %303 : vector<1x32xf32> to vector<16x32xf32>
    %323 = arith.addf %321, %322 : vector<16x32xf32>
    %c0_170 = arith.constant 0 : index
    %c0_171 = arith.constant 0 : index
    %c0_172 = arith.constant 0 : index
    %324 = vector.load %arg21[%c0_170, %c0_171, %c0_172] : memref<2x16x32xf32, #tpu.memory_space<vmem>>, vector<1x16x32xf32>
    %325 = vector.shape_cast %324 : vector<1x16x32xf32> to vector<16x32xf32>
    %326 = vector.shape_cast %323 : vector<16x32xf32> to vector<1x16x32xf32>
    tpu.vector_store %arg21[%c0_170, %c0_171, %c0_172], %326 {strides = array<i32>} : memref<2x16x32xf32, #tpu.memory_space<vmem>>, vector<1x16x32xf32>,
    %c1_173 = arith.constant 1 : index
    %c0_174 = arith.constant 0 : index
    %c0_175 = arith.constant 0 : index
    %327 = vector.load %arg9[%c1_173, %c0_174, %c0_175] : memref<2x32x96xf32, #tpu.memory_space<vmem>>, vector<1x32x96xf32>
    %328 = vector.shape_cast %327 : vector<1x32x96xf32> to vector<32x96xf32>
    %cst_176 = arith.constant dense<0.000000e+00> : vector<16x96xf32>
    %329 = tpu.matmul %323, %328, %cst_176 {dimension_numbers = #tpu.dot_dimension_numbers<[1], [0], [0], [1], [0, 0, 1, 1], [], []>} : vector<16x32xf32>, vector<32x96xf32>, vector<16x96xf32> -> vector<16x96xf32>
    %c1_177 = arith.constant 1 : index
    %c0_178 = arith.constant 0 : index
    %c0_179 = arith.constant 0 : index
    %330 = vector.load %arg10[%c1_177, %c0_178, %c0_179] : memref<2x1x96xf32, #tpu.memory_space<vmem>>, vector<1x1x96xf32>
    %331 = vector.shape_cast %330 : vector<1x1x96xf32> to vector<1x96xf32>
    %332 = vector.broadcast %331 : vector<1x96xf32> to vector<16x96xf32>
    %333 = arith.addf %329, %332 : vector<16x96xf32>
    %334 = vector.extract_strided_slice %333 {offsets = [0, 0], sizes = [16, 32], strides = [1, 1]} : vector<16x96xf32> to vector<16x32xf32>
    %cst_180 = arith.constant 2.500000e-01 : f32
    %335 = vector.broadcast %cst_180 : f32 to vector<16x32xf32>
    %336 = arith.mulf %334, %335 : vector<16x32xf32>
    %337 = vector.extract_strided_slice %333 {offsets = [0, 32], sizes = [16, 32], strides = [1, 1]} : vector<16x96xf32> to vector<16x32xf32>
    %338 = vector.extract_strided_slice %333 {offsets = [0, 64], sizes = [16, 32], strides = [1, 1]} : vector<16x96xf32> to vector<16x32xf32>
    %339 = vector.extract_strided_slice %336 {offsets = [0, 0], sizes = [16, 8], strides = [1, 1]} : vector<16x32xf32> to vector<16x8xf32>
    %340 = vector.shape_cast %339 : vector<16x8xf32> to vector<2x8x8xf32>
    %341 = vector.extract_strided_slice %337 {offsets = [0, 0], sizes = [16, 8], strides = [1, 1]} : vector<16x32xf32> to vector<16x8xf32>
    %342 = vector.shape_cast %341 : vector<16x8xf32> to vector<2x8x8xf32>
    %343 = vector.extract_strided_slice %338 {offsets = [0, 0], sizes = [16, 8], strides = [1, 1]} : vector<16x32xf32> to vector<16x8xf32>
    %344 = vector.shape_cast %343 : vector<16x8xf32> to vector<2x8x8xf32>
    "tpu.trace_start"() <{level = 10 : i32, message = "bqd,bkd->bqk"}> : () -> ()
    %cst_181 = arith.constant dense<0.000000e+00> : vector<2x8x8xf32>
    %345 = tpu.matmul %340, %342, %cst_181 {dimension_numbers = #tpu.dot_dimension_numbers<[2], [2], [1], [1], [0, 0, 0, 1, 1, 1], [0], [0]>} : vector<2x8x8xf32>, vector<2x8x8xf32>, vector<2x8x8xf32> -> vector<2x8x8xf32>
    "tpu.trace_stop"() : () -> ()
    %346 = arith.addf %345, %84 : vector<2x8x8xf32>
    %cst_182 = arith.constant dense<0xFF800000> : vector<2x8xf32>
    %347 = vector.multi_reduction <maximumf>, %346, %cst_182 [2] : vector<2x8x8xf32> to vector<2x8xf32>
    %348 = vector.shape_cast %347 : vector<2x8xf32> to vector<2x8x1xf32>
    %349 = vector.broadcast %348 : vector<2x8x1xf32> to vector<2x8x8xf32>
    %350 = arith.subf %346, %349 : vector<2x8x8xf32>
    %351 = math.exp %350 : vector<2x8x8xf32>
    %cst_183 = arith.constant dense<0.000000e+00> : vector<2x8xf32>
    %352 = vector.multi_reduction <add>, %351, %cst_183 [2] : vector<2x8x8xf32> to vector<2x8xf32>
    %353 = vector.shape_cast %352 : vector<2x8xf32> to vector<2x8x1xf32>
    %354 = tpu.reciprocal %353 {approx = true} : vector<2x8x1xf32> -> vector<2x8x1xf32>
    %355 = vector.broadcast %354 : vector<2x8x1xf32> to vector<2x8x8xf32>
    %356 = arith.mulf %351, %355 : vector<2x8x8xf32>
    "tpu.trace_start"() <{level = 10 : i32, message = "bqk,bkd->bqd"}> : () -> ()
    %cst_184 = arith.constant dense<0.000000e+00> : vector<2x8x8xf32>
    %357 = tpu.matmul %356, %344, %cst_184 {dimension_numbers = #tpu.dot_dimension_numbers<[2], [1], [1], [2], [0, 0, 0, 1, 1, 2], [0], [0]>} : vector<2x8x8xf32>, vector<2x8x8xf32>, vector<2x8x8xf32> -> vector<2x8x8xf32>
    "tpu.trace_stop"() : () -> ()
    %358 = vector.shape_cast %357 : vector<2x8x8xf32> to vector<16x8xf32>
    %359 = vector.extract_strided_slice %336 {offsets = [0, 8], sizes = [16, 8], strides = [1, 1]} : vector<16x32xf32> to vector<16x8xf32>
    %360 = vector.shape_cast %359 : vector<16x8xf32> to vector<2x8x8xf32>
    %361 = vector.extract_strided_slice %337 {offsets = [0, 8], sizes = [16, 8], strides = [1, 1]} : vector<16x32xf32> to vector<16x8xf32>
    %362 = vector.shape_cast %361 : vector<16x8xf32> to vector<2x8x8xf32>
    %363 = vector.extract_strided_slice %338 {offsets = [0, 8], sizes = [16, 8], strides = [1, 1]} : vector<16x32xf32> to vector<16x8xf32>
    %364 = vector.shape_cast %363 : vector<16x8xf32> to vector<2x8x8xf32>
    "tpu.trace_start"() <{level = 10 : i32, message = "bqd,bkd->bqk"}> : () -> ()
    %cst_185 = arith.constant dense<0.000000e+00> : vector<2x8x8xf32>
    %365 = tpu.matmul %360, %362, %cst_185 {dimension_numbers = #tpu.dot_dimension_numbers<[2], [2], [1], [1], [0, 0, 0, 1, 1, 1], [0], [0]>} : vector<2x8x8xf32>, vector<2x8x8xf32>, vector<2x8x8xf32> -> vector<2x8x8xf32>
    "tpu.trace_stop"() : () -> ()
    %366 = arith.addf %365, %108 : vector<2x8x8xf32>
    %cst_186 = arith.constant dense<0xFF800000> : vector<2x8xf32>
    %367 = vector.multi_reduction <maximumf>, %366, %cst_186 [2] : vector<2x8x8xf32> to vector<2x8xf32>
    %368 = vector.shape_cast %367 : vector<2x8xf32> to vector<2x8x1xf32>
    %369 = vector.broadcast %368 : vector<2x8x1xf32> to vector<2x8x8xf32>
    %370 = arith.subf %366, %369 : vector<2x8x8xf32>
    %371 = math.exp %370 : vector<2x8x8xf32>
    %cst_187 = arith.constant dense<0.000000e+00> : vector<2x8xf32>
    %372 = vector.multi_reduction <add>, %371, %cst_187 [2] : vector<2x8x8xf32> to vector<2x8xf32>
    %373 = vector.shape_cast %372 : vector<2x8xf32> to vector<2x8x1xf32>
    %374 = tpu.reciprocal %373 {approx = true} : vector<2x8x1xf32> -> vector<2x8x1xf32>
    %375 = vector.broadcast %374 : vector<2x8x1xf32> to vector<2x8x8xf32>
    %376 = arith.mulf %371, %375 : vector<2x8x8xf32>
    "tpu.trace_start"() <{level = 10 : i32, message = "bqk,bkd->bqd"}> : () -> ()
    %cst_188 = arith.constant dense<0.000000e+00> : vector<2x8x8xf32>
    %377 = tpu.matmul %376, %364, %cst_188 {dimension_numbers = #tpu.dot_dimension_numbers<[2], [1], [1], [2], [0, 0, 0, 1, 1, 2], [0], [0]>} : vector<2x8x8xf32>, vector<2x8x8xf32>, vector<2x8x8xf32> -> vector<2x8x8xf32>
    "tpu.trace_stop"() : () -> ()
    %378 = vector.shape_cast %377 : vector<2x8x8xf32> to vector<16x8xf32>
    %379 = vector.extract_strided_slice %336 {offsets = [0, 16], sizes = [16, 8], strides = [1, 1]} : vector<16x32xf32> to vector<16x8xf32>
    %380 = vector.shape_cast %379 : vector<16x8xf32> to vector<2x8x8xf32>
    %381 = vector.extract_strided_slice %337 {offsets = [0, 16], sizes = [16, 8], strides = [1, 1]} : vector<16x32xf32> to vector<16x8xf32>
    %382 = vector.shape_cast %381 : vector<16x8xf32> to vector<2x8x8xf32>
    %383 = vector.extract_strided_slice %338 {offsets = [0, 16], sizes = [16, 8], strides = [1, 1]} : vector<16x32xf32> to vector<16x8xf32>
    %384 = vector.shape_cast %383 : vector<16x8xf32> to vector<2x8x8xf32>
    "tpu.trace_start"() <{level = 10 : i32, message = "bqd,bkd->bqk"}> : () -> ()
    %cst_189 = arith.constant dense<0.000000e+00> : vector<2x8x8xf32>
    %385 = tpu.matmul %380, %382, %cst_189 {dimension_numbers = #tpu.dot_dimension_numbers<[2], [2], [1], [1], [0, 0, 0, 1, 1, 1], [0], [0]>} : vector<2x8x8xf32>, vector<2x8x8xf32>, vector<2x8x8xf32> -> vector<2x8x8xf32>
    "tpu.trace_stop"() : () -> ()
    %386 = arith.addf %385, %132 : vector<2x8x8xf32>
    %cst_190 = arith.constant dense<0xFF800000> : vector<2x8xf32>
    %387 = vector.multi_reduction <maximumf>, %386, %cst_190 [2] : vector<2x8x8xf32> to vector<2x8xf32>
    %388 = vector.shape_cast %387 : vector<2x8xf32> to vector<2x8x1xf32>
    %389 = vector.broadcast %388 : vector<2x8x1xf32> to vector<2x8x8xf32>
    %390 = arith.subf %386, %389 : vector<2x8x8xf32>
    %391 = math.exp %390 : vector<2x8x8xf32>
    %cst_191 = arith.constant dense<0.000000e+00> : vector<2x8xf32>
    %392 = vector.multi_reduction <add>, %391, %cst_191 [2] : vector<2x8x8xf32> to vector<2x8xf32>
    %393 = vector.shape_cast %392 : vector<2x8xf32> to vector<2x8x1xf32>
    %394 = tpu.reciprocal %393 {approx = true} : vector<2x8x1xf32> -> vector<2x8x1xf32>
    %395 = vector.broadcast %394 : vector<2x8x1xf32> to vector<2x8x8xf32>
    %396 = arith.mulf %391, %395 : vector<2x8x8xf32>
    "tpu.trace_start"() <{level = 10 : i32, message = "bqk,bkd->bqd"}> : () -> ()
    %cst_192 = arith.constant dense<0.000000e+00> : vector<2x8x8xf32>
    %397 = tpu.matmul %396, %384, %cst_192 {dimension_numbers = #tpu.dot_dimension_numbers<[2], [1], [1], [2], [0, 0, 0, 1, 1, 2], [0], [0]>} : vector<2x8x8xf32>, vector<2x8x8xf32>, vector<2x8x8xf32> -> vector<2x8x8xf32>
    "tpu.trace_stop"() : () -> ()
    %398 = vector.shape_cast %397 : vector<2x8x8xf32> to vector<16x8xf32>
    %399 = vector.extract_strided_slice %336 {offsets = [0, 24], sizes = [16, 8], strides = [1, 1]} : vector<16x32xf32> to vector<16x8xf32>
    %400 = vector.shape_cast %399 : vector<16x8xf32> to vector<2x8x8xf32>
    %401 = vector.extract_strided_slice %337 {offsets = [0, 24], sizes = [16, 8], strides = [1, 1]} : vector<16x32xf32> to vector<16x8xf32>
    %402 = vector.shape_cast %401 : vector<16x8xf32> to vector<2x8x8xf32>
    %403 = vector.extract_strided_slice %338 {offsets = [0, 24], sizes = [16, 8], strides = [1, 1]} : vector<16x32xf32> to vector<16x8xf32>
    %404 = vector.shape_cast %403 : vector<16x8xf32> to vector<2x8x8xf32>
    "tpu.trace_start"() <{level = 10 : i32, message = "bqd,bkd->bqk"}> : () -> ()
    %cst_193 = arith.constant dense<0.000000e+00> : vector<2x8x8xf32>
    %405 = tpu.matmul %400, %402, %cst_193 {dimension_numbers = #tpu.dot_dimension_numbers<[2], [2], [1], [1], [0, 0, 0, 1, 1, 1], [0], [0]>} : vector<2x8x8xf32>, vector<2x8x8xf32>, vector<2x8x8xf32> -> vector<2x8x8xf32>
    "tpu.trace_stop"() : () -> ()
    %406 = arith.addf %405, %156 : vector<2x8x8xf32>
    %cst_194 = arith.constant dense<0xFF800000> : vector<2x8xf32>
    %407 = vector.multi_reduction <maximumf>, %406, %cst_194 [2] : vector<2x8x8xf32> to vector<2x8xf32>
    %408 = vector.shape_cast %407 : vector<2x8xf32> to vector<2x8x1xf32>
    %409 = vector.broadcast %408 : vector<2x8x1xf32> to vector<2x8x8xf32>
    %410 = arith.subf %406, %409 : vector<2x8x8xf32>
    %411 = math.exp %410 : vector<2x8x8xf32>
    %cst_195 = arith.constant dense<0.000000e+00> : vector<2x8xf32>
    %412 = vector.multi_reduction <add>, %411, %cst_195 [2] : vector<2x8x8xf32> to vector<2x8xf32>
    %413 = vector.shape_cast %412 : vector<2x8xf32> to vector<2x8x1xf32>
    %414 = tpu.reciprocal %413 {approx = true} : vector<2x8x1xf32> -> vector<2x8x1xf32>
    %415 = vector.broadcast %414 : vector<2x8x1xf32> to vector<2x8x8xf32>
    %416 = arith.mulf %411, %415 : vector<2x8x8xf32>
    "tpu.trace_start"() <{level = 10 : i32, message = "bqk,bkd->bqd"}> : () -> ()
    %cst_196 = arith.constant dense<0.000000e+00> : vector<2x8x8xf32>
    %417 = tpu.matmul %416, %404, %cst_196 {dimension_numbers = #tpu.dot_dimension_numbers<[2], [1], [1], [2], [0, 0, 0, 1, 1, 2], [0], [0]>} : vector<2x8x8xf32>, vector<2x8x8xf32>, vector<2x8x8xf32> -> vector<2x8x8xf32>
    "tpu.trace_stop"() : () -> ()
    %418 = vector.shape_cast %417 : vector<2x8x8xf32> to vector<16x8xf32>
    %419 = tpu.concatenate %358, %378, %398, %418 in 1 : vector<16x8xf32>, vector<16x8xf32>, vector<16x8xf32>, vector<16x8xf32> -> vector<16x32xf32>
    %c1_197 = arith.constant 1 : index
    %c0_198 = arith.constant 0 : index
    %c0_199 = arith.constant 0 : index
    %420 = vector.load %arg11[%c1_197, %c0_198, %c0_199] : memref<2x32x32xf32, #tpu.memory_space<vmem>>, vector<1x32x32xf32>
    %421 = vector.shape_cast %420 : vector<1x32x32xf32> to vector<32x32xf32>
    %cst_200 = arith.constant dense<0.000000e+00> : vector<16x32xf32>
    %422 = tpu.matmul %419, %421, %cst_200 {dimension_numbers = #tpu.dot_dimension_numbers<[1], [0], [0], [1], [0, 0, 1, 1], [], []>} : vector<16x32xf32>, vector<32x32xf32>, vector<16x32xf32> -> vector<16x32xf32>
    %c1_201 = arith.constant 1 : index
    %c0_202 = arith.constant 0 : index
    %c0_203 = arith.constant 0 : index
    %423 = vector.load %arg12[%c1_201, %c0_202, %c0_203] : memref<2x1x32xf32, #tpu.memory_space<vmem>>, vector<1x1x32xf32>
    %424 = vector.shape_cast %423 : vector<1x1x32xf32> to vector<1x32xf32>
    %425 = vector.broadcast %424 : vector<1x32xf32> to vector<16x32xf32>
    %426 = arith.addf %422, %425 : vector<16x32xf32>
    %427 = arith.addf %323, %426 : vector<16x32xf32>
    %c1_204 = arith.constant 1 : index
    %c0_205 = arith.constant 0 : index
    %c0_206 = arith.constant 0 : index
    %428 = vector.load %arg13[%c1_204, %c0_205, %c0_206] : memref<2x1x32xf32, #tpu.memory_space<vmem>>, vector<1x1x32xf32>
    %429 = vector.shape_cast %428 : vector<1x1x32xf32> to vector<1x32xf32>
    %c1_207 = arith.constant 1 : index
    %c0_208 = arith.constant 0 : index
    %c0_209 = arith.constant 0 : index
    %430 = vector.load %arg14[%c1_207, %c0_208, %c0_209] : memref<2x1x32xf32, #tpu.memory_space<vmem>>, vector<1x1x32xf32>
    %431 = vector.shape_cast %430 : vector<1x1x32xf32> to vector<1x32xf32>
    %cst_210 = arith.constant dense<0.000000e+00> : vector<16xf32>
    %432 = vector.multi_reduction <add>, %427, %cst_210 [1] : vector<16x32xf32> to vector<16xf32>
    %433 = vector.shape_cast %432 : vector<16xf32> to vector<16x1xf32>
    %cst_211 = arith.constant 3.200000e+01 : f32
    %434 = vector.broadcast %cst_211 : f32 to vector<16x1xf32>
    %435 = arith.divf %433, %434 : vector<16x1xf32>
    %436 = vector.broadcast %435 : vector<16x1xf32> to vector<16x32xf32>
    %437 = arith.subf %427, %436 : vector<16x32xf32>
    %438 = arith.mulf %437, %437 : vector<16x32xf32>
    %cst_212 = arith.constant dense<0.000000e+00> : vector<16xf32>
    %439 = vector.multi_reduction <add>, %438, %cst_212 [1] : vector<16x32xf32> to vector<16xf32>
    %440 = vector.shape_cast %439 : vector<16xf32> to vector<16x1xf32>
    %cst_213 = arith.constant 3.200000e+01 : f32
    %441 = vector.broadcast %cst_213 : f32 to vector<16x1xf32>
    %442 = arith.divf %440, %441 : vector<16x1xf32>
    %cst_214 = arith.constant 9.99999974E-6 : f32
    %443 = vector.broadcast %cst_214 : f32 to vector<16x1xf32>
    %444 = arith.addf %442, %443 : vector<16x1xf32>
    %445 = math.rsqrt %444 : vector<16x1xf32>
    %446 = vector.broadcast %445 : vector<16x1xf32> to vector<16x32xf32>
    %447 = arith.mulf %437, %446 : vector<16x32xf32>
    %448 = vector.broadcast %429 : vector<1x32xf32> to vector<16x32xf32>
    %449 = arith.mulf %447, %448 : vector<16x32xf32>
    %450 = vector.broadcast %431 : vector<1x32xf32> to vector<16x32xf32>
    %451 = arith.addf %449, %450 : vector<16x32xf32>
    %c1_215 = arith.constant 1 : index
    %c0_216 = arith.constant 0 : index
    %c0_217 = arith.constant 0 : index
    %452 = vector.load %arg15[%c1_215, %c0_216, %c0_217] : memref<2x32x64xf32, #tpu.memory_space<vmem>>, vector<1x32x64xf32>
    %453 = vector.shape_cast %452 : vector<1x32x64xf32> to vector<32x64xf32>
    %cst_218 = arith.constant dense<0.000000e+00> : vector<16x64xf32>
    %454 = tpu.matmul %451, %453, %cst_218 {dimension_numbers = #tpu.dot_dimension_numbers<[1], [0], [0], [1], [0, 0, 1, 1], [], []>} : vector<16x32xf32>, vector<32x64xf32>, vector<16x64xf32> -> vector<16x64xf32>
    %c1_219 = arith.constant 1 : index
    %c0_220 = arith.constant 0 : index
    %c0_221 = arith.constant 0 : index
    %455 = vector.load %arg16[%c1_219, %c0_220, %c0_221] : memref<2x1x64xf32, #tpu.memory_space<vmem>>, vector<1x1x64xf32>
    %456 = vector.shape_cast %455 : vector<1x1x64xf32> to vector<1x64xf32>
    %457 = vector.broadcast %456 : vector<1x64xf32> to vector<16x64xf32>
    %458 = arith.addf %454, %457 : vector<16x64xf32>
    %cst_222 = arith.constant 0.000000e+00 : f32
    %459 = vector.broadcast %cst_222 : f32 to vector<16x64xf32>
    %460 = arith.maximumf %458, %459 : vector<16x64xf32>
    %c1_223 = arith.constant 1 : index
    %c0_224 = arith.constant 0 : index
    %c0_225 = arith.constant 0 : index
    %461 = vector.load %arg17[%c1_223, %c0_224, %c0_225] : memref<2x64x32xf32, #tpu.memory_space<vmem>>, vector<1x64x32xf32>
    %462 = vector.shape_cast %461 : vector<1x64x32xf32> to vector<64x32xf32>
    %cst_226 = arith.constant dense<0.000000e+00> : vector<16x32xf32>
    %463 = tpu.matmul %460, %462, %cst_226 {dimension_numbers = #tpu.dot_dimension_numbers<[1], [0], [0], [1], [0, 0, 1, 1], [], []>} : vector<16x64xf32>, vector<64x32xf32>, vector<16x32xf32> -> vector<16x32xf32>
    %c1_227 = arith.constant 1 : index
    %c0_228 = arith.constant 0 : index
    %c0_229 = arith.constant 0 : index
    %464 = vector.load %arg18[%c1_227, %c0_228, %c0_229] : memref<2x1x32xf32, #tpu.memory_space<vmem>>, vector<1x1x32xf32>
    %465 = vector.shape_cast %464 : vector<1x1x32xf32> to vector<1x32xf32>
    %466 = vector.broadcast %465 : vector<1x32xf32> to vector<16x32xf32>
    %467 = arith.addf %463, %466 : vector<16x32xf32>
    %468 = arith.addf %451, %467 : vector<16x32xf32>
    %c1_230 = arith.constant 1 : index
    %c0_231 = arith.constant 0 : index
    %c0_232 = arith.constant 0 : index
    %469 = vector.load %arg19[%c1_230, %c0_231, %c0_232] : memref<2x1x32xf32, #tpu.memory_space<vmem>>, vector<1x1x32xf32>
    %470 = vector.shape_cast %469 : vector<1x1x32xf32> to vector<1x32xf32>
    %c1_233 = arith.constant 1 : index
    %c0_234 = arith.constant 0 : index
    %c0_235 = arith.constant 0 : index
    %471 = vector.load %arg20[%c1_233, %c0_234, %c0_235] : memref<2x1x32xf32, #tpu.memory_space<vmem>>, vector<1x1x32xf32>
    %472 = vector.shape_cast %471 : vector<1x1x32xf32> to vector<1x32xf32>
    %cst_236 = arith.constant dense<0.000000e+00> : vector<16xf32>
    %473 = vector.multi_reduction <add>, %468, %cst_236 [1] : vector<16x32xf32> to vector<16xf32>
    %474 = vector.shape_cast %473 : vector<16xf32> to vector<16x1xf32>
    %cst_237 = arith.constant 3.200000e+01 : f32
    %475 = vector.broadcast %cst_237 : f32 to vector<16x1xf32>
    %476 = arith.divf %474, %475 : vector<16x1xf32>
    %477 = vector.broadcast %476 : vector<16x1xf32> to vector<16x32xf32>
    %478 = arith.subf %468, %477 : vector<16x32xf32>
    %479 = arith.mulf %478, %478 : vector<16x32xf32>
    %cst_238 = arith.constant dense<0.000000e+00> : vector<16xf32>
    %480 = vector.multi_reduction <add>, %479, %cst_238 [1] : vector<16x32xf32> to vector<16xf32>
    %481 = vector.shape_cast %480 : vector<16xf32> to vector<16x1xf32>
    %cst_239 = arith.constant 3.200000e+01 : f32
    %482 = vector.broadcast %cst_239 : f32 to vector<16x1xf32>
    %483 = arith.divf %481, %482 : vector<16x1xf32>
    %cst_240 = arith.constant 9.99999974E-6 : f32
    %484 = vector.broadcast %cst_240 : f32 to vector<16x1xf32>
    %485 = arith.addf %483, %484 : vector<16x1xf32>
    %486 = math.rsqrt %485 : vector<16x1xf32>
    %487 = vector.broadcast %486 : vector<16x1xf32> to vector<16x32xf32>
    %488 = arith.mulf %478, %487 : vector<16x32xf32>
    %489 = vector.broadcast %470 : vector<1x32xf32> to vector<16x32xf32>
    %490 = arith.mulf %488, %489 : vector<16x32xf32>
    %491 = vector.broadcast %472 : vector<1x32xf32> to vector<16x32xf32>
    %492 = arith.addf %490, %491 : vector<16x32xf32>
    %c1_241 = arith.constant 1 : index
    %c0_242 = arith.constant 0 : index
    %c0_243 = arith.constant 0 : index
    %493 = vector.load %arg21[%c1_241, %c0_242, %c0_243] : memref<2x16x32xf32, #tpu.memory_space<vmem>>, vector<1x16x32xf32>
    %494 = vector.shape_cast %493 : vector<1x16x32xf32> to vector<16x32xf32>
    %495 = vector.shape_cast %492 : vector<16x32xf32> to vector<1x16x32xf32>
    tpu.vector_store %arg21[%c1_241, %c0_242, %c0_243], %495 {strides = array<i32>} : memref<2x16x32xf32, #tpu.memory_space<vmem>>, vector<1x16x32xf32>,
    return
  }
}

</mosaic_0001>

<llo_original>
// kernel: forward.1
$region0: #{forward.1}
  #allocation0 [shape = 'u32[]', space=smem, size = 0x4, offset = 0x4, fixed_abs, tag = 'smem constant byte address 0x4 - core index']
  #allocation1 [shape = 'u32[144,128]{1,0:T(1,128)}', space=vmem, size = 0x12000, scoped, tag = 'internal scratch']
  #allocation2 [shape = 'f32[4,9,9]{2,1,0:T(8,128)}', space=vmem, size = 0x8000, scoped, tag = 'scratch operand']
  %s0 = inlined_call_operand.vmem [shape: f32[16,32], index: 0, kind: input, shape index: {}]
  %s1 = inlined_call_operand.vmem [shape: f32[2,1,8], index: 1, kind: input, shape index: {}]
  %s2 = inlined_call_operand.vmem [shape: f32[9,32], index: 2, kind: input, shape index: {}]
  %s3 = inlined_call_operand.vmem [shape: f32[1,32], index: 3, kind: input, shape index: {}]
  %s4 = inlined_call_operand.vmem [shape: f32[1,32], index: 4, kind: input, shape index: {}]
  %s5 = inlined_call_operand.vmem [shape: f32[32,32], index: 5, kind: input, shape index: {}]
  %s6 = inlined_call_operand.vmem [shape: f32[1,32], index: 6, kind: input, shape index: {}]
  %s7 = inlined_call_operand.vmem [shape: f32[32,32], index: 7, kind: input, shape index: {}]
  %s8 = inlined_call_operand.vmem [shape: f32[1,32], index: 8, kind: input, shape index: {}]
  %s9 = inlined_call_operand.vmem [shape: f32[2,32,96], index: 9, kind: input, shape index: {}]
  %s10 = inlined_call_operand.vmem [shape: f32[2,1,96], index: 10, kind: input, shape index: {}]
  %s11 = inlined_call_operand.vmem [shape: f32[2,32,32], index: 11, kind: input, shape index: {}]
  %s12 = inlined_call_operand.vmem [shape: f32[2,1,32], index: 12, kind: input, shape index: {}]
  %s13 = inlined_call_operand.vmem [shape: f32[2,1,32], index: 13, kind: input, shape index: {}]
  %s14 = inlined_call_operand.vmem [shape: f32[2,1,32], index: 14, kind: input, shape index: {}]
  %s15 = inlined_call_operand.vmem [shape: f32[2,32,64], index: 15, kind: input, shape index: {}]
  %s16 = inlined_call_operand.vmem [shape: f32[2,1,64], index: 16, kind: input, shape index: {}]
  %s17 = inlined_call_operand.vmem [shape: f32[2,64,32], index: 17, kind: input, shape index: {}]
  %s18 = inlined_call_operand.vmem [shape: f32[2,1,32], index: 18, kind: input, shape index: {}]
  %s19 = inlined_call_operand.vmem [shape: f32[2,1,32], index: 19, kind: input, shape index: {}]
  %s20 = inlined_call_operand.vmem [shape: f32[2,1,32], index: 20, kind: input, shape index: {}]
  %s21 = inlined_call_operand.vmem [shape: f32[2,16,32], index: 21, kind: output, shape index: {0}]
  %s22 = inlined_call_operand.hbm [shape: f32[4,8,8], index: 22, kind: output, shape index: {1}]
  %23 = xla_tuple %s21, %s22
  %s24 = sld [smem:[#allocation0]]
  $region102: #{forward.1} parent=0
    _
  %s26 = ssub.s32 1, %s24
  %s27 = scalar_select 0, %s26, %s24
  $region1: #{forward.1} parent=0
    #allocation3 [shape = 'u8[16384]{0}', space=vmem, size = 0x4000, scoped, tag = 'output window, operand 1, single buffered']
    #allocation4 [shape = 's32[1]{0}', space=sflag, size = 0x4, scoped, tag = 'scoped memory for forward.1']
    %28 = vsyncpa [#allocation4], 0
    // Predicated region
    $region2: #{forward.1} parent=1 // pred_check
      _
    $region3: #{forward.1} parent=1 // pred_check_branch
      %30 = sbr.rel (0) target = $region5
    $region4: #{forward.1} parent=1 // pred_region
      _
    $region5: #{forward.1} parent=1 // pred_fallthru
      _
    // Predicated region
    $region6: #{forward.1} parent=1 // pred_check
      _
    $region7: #{forward.1} parent=1 // pred_check_branch
      %32 = sbr.rel (0) target = $region9
    $region8: #{forward.1} parent=1 // pred_region
      _
    $region9: #{forward.1} parent=1 // pred_fallthru
      _
    // Predicated region
    $region10: #{forward.1} parent=1 // pred_check
      _
    $region11: #{forward.1} parent=1 // pred_check_branch
      %34 = sbr.rel (0) target = $region13
    $region12: #{forward.1} parent=1 // pred_region
      _
    $region13: #{forward.1} parent=1 // pred_fallthru
      _
    // Predicated region
    $region14: #{forward.1} parent=1 // pred_check
      _
    $region15: #{forward.1} parent=1 // pred_check_branch
      %36 = sbr.rel (0) target = $region17
    $region16: #{forward.1} parent=1 // pred_region
      _
    $region17: #{forward.1} parent=1 // pred_fallthru
      _
    // Predicated region
    $region18: #{forward.1} parent=1 // pred_check
      _
    $region19: #{forward.1} parent=1 // pred_check_branch
      %38 = sbr.rel (0) target = $region21
    $region20: #{forward.1} parent=1 // pred_region
      _
    $region21: #{forward.1} parent=1 // pred_fallthru
      _
    // Predicated region
    $region22: #{forward.1} parent=1 // pred_check
      _
    $region23: #{forward.1} parent=1 // pred_check_branch
      %40 = sbr.rel (0) target = $region25
    $region24: #{forward.1} parent=1 // pred_region
      _
    $region25: #{forward.1} parent=1 // pred_fallthru
      _
    // Predicated region
    $region26: #{forward.1} parent=1 // pred_check
      _
    $region27: #{forward.1} parent=1 // pred_check_branch
      %42 = sbr.rel (0) target = $region29
    $region28: #{forward.1} parent=1 // pred_region
      _
    $region29: #{forward.1} parent=1 // pred_fallthru
      _
    // Predicated region
    $region30: #{forward.1} parent=1 // pred_check
      _
    $region31: #{forward.1} parent=1 // pred_check_branch
      %44 = sbr.rel (0) target = $region33
    $region32: #{forward.1} parent=1 // pred_region
      _
    $region33: #{forward.1} parent=1 // pred_fallthru
      _
    // Predicated region
    $region34: #{forward.1} parent=1 // pred_check
      _
    $region35: #{forward.1} parent=1 // pred_check_branch
      %46 = sbr.rel (0) target = $region37
    $region36: #{forward.1} parent=1 // pred_region
      _
    $region37: #{forward.1} parent=1 // pred_fallthru
      _
    // Predicated region
    $region38: #{forward.1} parent=1 // pred_check
      _
    $region39: #{forward.1} parent=1 // pred_check_branch
      %48 = sbr.rel (0) target = $region41
    $region40: #{forward.1} parent=1 // pred_region
      _
    $region41: #{forward.1} parent=1 // pred_fallthru
      _
    // Predicated region
    $region42: #{forward.1} parent=1 // pred_check
      _
    $region43: #{forward.1} parent=1 // pred_check_branch
      %50 = sbr.rel (0) target = $region45
    $region44: #{forward.1} parent=1 // pred_region
      _
    $region45: #{forward.1} parent=1 // pred_fallthru
      _
    // Predicated region
    $region46: #{forward.1} parent=1 // pred_check
      _
    $region47: #{forward.1} parent=1 // pred_check_branch
      %52 = sbr.rel (0) target = $region49
    $region48: #{forward.1} parent=1 // pred_region
      _
    $region49: #{forward.1} parent=1 // pred_fallthru
      _
    // Predicated region
    $region50: #{forward.1} parent=1 // pred_check
      _
    $region51: #{forward.1} parent=1 // pred_check_branch
      %54 = sbr.rel (0) target = $region53
    $region52: #{forward.1} parent=1 // pred_region
      _
    $region53: #{forward.1} parent=1 // pred_fallthru
      _
    // Predicated region
    $region54: #{forward.1} parent=1 // pred_check
      _
    $region55: #{forward.1} parent=1 // pred_check_branch
      %56 = sbr.rel (0) target = $region57
    $region56: #{forward.1} parent=1 // pred_region
      _
    $region57: #{forward.1} parent=1 // pred_fallthru
      _
    // Predicated region
    $region58: #{forward.1} parent=1 // pred_check
      _
    $region59: #{forward.1} parent=1 // pred_check_branch
      %58 = sbr.rel (0) target = $region61
    $region60: #{forward.1} parent=1 // pred_region
      _
    $region61: #{forward.1} parent=1 // pred_fallthru
      _
    // Predicated region
    $region62: #{forward.1} parent=1 // pred_check
      _
    $region63: #{forward.1} parent=1 // pred_check_branch
      %60 = sbr.rel (0) target = $region65
    $region64: #{forward.1} parent=1 // pred_region
      _
    $region65: #{forward.1} parent=1 // pred_fallthru
      _
    // Predicated region
    $region66: #{forward.1} parent=1 // pred_check
      _
    $region67: #{forward.1} parent=1 // pred_check_branch
      %62 = sbr.rel (0) target = $region69
    $region68: #{forward.1} parent=1 // pred_region
      _
    $region69: #{forward.1} parent=1 // pred_fallthru
      _
    // Predicated region
    $region70: #{forward.1} parent=1 // pred_check
      _
    $region71: #{forward.1} parent=1 // pred_check_branch
      %64 = sbr.rel (0) target = $region73
    $region72: #{forward.1} parent=1 // pred_region
      _
    $region73: #{forward.1} parent=1 // pred_fallthru
      _
    // Predicated region
    $region74: #{forward.1} parent=1 // pred_check
      _
    $region75: #{forward.1} parent=1 // pred_check_branch
      %66 = sbr.rel (0) target = $region77
    $region76: #{forward.1} parent=1 // pred_region
      _
    $region77: #{forward.1} parent=1 // pred_fallthru
      _
    // Predicated region
    $region78: #{forward.1} parent=1 // pred_check
      _
    $region79: #{forward.1} parent=1 // pred_check_branch
      %68 = sbr.rel (0) target = $region81
    $region80: #{forward.1} parent=1 // pred_region
      _
    $region81: #{forward.1} parent=1 // pred_fallthru
      _
    // Predicated region
    $region82: #{forward.1} parent=1 // pred_check
      _
    $region83: #{forward.1} parent=1 // pred_check_branch
      %70 = sbr.rel (0) target = $region85
    $region84: #{forward.1} parent=1 // pred_region
      _
    $region85: #{forward.1} parent=1 // pred_fallthru
      _
    %v71 = vld [vmem:[%s2] sm:$0xff]
    %v72 = vld [vmem:[%s2 + $0x8] sm:$0x1]
    %v73 = vld [vmem:[%s3] sm:$0x1]
    %v74 = vld [vmem:[%s4] sm:$0x1]
    %vm75 = vcmask 261120
    %v76 = vsel %vm75, %v71, 0.0
    %77 = vadd.xlane.f32.xlu0 %v76
    %v78 = vpop.xlane.xlu0 %77
    %vm79 = vcmask 253952
    %v80 = vsel %vm79, %v72, 0.0
    %81 = vadd.xlane.f32.xlu0 %v80
    %v82 = vpop.xlane.xlu0 %81
    %v83 = vrcp.pop 32.0
    %v84 = vmul.f32 %v78, %v83
    %v85 = vmul.f32 %v82, %v83
    %v86 = vsub.f32 %v71, %v84
    %v87 = vsub.f32 %v72, %v85
    %v88 = vmul.f32 %v86, %v86
    %v89 = vmul.f32 %v87, %v87
    %v90 = vsel %vm75, %v88, 0.0
    %91 = vadd.xlane.f32.xlu0 %v90
    %v92 = vpop.xlane.xlu0 %91
    %v93 = vsel %vm79, %v89, 0.0
    %94 = vadd.xlane.f32.xlu0 %v93
    %v95 = vpop.xlane.xlu0 %94
    %v96 = vmul.f32 %v92, %v83
    %v97 = vmul.f32 %v95, %v83
    %v98 = vadd.f32 %v96, 1e-05
    %v99 = vadd.f32 %v97, 1e-05
    %v100 = vrsqrt.pop %v98
    %v101 = vrsqrt.pop %v99
    %v102 = vmul.f32 %v86, %v100
    %v103 = vmul.f32 %v87, %v101
    %v105 = vlaneseq
    %v106 = vshrl.u32 %v105, 7
    %v107 = vsub.s32 0, %v106
    %v108 = vrot.slane %v73, %v107
    %v110 = vmul.f32 %v102, %v108
    %v111 = vmul.f32 %v103, %v108
    %v113 = vlaneseq
    %v114 = vshrl.u32 %v113, 7
    %v115 = vsub.s32 0, %v114
    %v116 = vrot.slane %v74, %v115
    %v118 = vadd.f32 %v110, %v116
    %v119 = vadd.f32 %v111, %v116
    %v120 = vld [vmem:[%s5] sm:$0xff]
    %v121 = vld [vmem:[%s5 + $0x8] sm:$0xff]
    %v122 = vld [vmem:[%s5 + $0x10] sm:$0xff]
    %v123 = vld [vmem:[%s5 + $0x18] sm:$0xff]
    %v124 = vld [vmem:[%s6] sm:$0x1]
    %v126 = vlaneseq
    %v127 = vshrl.u32 %v126, 7
    %v128 = vsub.s32 0, %v127
    %v129 = vrot.slane %v124, %v128
    %v132 = vsel %vm75, %v118, 0
    %v135 = vsel %vm75, %v119, 0
    %137 = vmatprep.subr.mxu0 0.0
    %138 = vmatpush1.msra.mxu0 %v120
    %139 = vmatprep.subr.mxu0 0.0
    %140 = vmatpush1.msra.mxu0 %v121
    %141 = vmatprep.subr.mxu0 0.0
    %142 = vmatpush1.msra.mxu0 %v122
    %143 = vmatprep.subr.mxu0 0.0
    %144 = vmatpush1.msra.mxu0 %v123
    %145 = vmatprep.subr.mxu0 0.0
    %146 = vmatpush1.msra.mxu0 0.0
    %147 = vmatprep.subr.mxu0 0.0
    %148 = vmatpush1.msra.mxu0 0.0
    %149 = vmatprep.subr.mxu0 0.0
    %150 = vmatpush1.msra.mxu0 0.0
    %151 = vmatprep.subr.mxu0 0.0
    %152 = vmatpush1.msra.mxu0 0.0
    %153 = vmatprep.subr.mxu0 0.0
    %154 = vmatpush1.msra.mxu0 0.0
    %155 = vmatprep.subr.mxu0 0.0
    %156 = vmatpush1.msra.mxu0 0.0
    %157 = vmatprep.subr.mxu0 0.0
    %158 = vmatpush1.msra.mxu0 0.0
    %159 = vmatprep.subr.mxu0 0.0
    %160 = vmatpush1.msra.mxu0 0.0
    %161 = vmatprep.subr.mxu0 0.0
    %162 = vmatpush1.msra.mxu0 0.0
    %163 = vmatprep.subr.mxu0 0.0
    %164 = vmatpush1.msra.mxu0 0.0
    %165 = vmatprep.subr.mxu0 0.0
    %166 = vmatpush1.msra.mxu0 0.0
    %167 = vmatprep.subr.mxu0 0.0
    %168 = vmatpush1.msra.mxu0 0.0
    %169 = vmatprep.subr.mxu0 0.0
    %170 = vmatpush1.msra.mxu0 0.0
    %171 = vmatprep.subr.mxu0 0.0
    %172 = vmatpush1.msra.mxu0 0.0
    %173 = vmatprep.subr.mxu0 0.0
    %174 = vmatpush1.msra.mxu0 0.0
    %175 = vmatprep.subr.mxu0 0.0
    %176 = vmatpush1.msra.mxu0 0.0
    %177 = vmatprep.subr.mxu0 0.0
    %178 = vmatpush1.msra.mxu0 0.0
    %179 = vmatprep.subr.mxu0 0.0
    %180 = vmatpush1.msra.mxu0 0.0
    %181 = vmatprep.subr.mxu0 0.0
    %182 = vmatpush1.msra.mxu0 0.0
    %183 = vmatprep.subr.mxu0 0.0
    %184 = vmatpush1.msra.mxu0 0.0
    %185 = vmatprep.subr.mxu0 0.0
    %186 = vmatpush1.msra.mxu0 0.0
    %187 = vmatprep.subr.mxu0 0.0
    %188 = vmatpush1.msra.mxu0 0.0
    %189 = vmatprep.subr.mxu0 0.0
    %190 = vmatpush1.msra.mxu0 0.0
    %191 = vmatprep.subr.mxu0 0.0
    %192 = vmatpush1.msra.mxu0 0.0
    %193 = vmatprep.subr.mxu0 0.0
    %194 = vmatpush1.msra.mxu0 0.0
    %195 = vmatprep.subr.mxu0 0.0
    %196 = vmatpush1.msra.mxu0 0.0
    %197 = vmatprep.subr.mxu0 0.0
    %198 = vmatpush1.msra.mxu0 0.0
    %199 = vmatprep.subr.mxu0 0.0
    %200 = vmatpush1.msra.mxu0 0.0
    %201 = vmatprep.mubr.f32.mxu0 0.0
    %202 = vmatmul.mubr.f32.gmra.mrb[0].mxu0 %v132
    %v203 = vpop.f32.mrb[0].mxu0
    %v204 = vadd.f32 %v129, %v203
    %v205 = vpop.f32.mrb[0].mxu0
    %206 = vmatprep.mubr.f32.mxu0 0.0
    %207 = vmatmul.mubr.f32.gmra.mrb[0].mxu0 %v135
    %v208 = vpop.f32.mrb[0].mxu0
    %v209 = vadd.f32 %v129, %v208
    %v210 = vpop.f32.mrb[0].mxu0
    %211 = vdwg.mxu0
    %v212 = vmul.f32 %v204, 0.25
    %v213 = vmul.f32 %v209, 0.25
    %v214 = vld [vmem:[%s7] sm:$0xff]
    %v215 = vld [vmem:[%s7 + $0x8] sm:$0xff]
    %v216 = vld [vmem:[%s7 + $0x10] sm:$0xff]
    %v217 = vld [vmem:[%s7 + $0x18] sm:$0xff]
    %v218 = vld [vmem:[%s8] sm:$0x1]
    %v220 = vlaneseq
    %v221 = vshrl.u32 %v220, 7
    %v222 = vsub.s32 0, %v221
    %v223 = vrot.slane %v218, %v222
    %225 = vmatprep.subr.mxu0 0.0
    %226 = vmatpush1.msra.mxu0 %v214
    %227 = vmatprep.subr.mxu0 0.0
    %228 = vmatpush1.msra.mxu0 %v215
    %229 = vmatprep.subr.mxu0 0.0
    %230 = vmatpush1.msra.mxu0 %v216
    %231 = vmatprep.subr.mxu0 0.0
    %232 = vmatpush1.msra.mxu0 %v217
    %233 = vmatprep.subr.mxu0 0.0
    %234 = vmatpush1.msra.mxu0 0.0
    %235 = vmatprep.subr.mxu0 0.0
    %236 = vmatpush1.msra.mxu0 0.0
    %237 = vmatprep.subr.mxu0 0.0
    %238 = vmatpush1.msra.mxu0 0.0
    %239 = vmatprep.subr.mxu0 0.0
    %240 = vmatpush1.msra.mxu0 0.0
    %241 = vmatprep.subr.mxu0 0.0
    %242 = vmatpush1.msra.mxu0 0.0
    %243 = vmatprep.subr.mxu0 0.0
    %244 = vmatpush1.msra.mxu0 0.0
    %245 = vmatprep.subr.mxu0 0.0
    %246 = vmatpush1.msra.mxu0 0.0
    %247 = vmatprep.subr.mxu0 0.0
    %248 = vmatpush1.msra.mxu0 0.0
    %249 = vmatprep.subr.mxu0 0.0
    %250 = vmatpush1.msra.mxu0 0.0
    %251 = vmatprep.subr.mxu0 0.0
    %252 = vmatpush1.msra.mxu0 0.0
    %253 = vmatprep.subr.mxu0 0.0
    %254 = vmatpush1.msra.mxu0 0.0
    %255 = vmatprep.subr.mxu0 0.0
    %256 = vmatpush1.msra.mxu0 0.0
    %257 = vmatprep.subr.mxu0 0.0
    %258 = vmatpush1.msra.mxu0 0.0
    %259 = vmatprep.subr.mxu0 0.0
    %260 = vmatpush1.msra.mxu0 0.0
    %261 = vmatprep.subr.mxu0 0.0
    %262 = vmatpush1.msra.mxu0 0.0
    %263 = vmatprep.subr.mxu0 0.0
    %264 = vmatpush1.msra.mxu0 0.0
    %265 = vmatprep.subr.mxu0 0.0
    %266 = vmatpush1.msra.mxu0 0.0
    %267 = vmatprep.subr.mxu0 0.0
    %268 = vmatpush1.msra.mxu0 0.0
    %269 = vmatprep.subr.mxu0 0.0
    %270 = vmatpush1.msra.mxu0 0.0
    %271 = vmatprep.subr.mxu0 0.0
    %272 = vmatpush1.msra.mxu0 0.0
    %273 = vmatprep.subr.mxu0 0.0
    %274 = vmatpush1.msra.mxu0 0.0
    %275 = vmatprep.subr.mxu0 0.0
    %276 = vmatpush1.msra.mxu0 0.0
    %277 = vmatprep.subr.mxu0 0.0
    %278 = vmatpush1.msra.mxu0 0.0
    %279 = vmatprep.subr.mxu0 0.0
    %280 = vmatpush1.msra.mxu0 0.0
    %281 = vmatprep.subr.mxu0 0.0
    %282 = vmatpush1.msra.mxu0 0.0
    %283 = vmatprep.subr.mxu0 0.0
    %284 = vmatpush1.msra.mxu0 0.0
    %285 = vmatprep.subr.mxu0 0.0
    %286 = vmatpush1.msra.mxu0 0.0
    %287 = vmatprep.subr.mxu0 0.0
    %288 = vmatpush1.msra.mxu0 0.0
    %289 = vmatprep.mubr.f32.mxu0 0.0
    %290 = vmatmul.mubr.f32.gmra.mrb[0].mxu0 %v132
    %v291 = vpop.f32.mrb[0].mxu0
    %v292 = vadd.f32 %v223, %v291
    %v293 = vpop.f32.mrb[0].mxu0
    %294 = vmatprep.mubr.f32.mxu0 0.0
    %295 = vmatmul.mubr.f32.gmra.mrb[0].mxu0 %v135
    %v296 = vpop.f32.mrb[0].mxu0
    %v297 = vadd.f32 %v223, %v296
    %v298 = vpop.f32.mrb[0].mxu0
    %299 = vdwg.mxu0
    %vm300 = vcmask 64512
    %v302 = vsel %vm300, %v212, 0
    %v305 = vsel %vm300, %v213, 0
    %v308 = vsel %vm300, %v292, 0
    %v311 = vsel %vm300, %v297, 0
    %313 = vmatprep.subr.mxu0 0.0
    %314 = vmatpush1.xpose.msra.mxu0 %v308
    %315 = vmatprep.subr.mxu0 0.0
    %316 = vmatpush1.xpose.msra.mxu0 %v311
    %317 = vmatprep.subr.mxu0 0.0
    %318 = vmatpush1.xpose.msra.mxu0 0.0
    %319 = vmatprep.subr.mxu0 0.0
    %320 = vmatpush1.xpose.msra.mxu0 0.0
    %321 = vmatprep.subr.mxu0 0.0
    %322 = vmatpush1.xpose.msra.mxu0 0.0
    %323 = vmatprep.subr.mxu0 0.0
    %324 = vmatpush1.xpose.msra.mxu0 0.0
    %325 = vmatprep.subr.mxu0 0.0
    %326 = vmatpush1.xpose.msra.mxu0 0.0
    %327 = vmatprep.subr.mxu0 0.0
    %328 = vmatpush1.xpose.msra.mxu0 0.0
    %329 = vmatprep.subr.mxu0 0.0
    %330 = vmatpush1.xpose.msra.mxu0 0.0
    %331 = vmatprep.subr.mxu0 0.0
    %332 = vmatpush1.xpose.msra.mxu0 0.0
    %333 = vmatprep.subr.mxu0 0.0
    %334 = vmatpush1.xpose.msra.mxu0 0.0
    %335 = vmatprep.subr.mxu0 0.0
    %336 = vmatpush1.xpose.msra.mxu0 0.0
    %337 = vmatprep.subr.mxu0 0.0
    %338 = vmatpush1.xpose.msra.mxu0 0.0
    %339 = vmatprep.subr.mxu0 0.0
    %340 = vmatpush1.xpose.msra.mxu0 0.0
    %341 = vmatprep.subr.mxu0 0.0
    %342 = vmatpush1.xpose.msra.mxu0 0.0
    %343 = vmatprep.subr.mxu0 0.0
    %344 = vmatpush1.xpose.msra.mxu0 0.0
    %345 = vmatprep.subr.mxu0 0.0
    %346 = vmatpush1.xpose.msra.mxu0 0.0
    %347 = vmatprep.subr.mxu0 0.0
    %348 = vmatpush1.xpose.msra.mxu0 0.0
    %349 = vmatprep.subr.mxu0 0.0
    %350 = vmatpush1.xpose.msra.mxu0 0.0
    %351 = vmatprep.subr.mxu0 0.0
    %352 = vmatpush1.xpose.msra.mxu0 0.0
    %353 = vmatprep.subr.mxu0 0.0
    %354 = vmatpush1.xpose.msra.mxu0 0.0
    %355 = vmatprep.subr.mxu0 0.0
    %356 = vmatpush1.xpose.msra.mxu0 0.0
    %357 = vmatprep.subr.mxu0 0.0
    %358 = vmatpush1.xpose.msra.mxu0 0.0
    %359 = vmatprep.subr.mxu0 0.0
    %360 = vmatpush1.xpose.msra.mxu0 0.0
    %361 = vmatprep.subr.mxu0 0.0
    %362 = vmatpush1.xpose.msra.mxu0 0.0
    %363 = vmatprep.subr.mxu0 0.0
    %364 = vmatpush1.xpose.msra.mxu0 0.0
    %365 = vmatprep.subr.mxu0 0.0
    %366 = vmatpush1.xpose.msra.mxu0 0.0
    %367 = vmatprep.subr.mxu0 0.0
    %368 = vmatpush1.xpose.msra.mxu0 0.0
    %369 = vmatprep.subr.mxu0 0.0
    %370 = vmatpush1.xpose.msra.mxu0 0.0
    %371 = vmatprep.subr.mxu0 0.0
    %372 = vmatpush1.xpose.msra.mxu0 0.0
    %373 = vmatprep.subr.mxu0 0.0
    %374 = vmatpush1.xpose.msra.mxu0 0.0
    %375 = vmatprep.subr.mxu0 0.0
    %376 = vmatpush1.xpose.msra.mxu0 0.0
    %377 = vmatprep.mubr.f32.mxu0 0.0
    %378 = vmatmul.mubr.f32.gmra.mrb[0].mxu0 %v302
    %v379 = vpop.f32.mrb[0].mxu0
    %v380 = vadd.f32 0.0, %v379
    %v381 = vpop.f32.mrb[0].mxu0
    %382 = vmatprep.mubr.f32.mxu0 0.0
    %383 = vmatmul.mubr.f32.gmra.mrb[0].mxu0 %v305
    %v384 = vpop.f32.mrb[0].mxu0
    %v385 = vadd.f32 0.0, %v384
    %v386 = vpop.f32.mrb[0].mxu0
    %387 = vdwg.mxu0
    %vm388 = vcmask 72704
    %389 = vst.msk [vmem:[#allocation2] sm:$0xff] %vm388, %v380
    %vm390 = vcmask 65536
    %391 = vst.msk [vmem:[#allocation2 + $0x8] sm:$0x1] %vm390, %v385
    %392 = vrot.lane.b32.xlu0 %v212, 120
    %v393 = vpop.permute.xlu0 %392
    %394 = vrot.lane.b32.xlu0 %v213, 120
    %v395 = vpop.permute.xlu0 %394
    %396 = vrot.lane.b32.xlu0 %v292, 120
    %v397 = vpop.permute.xlu0 %396
    %398 = vrot.lane.b32.xlu0 %v297, 120
    %v399 = vpop.permute.xlu0 %398
    %v400 = vsel %vm300, %v393, 0
    %v402 = vsel %vm300, %v395, 0
    %v404 = vsel %vm300, %v397, 0
    %v406 = vsel %vm300, %v399, 0
    %408 = vmatprep.subr.mxu0 0.0
    %409 = vmatpush1.xpose.msra.mxu0 %v404
    %410 = vmatprep.subr.mxu0 0.0
    %411 = vmatpush1.xpose.msra.mxu0 %v406
    %412 = vmatprep.subr.mxu0 0.0
    %413 = vmatpush1.xpose.msra.mxu0 0.0
    %414 = vmatprep.subr.mxu0 0.0
    %415 = vmatpush1.xpose.msra.mxu0 0.0
    %416 = vmatprep.subr.mxu0 0.0
    %417 = vmatpush1.xpose.msra.mxu0 0.0
    %418 = vmatprep.subr.mxu0 0.0
    %419 = vmatpush1.xpose.msra.mxu0 0.0
    %420 = vmatprep.subr.mxu0 0.0
    %421 = vmatpush1.xpose.msra.mxu0 0.0
    %422 = vmatprep.subr.mxu0 0.0
    %423 = vmatpush1.xpose.msra.mxu0 0.0
    %424 = vmatprep.subr.mxu0 0.0
    %425 = vmatpush1.xpose.msra.mxu0 0.0
    %426 = vmatprep.subr.mxu0 0.0
    %427 = vmatpush1.xpose.msra.mxu0 0.0
    %428 = vmatprep.subr.mxu0 0.0
    %429 = vmatpush1.xpose.msra.mxu0 0.0
    %430 = vmatprep.subr.mxu0 0.0
    %431 = vmatpush1.xpose.msra.mxu0 0.0
    %432 = vmatprep.subr.mxu0 0.0
    %433 = vmatpush1.xpose.msra.mxu0 0.0
    %434 = vmatprep.subr.mxu0 0.0
    %435 = vmatpush1.xpose.msra.mxu0 0.0
    %436 = vmatprep.subr.mxu0 0.0
    %437 = vmatpush1.xpose.msra.mxu0 0.0
    %438 = vmatprep.subr.mxu0 0.0
    %439 = vmatpush1.xpose.msra.mxu0 0.0
    %440 = vmatprep.subr.mxu0 0.0
    %441 = vmatpush1.xpose.msra.mxu0 0.0
    %442 = vmatprep.subr.mxu0 0.0
    %443 = vmatpush1.xpose.msra.mxu0 0.0
    %444 = vmatprep.subr.mxu0 0.0
    %445 = vmatpush1.xpose.msra.mxu0 0.0
    %446 = vmatprep.subr.mxu0 0.0
    %447 = vmatpush1.xpose.msra.mxu0 0.0
    %448 = vmatprep.subr.mxu0 0.0
    %449 = vmatpush1.xpose.msra.mxu0 0.0
    %450 = vmatprep.subr.mxu0 0.0
    %451 = vmatpush1.xpose.msra.mxu0 0.0
    %452 = vmatprep.subr.mxu0 0.0
    %453 = vmatpush1.xpose.msra.mxu0 0.0
    %454 = vmatprep.subr.mxu0 0.0
    %455 = vmatpush1.xpose.msra.mxu0 0.0
    %456 = vmatprep.subr.mxu0 0.0
    %457 = vmatpush1.xpose.msra.mxu0 0.0
    %458 = vmatprep.subr.mxu0 0.0
    %459 = vmatpush1.xpose.msra.mxu0 0.0
    %460 = vmatprep.subr.mxu0 0.0
    %461 = vmatpush1.xpose.msra.mxu0 0.0
    %462 = vmatprep.subr.mxu0 0.0
    %463 = vmatpush1.xpose.msra.mxu0 0.0
    %464 = vmatprep.subr.mxu0 0.0
    %465 = vmatpush1.xpose.msra.mxu0 0.0
    %466 = vmatprep.subr.mxu0 0.0
    %467 = vmatpush1.xpose.msra.mxu0 0.0
    %468 = vmatprep.subr.mxu0 0.0
    %469 = vmatpush1.xpose.msra.mxu0 0.0
    %470 = vmatprep.subr.mxu0 0.0
    %471 = vmatpush1.xpose.msra.mxu0 0.0
    %472 = vmatprep.mubr.f32.mxu0 0.0
    %473 = vmatmul.mubr.f32.gmra.mrb[0].mxu0 %v400
    %v474 = vpop.f32.mrb[0].mxu0
    %v475 = vadd.f32 0.0, %v474
    %v476 = vpop.f32.mrb[0].mxu0
    %477 = vmatprep.mubr.f32.mxu0 0.0
    %478 = vmatmul.mubr.f32.gmra.mrb[0].mxu0 %v402
    %v479 = vpop.f32.mrb[0].mxu0
    %v480 = vadd.f32 0.0, %v479
    %v481 = vpop.f32.mrb[0].mxu0
    %482 = vdwg.mxu0
    %s483 = scalar_lea.vmem [#allocation2], 16
    %484 = vst.msk [vmem:[%s483] sm:$0xff] %vm388, %v475
    %485 = vst.msk [vmem:[%s483 + $0x8] sm:$0x1] %vm390, %v480
    %486 = vrot.lane.b32.xlu0 %v212, 112
    %v487 = vpop.permute.xlu0 %486
    %488 = vrot.lane.b32.xlu0 %v213, 112
    %v489 = vpop.permute.xlu0 %488
    %490 = vrot.lane.b32.xlu0 %v292, 112
    %v491 = vpop.permute.xlu0 %490
    %492 = vrot.lane.b32.xlu0 %v297, 112
    %v493 = vpop.permute.xlu0 %492
    %v494 = vsel %vm300, %v487, 0
    %v496 = vsel %vm300, %v489, 0
    %v498 = vsel %vm300, %v491, 0
    %v500 = vsel %vm300, %v493, 0
    %502 = vmatprep.subr.mxu0 0.0
    %503 = vmatpush1.xpose.msra.mxu0 %v498
    %504 = vmatprep.subr.mxu0 0.0
    %505 = vmatpush1.xpose.msra.mxu0 %v500
    %506 = vmatprep.subr.mxu0 0.0
    %507 = vmatpush1.xpose.msra.mxu0 0.0
    %508 = vmatprep.subr.mxu0 0.0
    %509 = vmatpush1.xpose.msra.mxu0 0.0
    %510 = vmatprep.subr.mxu0 0.0
    %511 = vmatpush1.xpose.msra.mxu0 0.0
    %512 = vmatprep.subr.mxu0 0.0
    %513 = vmatpush1.xpose.msra.mxu0 0.0
    %514 = vmatprep.subr.mxu0 0.0
    %515 = vmatpush1.xpose.msra.mxu0 0.0
    %516 = vmatprep.subr.mxu0 0.0
    %517 = vmatpush1.xpose.msra.mxu0 0.0
    %518 = vmatprep.subr.mxu0 0.0
    %519 = vmatpush1.xpose.msra.mxu0 0.0
    %520 = vmatprep.subr.mxu0 0.0
    %521 = vmatpush1.xpose.msra.mxu0 0.0
    %522 = vmatprep.subr.mxu0 0.0
    %523 = vmatpush1.xpose.msra.mxu0 0.0
    %524 = vmatprep.subr.mxu0 0.0
    %525 = vmatpush1.xpose.msra.mxu0 0.0
    %526 = vmatprep.subr.mxu0 0.0
    %527 = vmatpush1.xpose.msra.mxu0 0.0
    %528 = vmatprep.subr.mxu0 0.0
    %529 = vmatpush1.xpose.msra.mxu0 0.0
    %530 = vmatprep.subr.mxu0 0.0
    %531 = vmatpush1.xpose.msra.mxu0 0.0
    %532 = vmatprep.subr.mxu0 0.0
    %533 = vmatpush1.xpose.msra.mxu0 0.0
    %534 = vmatprep.subr.mxu0 0.0
    %535 = vmatpush1.xpose.msra.mxu0 0.0
    %536 = vmatprep.subr.mxu0 0.0
    %537 = vmatpush1.xpose.msra.mxu0 0.0
    %538 = vmatprep.subr.mxu0 0.0
    %539 = vmatpush1.xpose.msra.mxu0 0.0
    %540 = vmatprep.subr.mxu0 0.0
    %541 = vmatpush1.xpose.msra.mxu0 0.0
    %542 = vmatprep.subr.mxu0 0.0
    %543 = vmatpush1.xpose.msra.mxu0 0.0
    %544 = vmatprep.subr.mxu0 0.0
    %545 = vmatpush1.xpose.msra.mxu0 0.0
    %546 = vmatprep.subr.mxu0 0.0
    %547 = vmatpush1.xpose.msra.mxu0 0.0
    %548 = vmatprep.subr.mxu0 0.0
    %549 = vmatpush1.xpose.msra.mxu0 0.0
    %550 = vmatprep.subr.mxu0 0.0
    %551 = vmatpush1.xpose.msra.mxu0 0.0
    %552 = vmatprep.subr.mxu0 0.0
    %553 = vmatpush1.xpose.msra.mxu0 0.0
    %554 = vmatprep.subr.mxu0 0.0
    %555 = vmatpush1.xpose.msra.mxu0 0.0
    %556 = vmatprep.subr.mxu0 0.0
    %557 = vmatpush1.xpose.msra.mxu0 0.0
    %558 = vmatprep.subr.mxu0 0.0
    %559 = vmatpush1.xpose.msra.mxu0 0.0
    %560 = vmatprep.subr.mxu0 0.0
    %561 = vmatpush1.xpose.msra.mxu0 0.0
    %562 = vmatprep.subr.mxu0 0.0
    %563 = vmatpush1.xpose.msra.mxu0 0.0
    %564 = vmatprep.subr.mxu0 0.0
    %565 = vmatpush1.xpose.msra.mxu0 0.0
    %566 = vmatprep.mubr.f32.mxu0 0.0
    %567 = vmatmul.mubr.f32.gmra.mrb[0].mxu0 %v494
    %v568 = vpop.f32.mrb[0].mxu0
    %v569 = vadd.f32 0.0, %v568
    %v570 = vpop.f32.mrb[0].mxu0
    %571 = vmatprep.mubr.f32.mxu0 0.0
    %572 = vmatmul.mubr.f32.gmra.mrb[0].mxu0 %v496
    %v573 = vpop.f32.mrb[0].mxu0
    %v574 = vadd.f32 0.0, %v573
    %v575 = vpop.f32.mrb[0].mxu0
    %576 = vdwg.mxu0
    %s577 = scalar_lea.vmem [#allocation2], 32
    %578 = vst.msk [vmem:[%s577] sm:$0xff] %vm388, %v569
    %579 = vst.msk [vmem:[%s577 + $0x8] sm:$0x1] %vm390, %v574
    %580 = vrot.lane.b32.xlu0 %v212, 104
    %v581 = vpop.permute.xlu0 %580
    %582 = vrot.lane.b32.xlu0 %v213, 104
    %v583 = vpop.permute.xlu0 %582
    %584 = vrot.lane.b32.xlu0 %v292, 104
    %v585 = vpop.permute.xlu0 %584
    %586 = vrot.lane.b32.xlu0 %v297, 104
    %v587 = vpop.permute.xlu0 %586
    %v588 = vsel %vm300, %v581, 0
    %v590 = vsel %vm300, %v583, 0
    %v592 = vsel %vm300, %v585, 0
    %v594 = vsel %vm300, %v587, 0
    %596 = vmatprep.subr.mxu0 0.0
    %597 = vmatpush1.xpose.msra.mxu0 %v592
    %598 = vmatprep.subr.mxu0 0.0
    %599 = vmatpush1.xpose.msra.mxu0 %v594
    %600 = vmatprep.subr.mxu0 0.0
    %601 = vmatpush1.xpose.msra.mxu0 0.0
    %602 = vmatprep.subr.mxu0 0.0
    %603 = vmatpush1.xpose.msra.mxu0 0.0
    %604 = vmatprep.subr.mxu0 0.0
    %605 = vmatpush1.xpose.msra.mxu0 0.0
    %606 = vmatprep.subr.mxu0 0.0
    %607 = vmatpush1.xpose.msra.mxu0 0.0
    %608 = vmatprep.subr.mxu0 0.0
    %609 = vmatpush1.xpose.msra.mxu0 0.0
    %610 = vmatprep.subr.mxu0 0.0
    %611 = vmatpush1.xpose.msra.mxu0 0.0
    %612 = vmatprep.subr.mxu0 0.0
    %613 = vmatpush1.xpose.msra.mxu0 0.0
    %614 = vmatprep.subr.mxu0 0.0
    %615 = vmatpush1.xpose.msra.mxu0 0.0
    %616 = vmatprep.subr.mxu0 0.0
    %617 = vmatpush1.xpose.msra.mxu0 0.0
    %618 = vmatprep.subr.mxu0 0.0
    %619 = vmatpush1.xpose.msra.mxu0 0.0
    %620 = vmatprep.subr.mxu0 0.0
    %621 = vmatpush1.xpose.msra.mxu0 0.0
    %622 = vmatprep.subr.mxu0 0.0
    %623 = vmatpush1.xpose.msra.mxu0 0.0
    %624 = vmatprep.subr.mxu0 0.0
    %625 = vmatpush1.xpose.msra.mxu0 0.0
    %626 = vmatprep.subr.mxu0 0.0
    %627 = vmatpush1.xpose.msra.mxu0 0.0
    %628 = vmatprep.subr.mxu0 0.0
    %629 = vmatpush1.xpose.msra.mxu0 0.0
    %630 = vmatprep.subr.mxu0 0.0
    %631 = vmatpush1.xpose.msra.mxu0 0.0
    %632 = vmatprep.subr.mxu0 0.0
    %633 = vmatpush1.xpose.msra.mxu0 0.0
    %634 = vmatprep.subr.mxu0 0.0
    %635 = vmatpush1.xpose.msra.mxu0 0.0
    %636 = vmatprep.subr.mxu0 0.0
    %637 = vmatpush1.xpose.msra.mxu0 0.0
    %638 = vmatprep.subr.mxu0 0.0
    %639 = vmatpush1.xpose.msra.mxu0 0.0
    %640 = vmatprep.subr.mxu0 0.0
    %641 = vmatpush1.xpose.msra.mxu0 0.0
    %642 = vmatprep.subr.mxu0 0.0
    %643 = vmatpush1.xpose.msra.mxu0 0.0
    %644 = vmatprep.subr.mxu0 0.0
    %645 = vmatpush1.xpose.msra.mxu0 0.0
    %646 = vmatprep.subr.mxu0 0.0
    %647 = vmatpush1.xpose.msra.mxu0 0.0
    %648 = vmatprep.subr.mxu0 0.0
    %649 = vmatpush1.xpose.msra.mxu0 0.0
    %650 = vmatprep.subr.mxu0 0.0
    %651 = vmatpush1.xpose.msra.mxu0 0.0
    %652 = vmatprep.subr.mxu0 0.0
    %653 = vmatpush1.xpose.msra.mxu0 0.0
    %654 = vmatprep.subr.mxu0 0.0
    %655 = vmatpush1.xpose.msra.mxu0 0.0
    %656 = vmatprep.subr.mxu0 0.0
    %657 = vmatpush1.xpose.msra.mxu0 0.0
    %658 = vmatprep.subr.mxu0 0.0
    %659 = vmatpush1.xpose.msra.mxu0 0.0
    %660 = vmatprep.mubr.f32.mxu0 0.0
    %661 = vmatmul.mubr.f32.gmra.mrb[0].mxu0 %v588
    %v662 = vpop.f32.mrb[0].mxu0
    %v663 = vadd.f32 0.0, %v662
    %v664 = vpop.f32.mrb[0].mxu0
    %665 = vmatprep.mubr.f32.mxu0 0.0
    %666 = vmatmul.mubr.f32.gmra.mrb[0].mxu0 %v590
    %v667 = vpop.f32.mrb[0].mxu0
    %v668 = vadd.f32 0.0, %v667
    %v669 = vpop.f32.mrb[0].mxu0
    %670 = vdwg.mxu0
    %s671 = scalar_lea.vmem [#allocation2], 48
    %672 = vst.msk [vmem:[%s671] sm:$0xff] %vm388, %v663
    %673 = vst.msk [vmem:[%s671 + $0x8] sm:$0x1] %vm390, %v668
    %v674 = vlaneseq
    %v675 = vshrl.u32 %v674, 7
    %v676 = vlaneseq
    %v677 = vand.u32 %v676, 127
    %v678 = vld [vmem:[#allocation2 + $0x1] sm:$0xff]
    %v679 = vld [vmem:[#allocation2] sm:$0x1]
    %v680 = vld [vmem:[#allocation2 + $0x1] sm:$0x1]
    %vm681 = vcmp.eq.s32.totalorder %v677, 0
    %683 = vrot.lane.b32.xlu0 %v680, 127
    %v684 = vpop.permute.xlu0 %683
    %s685 = vtos %v684
    %v686 = vstv %s685
    %689 = vrot.lane.b32.xlu0 %v678, 127
    %v690 = vpop.permute.xlu0 %689
    %v692 = vsel %vm681, %v686, %v690
    %vm693 = vcmp.eq.s32.totalorder %v675, 0
    %s695 = vtos %v679
    %v696 = vstv %s695
    %v698 = vsel %vm693, %v696, %v692
    %699 = vst.msk [vmem:[#allocation3] sm:$0xff] %vm300, %v698
    %v700 = vld [vmem:[%s1] sm:$0x1]
    %v701 = vld [vmem:[%s1 + $0x1] sm:$0x1]
    %v704 = vlaneseq
    %v705 = vshrl.u32 %v704, 7
    %v706 = vsub.s32 0, %v705
    %v707 = vrot.slane %v700, %v706
    %v708 = vlaneseq
    %v709 = vshrl.u32 %v708, 7
    %v710 = vsub.s32 0, %v709
    %v711 = vrot.slane %v701, %v710
    %v714 = vadd.f32 %v698, %v707
    %v715 = vadd.f32 %v698, %v711
    %v716 = vld [vmem:[%s483 + $0x1] sm:$0xff]
    %v717 = vld [vmem:[%s483] sm:$0x1]
    %v718 = vld [vmem:[%s483 + $0x1] sm:$0x1]
    %720 = vrot.lane.b32.xlu0 %v718, 127
    %v721 = vpop.permute.xlu0 %720
    %s722 = vtos %v721
    %v723 = vstv %s722
    %726 = vrot.lane.b32.xlu0 %v716, 127
    %v727 = vpop.permute.xlu0 %726
    %v729 = vsel %vm681, %v723, %v727
    %s731 = vtos %v717
    %v732 = vstv %s731
    %v734 = vsel %vm693, %v732, %v729
    %s735 = scalar_lea.vmem [#allocation3], 8
    %736 = vst.msk [vmem:[%s735] sm:$0xff] %vm300, %v734
    %v737 = vld [vmem:[%s1] sm:$0x1]
    %v738 = vld [vmem:[%s1 + $0x1] sm:$0x1]
    %v741 = vlaneseq
    %v742 = vshrl.u32 %v741, 7
    %v743 = vsub.s32 0, %v742
    %v744 = vrot.slane %v737, %v743
    %v745 = vlaneseq
    %v746 = vshrl.u32 %v745, 7
    %v747 = vsub.s32 0, %v746
    %v748 = vrot.slane %v738, %v747
    %v751 = vadd.f32 %v734, %v744
    %v752 = vadd.f32 %v734, %v748
    %v753 = vld [vmem:[%s577 + $0x1] sm:$0xff]
    %v754 = vld [vmem:[%s577] sm:$0x1]
    %v755 = vld [vmem:[%s577 + $0x1] sm:$0x1]
    %757 = vrot.lane.b32.xlu0 %v755, 127
    %v758 = vpop.permute.xlu0 %757
    %s759 = vtos %v758
    %v760 = vstv %s759
    %763 = vrot.lane.b32.xlu0 %v753, 127
    %v764 = vpop.permute.xlu0 %763
    %v766 = vsel %vm681, %v760, %v764
    %s768 = vtos %v754
    %v769 = vstv %s768
    %v771 = vsel %vm693, %v769, %v766
    %s772 = scalar_lea.vmem [#allocation3], 16
    %773 = vst.msk [vmem:[%s772] sm:$0xff] %vm300, %v771
    %v774 = vld [vmem:[%s1] sm:$0x1]
    %v775 = vld [vmem:[%s1 + $0x1] sm:$0x1]
    %v778 = vlaneseq
    %v779 = vshrl.u32 %v778, 7
    %v780 = vsub.s32 0, %v779
    %v781 = vrot.slane %v774, %v780
    %v782 = vlaneseq
    %v783 = vshrl.u32 %v782, 7
    %v784 = vsub.s32 0, %v783
    %v785 = vrot.slane %v775, %v784
    %v788 = vadd.f32 %v771, %v781
    %v789 = vadd.f32 %v771, %v785
    %v790 = vld [vmem:[%s671 + $0x1] sm:$0xff]
    %v791 = vld [vmem:[%s671] sm:$0x1]
    %v792 = vld [vmem:[%s671 + $0x1] sm:$0x1]
    %794 = vrot.lane.b32.xlu0 %v792, 127
    %v795 = vpop.permute.xlu0 %794
    %s796 = vtos %v795
    %v797 = vstv %s796
    %800 = vrot.lane.b32.xlu0 %v790, 127
    %v801 = vpop.permute.xlu0 %800
    %v803 = vsel %vm681, %v797, %v801
    %s805 = vtos %v791
    %v806 = vstv %s805
    %v808 = vsel %vm693, %v806, %v803
    %s809 = scalar_lea.vmem [#allocation3], 24
    %810 = vst.msk [vmem:[%s809] sm:$0xff] %vm300, %v808
    %v811 = vld [vmem:[%s1] sm:$0x1]
    %v812 = vld [vmem:[%s1 + $0x1] sm:$0x1]
    %v815 = vlaneseq
    %v816 = vshrl.u32 %v815, 7
    %v817 = vsub.s32 0, %v816
    %v818 = vrot.slane %v811, %v817
    %v819 = vlaneseq
    %v820 = vshrl.u32 %v819, 7
    %v821 = vsub.s32 0, %v820
    %v822 = vrot.slane %v812, %v821
    %v825 = vadd.f32 %v808, %v818
    %v826 = vadd.f32 %v808, %v822
    %v827 = vld [vmem:[%s0] sm:$0xff]
    %v828 = vld [vmem:[%s0 + $0x8] sm:$0xff]
    %v829 = vld [vmem:[%s9] sm:$0xff]
    %v830 = vld [vmem:[%s9 + $0x8] sm:$0xff]
    %v831 = vld [vmem:[%s9 + $0x10] sm:$0xff]
    %v832 = vld [vmem:[%s9 + $0x18] sm:$0xff]
    %v833 = vld [vmem:[%s10] sm:$0x1]
    %v835 = vlaneseq
    %v836 = vshrl.u32 %v835, 7
    %v837 = vsub.s32 0, %v836
    %v838 = vrot.slane %v833, %v837
    %v841 = vsel %vm75, %v827, 0
    %v844 = vsel %vm75, %v828, 0
    %846 = vmatprep.subr.mxu0 0.0
    %847 = vmatpush1.msra.mxu0 %v829
    %848 = vmatprep.subr.mxu0 0.0
    %849 = vmatpush1.msra.mxu0 %v830
    %850 = vmatprep.subr.mxu0 0.0
    %851 = vmatpush1.msra.mxu0 %v831
    %852 = vmatprep.subr.mxu0 0.0
    %853 = vmatpush1.msra.mxu0 %v832
    %854 = vmatprep.subr.mxu0 0.0
    %855 = vmatpush1.msra.mxu0 0.0
    %856 = vmatprep.subr.mxu0 0.0
    %857 = vmatpush1.msra.mxu0 0.0
    %858 = vmatprep.subr.mxu0 0.0
    %859 = vmatpush1.msra.mxu0 0.0
    %860 = vmatprep.subr.mxu0 0.0
    %861 = vmatpush1.msra.mxu0 0.0
    %862 = vmatprep.subr.mxu0 0.0
    %863 = vmatpush1.msra.mxu0 0.0
    %864 = vmatprep.subr.mxu0 0.0
    %865 = vmatpush1.msra.mxu0 0.0
    %866 = vmatprep.subr.mxu0 0.0
    %867 = vmatpush1.msra.mxu0 0.0
    %868 = vmatprep.subr.mxu0 0.0
    %869 = vmatpush1.msra.mxu0 0.0
    %870 = vmatprep.subr.mxu0 0.0
    %871 = vmatpush1.msra.mxu0 0.0
    %872 = vmatprep.subr.mxu0 0.0
    %873 = vmatpush1.msra.mxu0 0.0
    %874 = vmatprep.subr.mxu0 0.0
    %875 = vmatpush1.msra.mxu0 0.0
    %876 = vmatprep.subr.mxu0 0.0
    %877 = vmatpush1.msra.mxu0 0.0
    %878 = vmatprep.subr.mxu0 0.0
    %879 = vmatpush1.msra.mxu0 0.0
    %880 = vmatprep.subr.mxu0 0.0
    %881 = vmatpush1.msra.mxu0 0.0
    %882 = vmatprep.subr.mxu0 0.0
    %883 = vmatpush1.msra.mxu0 0.0
    %884 = vmatprep.subr.mxu0 0.0
    %885 = vmatpush1.msra.mxu0 0.0
    %886 = vmatprep.subr.mxu0 0.0
    %887 = vmatpush1.msra.mxu0 0.0
    %888 = vmatprep.subr.mxu0 0.0
    %889 = vmatpush1.msra.mxu0 0.0
    %890 = vmatprep.subr.mxu0 0.0
    %891 = vmatpush1.msra.mxu0 0.0
    %892 = vmatprep.subr.mxu0 0.0
    %893 = vmatpush1.msra.mxu0 0.0
    %894 = vmatprep.subr.mxu0 0.0
    %895 = vmatpush1.msra.mxu0 0.0
    %896 = vmatprep.subr.mxu0 0.0
    %897 = vmatpush1.msra.mxu0 0.0
    %898 = vmatprep.subr.mxu0 0.0
    %899 = vmatpush1.msra.mxu0 0.0
    %900 = vmatprep.subr.mxu0 0.0
    %901 = vmatpush1.msra.mxu0 0.0
    %902 = vmatprep.subr.mxu0 0.0
    %903 = vmatpush1.msra.mxu0 0.0
    %904 = vmatprep.subr.mxu0 0.0
    %905 = vmatpush1.msra.mxu0 0.0
    %906 = vmatprep.subr.mxu0 0.0
    %907 = vmatpush1.msra.mxu0 0.0
    %908 = vmatprep.subr.mxu0 0.0
    %909 = vmatpush1.msra.mxu0 0.0
    %910 = vmatprep.mubr.f32.mxu0 0.0
    %911 = vmatmul.mubr.f32.gmra.mrb[0].mxu0 %v841
    %v912 = vpop.f32.mrb[0].mxu0
    %v913 = vadd.f32 %v838, %v912
    %v914 = vpop.f32.mrb[0].mxu0
    %915 = vmatprep.mubr.f32.mxu0 0.0
    %916 = vmatmul.mubr.f32.gmra.mrb[0].mxu0 %v844
    %v917 = vpop.f32.mrb[0].mxu0
    %v918 = vadd.f32 %v838, %v917
    %v919 = vpop.f32.mrb[0].mxu0
    %920 = vdwg.mxu0
    %v921 = vmul.f32 %v913, 0.25
    %v922 = vmul.f32 %v918, 0.25
    %924 = vrot.lane.b32.xlu0 %v913, 96
    %v925 = vpop.permute.xlu0 %924
    %v927 = vsel %vm300, %v921, 0
    %v929 = vsel %vm300, %v925, 0
    %931 = vmatprep.subr.mxu0 0.0
    %932 = vmatpush1.xpose.msra.mxu0 %v929
    %933 = vmatprep.subr.mxu0 0.0
    %934 = vmatpush1.xpose.msra.mxu0 0.0
    %935 = vmatprep.subr.mxu0 0.0
    %936 = vmatpush1.xpose.msra.mxu0 0.0
    %937 = vmatprep.subr.mxu0 0.0
    %938 = vmatpush1.xpose.msra.mxu0 0.0
    %939 = vmatprep.subr.mxu0 0.0
    %940 = vmatpush1.xpose.msra.mxu0 0.0
    %941 = vmatprep.subr.mxu0 0.0
    %942 = vmatpush1.xpose.msra.mxu0 0.0
    %943 = vmatprep.subr.mxu0 0.0
    %944 = vmatpush1.xpose.msra.mxu0 0.0
    %945 = vmatprep.subr.mxu0 0.0
    %946 = vmatpush1.xpose.msra.mxu0 0.0
    %947 = vmatprep.subr.mxu0 0.0
    %948 = vmatpush1.xpose.msra.mxu0 0.0
    %949 = vmatprep.subr.mxu0 0.0
    %950 = vmatpush1.xpose.msra.mxu0 0.0
    %951 = vmatprep.subr.mxu0 0.0
    %952 = vmatpush1.xpose.msra.mxu0 0.0
    %953 = vmatprep.subr.mxu0 0.0
    %954 = vmatpush1.xpose.msra.mxu0 0.0
    %955 = vmatprep.subr.mxu0 0.0
    %956 = vmatpush1.xpose.msra.mxu0 0.0
    %957 = vmatprep.subr.mxu0 0.0
    %958 = vmatpush1.xpose.msra.mxu0 0.0
    %959 = vmatprep.subr.mxu0 0.0
    %960 = vmatpush1.xpose.msra.mxu0 0.0
    %961 = vmatprep.subr.mxu0 0.0
    %962 = vmatpush1.xpose.msra.mxu0 0.0
    %963 = vmatprep.subr.mxu0 0.0
    %964 = vmatpush1.xpose.msra.mxu0 0.0
    %965 = vmatprep.subr.mxu0 0.0
    %966 = vmatpush1.xpose.msra.mxu0 0.0
    %967 = vmatprep.subr.mxu0 0.0
    %968 = vmatpush1.xpose.msra.mxu0 0.0
    %969 = vmatprep.subr.mxu0 0.0
    %970 = vmatpush1.xpose.msra.mxu0 0.0
    %971 = vmatprep.subr.mxu0 0.0
    %972 = vmatpush1.xpose.msra.mxu0 0.0
    %973 = vmatprep.subr.mxu0 0.0
    %974 = vmatpush1.xpose.msra.mxu0 0.0
    %975 = vmatprep.subr.mxu0 0.0
    %976 = vmatpush1.xpose.msra.mxu0 0.0
    %977 = vmatprep.subr.mxu0 0.0
    %978 = vmatpush1.xpose.msra.mxu0 0.0
    %979 = vmatprep.subr.mxu0 0.0
    %980 = vmatpush1.xpose.msra.mxu0 0.0
    %981 = vmatprep.subr.mxu0 0.0
    %982 = vmatpush1.xpose.msra.mxu0 0.0
    %983 = vmatprep.subr.mxu0 0.0
    %984 = vmatpush1.xpose.msra.mxu0 0.0
    %985 = vmatprep.subr.mxu0 0.0
    %986 = vmatpush1.xpose.msra.mxu0 0.0
    %987 = vmatprep.subr.mxu0 0.0
    %988 = vmatpush1.xpose.msra.mxu0 0.0
    %989 = vmatprep.subr.mxu0 0.0
    %990 = vmatpush1.xpose.msra.mxu0 0.0
    %991 = vmatprep.subr.mxu0 0.0
    %992 = vmatpush1.xpose.msra.mxu0 0.0
    %993 = vmatprep.subr.mxu0 0.0
    %994 = vmatpush1.xpose.msra.mxu0 0.0
    %995 = vmatprep.mubr.f32.mxu0 0.0
    %996 = vmatmul.mubr.f32.gmra.mrb[0].mxu0 %v927
    %v997 = vpop.f32.mrb[0].mxu0
    %v998 = vadd.f32 %v714, %v997
    %v999 = vpop.f32.mrb[0].mxu0
    %1000 = vdwg.mxu0
    %1002 = vrot.lane.b32.xlu0 %v918, 96
    %v1003 = vpop.permute.xlu0 %1002
    %v1005 = vsel %vm300, %v922, 0
    %v1007 = vsel %vm300, %v1003, 0
    %1009 = vmatprep.subr.mxu0 0.0
    %1010 = vmatpush1.xpose.msra.mxu0 %v1007
    %1011 = vmatprep.subr.mxu0 0.0
    %1012 = vmatpush1.xpose.msra.mxu0 0.0
    %1013 = vmatprep.subr.mxu0 0.0
    %1014 = vmatpush1.xpose.msra.mxu0 0.0
    %1015 = vmatprep.subr.mxu0 0.0
    %1016 = vmatpush1.xpose.msra.mxu0 0.0
    %1017 = vmatprep.subr.mxu0 0.0
    %1018 = vmatpush1.xpose.msra.mxu0 0.0
    %1019 = vmatprep.subr.mxu0 0.0
    %1020 = vmatpush1.xpose.msra.mxu0 0.0
    %1021 = vmatprep.subr.mxu0 0.0
    %1022 = vmatpush1.xpose.msra.mxu0 0.0
    %1023 = vmatprep.subr.mxu0 0.0
    %1024 = vmatpush1.xpose.msra.mxu0 0.0
    %1025 = vmatprep.subr.mxu0 0.0
    %1026 = vmatpush1.xpose.msra.mxu0 0.0
    %1027 = vmatprep.subr.mxu0 0.0
    %1028 = vmatpush1.xpose.msra.mxu0 0.0
    %1029 = vmatprep.subr.mxu0 0.0
    %1030 = vmatpush1.xpose.msra.mxu0 0.0
    %1031 = vmatprep.subr.mxu0 0.0
    %1032 = vmatpush1.xpose.msra.mxu0 0.0
    %1033 = vmatprep.subr.mxu0 0.0
    %1034 = vmatpush1.xpose.msra.mxu0 0.0
    %1035 = vmatprep.subr.mxu0 0.0
    %1036 = vmatpush1.xpose.msra.mxu0 0.0
    %1037 = vmatprep.subr.mxu0 0.0
    %1038 = vmatpush1.xpose.msra.mxu0 0.0
    %1039 = vmatprep.subr.mxu0 0.0
    %1040 = vmatpush1.xpose.msra.mxu0 0.0
    %1041 = vmatprep.subr.mxu0 0.0
    %1042 = vmatpush1.xpose.msra.mxu0 0.0
    %1043 = vmatprep.subr.mxu0 0.0
    %1044 = vmatpush1.xpose.msra.mxu0 0.0
    %1045 = vmatprep.subr.mxu0 0.0
    %1046 = vmatpush1.xpose.msra.mxu0 0.0
    %1047 = vmatprep.subr.mxu0 0.0
    %1048 = vmatpush1.xpose.msra.mxu0 0.0
    %1049 = vmatprep.subr.mxu0 0.0
    %1050 = vmatpush1.xpose.msra.mxu0 0.0
    %1051 = vmatprep.subr.mxu0 0.0
    %1052 = vmatpush1.xpose.msra.mxu0 0.0
    %1053 = vmatprep.subr.mxu0 0.0
    %1054 = vmatpush1.xpose.msra.mxu0 0.0
    %1055 = vmatprep.subr.mxu0 0.0
    %1056 = vmatpush1.xpose.msra.mxu0 0.0
    %1057 = vmatprep.subr.mxu0 0.0
    %1058 = vmatpush1.xpose.msra.mxu0 0.0
    %1059 = vmatprep.subr.mxu0 0.0
    %1060 = vmatpush1.xpose.msra.mxu0 0.0
    %1061 = vmatprep.subr.mxu0 0.0
    %1062 = vmatpush1.xpose.msra.mxu0 0.0
    %1063 = vmatprep.subr.mxu0 0.0
    %1064 = vmatpush1.xpose.msra.mxu0 0.0
    %1065 = vmatprep.subr.mxu0 0.0
    %1066 = vmatpush1.xpose.msra.mxu0 0.0
    %1067 = vmatprep.subr.mxu0 0.0
    %1068 = vmatpush1.xpose.msra.mxu0 0.0
    %1069 = vmatprep.subr.mxu0 0.0
    %1070 = vmatpush1.xpose.msra.mxu0 0.0
    %1071 = vmatprep.subr.mxu0 0.0
    %1072 = vmatpush1.xpose.msra.mxu0 0.0
    %1073 = vmatprep.mubr.f32.mxu0 0.0
    %1074 = vmatmul.mubr.f32.gmra.mrb[0].mxu0 %v1005
    %v1075 = vpop.f32.mrb[0].mxu0
    %v1076 = vadd.f32 %v715, %v1075
    %v1077 = vpop.f32.mrb[0].mxu0
    %1078 = vdwg.mxu0
    %v1079 = vsel %vm300, %v998, -inf
    %1080 = vmax.xlane.f32.xlu0 %v1079
    %v1081 = vpop.xlane.xlu0 %1080
    %v1082 = vsel %vm300, %v1076, -inf
    %1083 = vmax.xlane.f32.xlu0 %v1082
    %v1084 = vpop.xlane.xlu0 %1083
    %v1085 = vsub.f32 %v998, %v1081
    %v1086 = vsub.f32 %v1076, %v1084
    %v1087 = vmul.f32 %v1085, 1.442695
    %v1088 = vpow.pop %v1087
    %v1089 = vmul.f32 %v1086, 1.442695
    %v1090 = vpow.pop %v1089
    %v1091 = vsel %vm300, %v1088, 0.0
    %1092 = vadd.xlane.f32.xlu0 %v1091
    %v1093 = vpop.xlane.xlu0 %1092
    %v1094 = vsel %vm300, %v1090, 0.0
    %1095 = vadd.xlane.f32.xlu0 %v1094
    %v1096 = vpop.xlane.xlu0 %1095
    %v1097 = vrcp.pop %v1093
    %v1098 = vrcp.pop %v1096
    %v1099 = vmul.f32 %v1088, %v1097
    %v1100 = vmul.f32 %v1090, %v1098
    %1101 = vrot.lane.b32.xlu0 %v913, 64
    %v1102 = vpop.permute.xlu0 %1101
    %v1105 = vsel %vm300, %v1099, 0
    %1107 = vmatprep.subr.mxu0 0.0
    %1108 = vmatpush1.msra.mxu0 %v1102
    %1109 = vmatprep.subr.mxu0 0.0
    %1110 = vmatpush1.msra.mxu0 0.0
    %1111 = vmatprep.subr.mxu0 0.0
    %1112 = vmatpush1.msra.mxu0 0.0
    %1113 = vmatprep.subr.mxu0 0.0
    %1114 = vmatpush1.msra.mxu0 0.0
    %1115 = vmatprep.subr.mxu0 0.0
    %1116 = vmatpush1.msra.mxu0 0.0
    %1117 = vmatprep.subr.mxu0 0.0
    %1118 = vmatpush1.msra.mxu0 0.0
    %1119 = vmatprep.subr.mxu0 0.0
    %1120 = vmatpush1.msra.mxu0 0.0
    %1121 = vmatprep.subr.mxu0 0.0
    %1122 = vmatpush1.msra.mxu0 0.0
    %1123 = vmatprep.subr.mxu0 0.0
    %1124 = vmatpush1.msra.mxu0 0.0
    %1125 = vmatprep.subr.mxu0 0.0
    %1126 = vmatpush1.msra.mxu0 0.0
    %1127 = vmatprep.subr.mxu0 0.0
    %1128 = vmatpush1.msra.mxu0 0.0
    %1129 = vmatprep.subr.mxu0 0.0
    %1130 = vmatpush1.msra.mxu0 0.0
    %1131 = vmatprep.subr.mxu0 0.0
    %1132 = vmatpush1.msra.mxu0 0.0
    %1133 = vmatprep.subr.mxu0 0.0
    %1134 = vmatpush1.msra.mxu0 0.0
    %1135 = vmatprep.subr.mxu0 0.0
    %1136 = vmatpush1.msra.mxu0 0.0
    %1137 = vmatprep.subr.mxu0 0.0
    %1138 = vmatpush1.msra.mxu0 0.0
    %1139 = vmatprep.subr.mxu0 0.0
    %1140 = vmatpush1.msra.mxu0 0.0
    %1141 = vmatprep.subr.mxu0 0.0
    %1142 = vmatpush1.msra.mxu0 0.0
    %1143 = vmatprep.subr.mxu0 0.0
    %1144 = vmatpush1.msra.mxu0 0.0
    %1145 = vmatprep.subr.mxu0 0.0
    %1146 = vmatpush1.msra.mxu0 0.0
    %1147 = vmatprep.subr.mxu0 0.0
    %1148 = vmatpush1.msra.mxu0 0.0
    %1149 = vmatprep.subr.mxu0 0.0
    %1150 = vmatpush1.msra.mxu0 0.0
    %1151 = vmatprep.subr.mxu0 0.0
    %1152 = vmatpush1.msra.mxu0 0.0
    %1153 = vmatprep.subr.mxu0 0.0
    %1154 = vmatpush1.msra.mxu0 0.0
    %1155 = vmatprep.subr.mxu0 0.0
    %1156 = vmatpush1.msra.mxu0 0.0
    %1157 = vmatprep.subr.mxu0 0.0
    %1158 = vmatpush1.msra.mxu0 0.0
    %1159 = vmatprep.subr.mxu0 0.0
    %1160 = vmatpush1.msra.mxu0 0.0
    %1161 = vmatprep.subr.mxu0 0.0
    %1162 = vmatpush1.msra.mxu0 0.0
    %1163 = vmatprep.subr.mxu0 0.0
    %1164 = vmatpush1.msra.mxu0 0.0
    %1165 = vmatprep.subr.mxu0 0.0
    %1166 = vmatpush1.msra.mxu0 0.0
    %1167 = vmatprep.subr.mxu0 0.0
    %1168 = vmatpush1.msra.mxu0 0.0
    %1169 = vmatprep.subr.mxu0 0.0
    %1170 = vmatpush1.msra.mxu0 0.0
    %1171 = vmatprep.mubr.f32.mxu0 0.0
    %1172 = vmatmul.mubr.f32.gmra.mrb[0].mxu0 %v1105
    %v1173 = vpop.f32.mrb[0].mxu0
    %v1174 = vadd.f32 0.0, %v1173
    %v1175 = vpop.f32.mrb[0].mxu0
    %1176 = vdwg.mxu0
    %1177 = vrot.lane.b32.xlu0 %v918, 64
    %v1178 = vpop.permute.xlu0 %1177
    %v1181 = vsel %vm300, %v1100, 0
    %1183 = vmatprep.subr.mxu0 0.0
    %1184 = vmatpush1.msra.mxu0 %v1178
    %1185 = vmatprep.subr.mxu0 0.0
    %1186 = vmatpush1.msra.mxu0 0.0
    %1187 = vmatprep.subr.mxu0 0.0
    %1188 = vmatpush1.msra.mxu0 0.0
    %1189 = vmatprep.subr.mxu0 0.0
    %1190 = vmatpush1.msra.mxu0 0.0
    %1191 = vmatprep.subr.mxu0 0.0
    %1192 = vmatpush1.msra.mxu0 0.0
    %1193 = vmatprep.subr.mxu0 0.0
    %1194 = vmatpush1.msra.mxu0 0.0
    %1195 = vmatprep.subr.mxu0 0.0
    %1196 = vmatpush1.msra.mxu0 0.0
    %1197 = vmatprep.subr.mxu0 0.0
    %1198 = vmatpush1.msra.mxu0 0.0
    %1199 = vmatprep.subr.mxu0 0.0
    %1200 = vmatpush1.msra.mxu0 0.0
    %1201 = vmatprep.subr.mxu0 0.0
    %1202 = vmatpush1.msra.mxu0 0.0
    %1203 = vmatprep.subr.mxu0 0.0
    %1204 = vmatpush1.msra.mxu0 0.0
    %1205 = vmatprep.subr.mxu0 0.0
    %1206 = vmatpush1.msra.mxu0 0.0
    %1207 = vmatprep.subr.mxu0 0.0
    %1208 = vmatpush1.msra.mxu0 0.0
    %1209 = vmatprep.subr.mxu0 0.0
    %1210 = vmatpush1.msra.mxu0 0.0
    %1211 = vmatprep.subr.mxu0 0.0
    %1212 = vmatpush1.msra.mxu0 0.0
    %1213 = vmatprep.subr.mxu0 0.0
    %1214 = vmatpush1.msra.mxu0 0.0
    %1215 = vmatprep.subr.mxu0 0.0
    %1216 = vmatpush1.msra.mxu0 0.0
    %1217 = vmatprep.subr.mxu0 0.0
    %1218 = vmatpush1.msra.mxu0 0.0
    %1219 = vmatprep.subr.mxu0 0.0
    %1220 = vmatpush1.msra.mxu0 0.0
    %1221 = vmatprep.subr.mxu0 0.0
    %1222 = vmatpush1.msra.mxu0 0.0
    %1223 = vmatprep.subr.mxu0 0.0
    %1224 = vmatpush1.msra.mxu0 0.0
    %1225 = vmatprep.subr.mxu0 0.0
    %1226 = vmatpush1.msra.mxu0 0.0
    %1227 = vmatprep.subr.mxu0 0.0
    %1228 = vmatpush1.msra.mxu0 0.0
    %1229 = vmatprep.subr.mxu0 0.0
    %1230 = vmatpush1.msra.mxu0 0.0
    %1231 = vmatprep.subr.mxu0 0.0
    %1232 = vmatpush1.msra.mxu0 0.0
    %1233 = vmatprep.subr.mxu0 0.0
    %1234 = vmatpush1.msra.mxu0 0.0
    %1235 = vmatprep.subr.mxu0 0.0
    %1236 = vmatpush1.msra.mxu0 0.0
    %1237 = vmatprep.subr.mxu0 0.0
    %1238 = vmatpush1.msra.mxu0 0.0
    %1239 = vmatprep.subr.mxu0 0.0
    %1240 = vmatpush1.msra.mxu0 0.0
    %1241 = vmatprep.subr.mxu0 0.0
    %1242 = vmatpush1.msra.mxu0 0.0
    %1243 = vmatprep.subr.mxu0 0.0
    %1244 = vmatpush1.msra.mxu0 0.0
    %1245 = vmatprep.subr.mxu0 0.0
    %1246 = vmatpush1.msra.mxu0 0.0
    %1247 = vmatprep.mubr.f32.mxu0 0.0
    %1248 = vmatmul.mubr.f32.gmra.mrb[0].mxu0 %v1181
    %v1249 = vpop.f32.mrb[0].mxu0
    %v1250 = vadd.f32 0.0, %v1249
    %v1251 = vpop.f32.mrb[0].mxu0
    %1252 = vdwg.mxu0
    %1253 = vrot.lane.b32.xlu0 %v921, 120
    %v1254 = vpop.permute.xlu0 %1253
    %1255 = vrot.lane.b32.xlu0 %v913, 88
    %v1256 = vpop.permute.xlu0 %1255
    %v1257 = vsel %vm300, %v1254, 0
    %v1259 = vsel %vm300, %v1256, 0
    %1261 = vmatprep.subr.mxu0 0.0
    %1262 = vmatpush1.xpose.msra.mxu0 %v1259
    %1263 = vmatprep.subr.mxu0 0.0
    %1264 = vmatpush1.xpose.msra.mxu0 0.0
    %1265 = vmatprep.subr.mxu0 0.0
    %1266 = vmatpush1.xpose.msra.mxu0 0.0
    %1267 = vmatprep.subr.mxu0 0.0
    %1268 = vmatpush1.xpose.msra.mxu0 0.0
    %1269 = vmatprep.subr.mxu0 0.0
    %1270 = vmatpush1.xpose.msra.mxu0 0.0
    %1271 = vmatprep.subr.mxu0 0.0
    %1272 = vmatpush1.xpose.msra.mxu0 0.0
    %1273 = vmatprep.subr.mxu0 0.0
    %1274 = vmatpush1.xpose.msra.mxu0 0.0
    %1275 = vmatprep.subr.mxu0 0.0
    %1276 = vmatpush1.xpose.msra.mxu0 0.0
    %1277 = vmatprep.subr.mxu0 0.0
    %1278 = vmatpush1.xpose.msra.mxu0 0.0
    %1279 = vmatprep.subr.mxu0 0.0
    %1280 = vmatpush1.xpose.msra.mxu0 0.0
    %1281 = vmatprep.subr.mxu0 0.0
    %1282 = vmatpush1.xpose.msra.mxu0 0.0
    %1283 = vmatprep.subr.mxu0 0.0
    %1284 = vmatpush1.xpose.msra.mxu0 0.0
    %1285 = vmatprep.subr.mxu0 0.0
    %1286 = vmatpush1.xpose.msra.mxu0 0.0
    %1287 = vmatprep.subr.mxu0 0.0
    %1288 = vmatpush1.xpose.msra.mxu0 0.0
    %1289 = vmatprep.subr.mxu0 0.0
    %1290 = vmatpush1.xpose.msra.mxu0 0.0
    %1291 = vmatprep.subr.mxu0 0.0
    %1292 = vmatpush1.xpose.msra.mxu0 0.0
    %1293 = vmatprep.subr.mxu0 0.0
    %1294 = vmatpush1.xpose.msra.mxu0 0.0
    %1295 = vmatprep.subr.mxu0 0.0
    %1296 = vmatpush1.xpose.msra.mxu0 0.0
    %1297 = vmatprep.subr.mxu0 0.0
    %1298 = vmatpush1.xpose.msra.mxu0 0.0
    %1299 = vmatprep.subr.mxu0 0.0
    %1300 = vmatpush1.xpose.msra.mxu0 0.0
    %1301 = vmatprep.subr.mxu0 0.0
    %1302 = vmatpush1.xpose.msra.mxu0 0.0
    %1303 = vmatprep.subr.mxu0 0.0
    %1304 = vmatpush1.xpose.msra.mxu0 0.0
    %1305 = vmatprep.subr.mxu0 0.0
    %1306 = vmatpush1.xpose.msra.mxu0 0.0
    %1307 = vmatprep.subr.mxu0 0.0
    %1308 = vmatpush1.xpose.msra.mxu0 0.0
    %1309 = vmatprep.subr.mxu0 0.0
    %1310 = vmatpush1.xpose.msra.mxu0 0.0
    %1311 = vmatprep.subr.mxu0 0.0
    %1312 = vmatpush1.xpose.msra.mxu0 0.0
    %1313 = vmatprep.subr.mxu0 0.0
    %1314 = vmatpush1.xpose.msra.mxu0 0.0
    %1315 = vmatprep.subr.mxu0 0.0
    %1316 = vmatpush1.xpose.msra.mxu0 0.0
    %1317 = vmatprep.subr.mxu0 0.0
    %1318 = vmatpush1.xpose.msra.mxu0 0.0
    %1319 = vmatprep.subr.mxu0 0.0
    %1320 = vmatpush1.xpose.msra.mxu0 0.0
    %1321 = vmatprep.subr.mxu0 0.0
    %1322 = vmatpush1.xpose.msra.mxu0 0.0
    %1323 = vmatprep.subr.mxu0 0.0
    %1324 = vmatpush1.xpose.msra.mxu0 0.0
    %1325 = vmatprep.mubr.f32.mxu0 0.0
    %1326 = vmatmul.mubr.f32.gmra.mrb[0].mxu0 %v1257
    %v1327 = vpop.f32.mrb[0].mxu0
    %v1328 = vadd.f32 %v751, %v1327
    %v1329 = vpop.f32.mrb[0].mxu0
    %1330 = vdwg.mxu0
    %1331 = vrot.lane.b32.xlu0 %v922, 120
    %v1332 = vpop.permute.xlu0 %1331
    %1333 = vrot.lane.b32.xlu0 %v918, 88
    %v1334 = vpop.permute.xlu0 %1333
    %v1335 = vsel %vm300, %v1332, 0
    %v1337 = vsel %vm300, %v1334, 0
    %1339 = vmatprep.subr.mxu0 0.0
    %1340 = vmatpush1.xpose.msra.mxu0 %v1337
    %1341 = vmatprep.subr.mxu0 0.0
    %1342 = vmatpush1.xpose.msra.mxu0 0.0
    %1343 = vmatprep.subr.mxu0 0.0
    %1344 = vmatpush1.xpose.msra.mxu0 0.0
    %1345 = vmatprep.subr.mxu0 0.0
    %1346 = vmatpush1.xpose.msra.mxu0 0.0
    %1347 = vmatprep.subr.mxu0 0.0
    %1348 = vmatpush1.xpose.msra.mxu0 0.0
    %1349 = vmatprep.subr.mxu0 0.0
    %1350 = vmatpush1.xpose.msra.mxu0 0.0
    %1351 = vmatprep.subr.mxu0 0.0
    %1352 = vmatpush1.xpose.msra.mxu0 0.0
    %1353 = vmatprep.subr.mxu0 0.0
    %1354 = vmatpush1.xpose.msra.mxu0 0.0
    %1355 = vmatprep.subr.mxu0 0.0
    %1356 = vmatpush1.xpose.msra.mxu0 0.0
    %1357 = vmatprep.subr.mxu0 0.0
    %1358 = vmatpush1.xpose.msra.mxu0 0.0
    %1359 = vmatprep.subr.mxu0 0.0
    %1360 = vmatpush1.xpose.msra.mxu0 0.0
    %1361 = vmatprep.subr.mxu0 0.0
    %1362 = vmatpush1.xpose.msra.mxu0 0.0
    %1363 = vmatprep.subr.mxu0 0.0
    %1364 = vmatpush1.xpose.msra.mxu0 0.0
    %1365 = vmatprep.subr.mxu0 0.0
    %1366 = vmatpush1.xpose.msra.mxu0 0.0
    %1367 = vmatprep.subr.mxu0 0.0
    %1368 = vmatpush1.xpose.msra.mxu0 0.0
    %1369 = vmatprep.subr.mxu0 0.0
    %1370 = vmatpush1.xpose.msra.mxu0 0.0
    %1371 = vmatprep.subr.mxu0 0.0
    %1372 = vmatpush1.xpose.msra.mxu0 0.0
    %1373 = vmatprep.subr.mxu0 0.0
    %1374 = vmatpush1.xpose.msra.mxu0 0.0
    %1375 = vmatprep.subr.mxu0 0.0
    %1376 = vmatpush1.xpose.msra.mxu0 0.0
    %1377 = vmatprep.subr.mxu0 0.0
    %1378 = vmatpush1.xpose.msra.mxu0 0.0
    %1379 = vmatprep.subr.mxu0 0.0
    %1380 = vmatpush1.xpose.msra.mxu0 0.0
    %1381 = vmatprep.subr.mxu0 0.0
    %1382 = vmatpush1.xpose.msra.mxu0 0.0
    %1383 = vmatprep.subr.mxu0 0.0
    %1384 = vmatpush1.xpose.msra.mxu0 0.0
    %1385 = vmatprep.subr.mxu0 0.0
    %1386 = vmatpush1.xpose.msra.mxu0 0.0
    %1387 = vmatprep.subr.mxu0 0.0
    %1388 = vmatpush1.xpose.msra.mxu0 0.0
    %1389 = vmatprep.subr.mxu0 0.0
    %1390 = vmatpush1.xpose.msra.mxu0 0.0
    %1391 = vmatprep.subr.mxu0 0.0
    %1392 = vmatpush1.xpose.msra.mxu0 0.0
    %1393 = vmatprep.subr.mxu0 0.0
    %1394 = vmatpush1.xpose.msra.mxu0 0.0
    %1395 = vmatprep.subr.mxu0 0.0
    %1396 = vmatpush1.xpose.msra.mxu0 0.0
    %1397 = vmatprep.subr.mxu0 0.0
    %1398 = vmatpush1.xpose.msra.mxu0 0.0
    %1399 = vmatprep.subr.mxu0 0.0
    %1400 = vmatpush1.xpose.msra.mxu0 0.0
    %1401 = vmatprep.subr.mxu0 0.0
    %1402 = vmatpush1.xpose.msra.mxu0 0.0
    %1403 = vmatprep.mubr.f32.mxu0 0.0
    %1404 = vmatmul.mubr.f32.gmra.mrb[0].mxu0 %v1335
    %v1405 = vpop.f32.mrb[0].mxu0
    %v1406 = vadd.f32 %v752, %v1405
    %v1407 = vpop.f32.mrb[0].mxu0
    %1408 = vdwg.mxu0
    %v1409 = vsel %vm300, %v1328, -inf
    %1410 = vmax.xlane.f32.xlu0 %v1409
    %v1411 = vpop.xlane.xlu0 %1410
    %v1412 = vsel %vm300, %v1406, -inf
    %1413 = vmax.xlane.f32.xlu0 %v1412
    %v1414 = vpop.xlane.xlu0 %1413
    %v1415 = vsub.f32 %v1328, %v1411
    %v1416 = vsub.f32 %v1406, %v1414
    %v1417 = vmul.f32 %v1415, 1.442695
    %v1418 = vpow.pop %v1417
    %v1419 = vmul.f32 %v1416, 1.442695
    %v1420 = vpow.pop %v1419
    %v1421 = vsel %vm300, %v1418, 0.0
    %1422 = vadd.xlane.f32.xlu0 %v1421
    %v1423 = vpop.xlane.xlu0 %1422
    %v1424 = vsel %vm300, %v1420, 0.0
    %1425 = vadd.xlane.f32.xlu0 %v1424
    %v1426 = vpop.xlane.xlu0 %1425
    %v1427 = vrcp.pop %v1423
    %v1428 = vrcp.pop %v1426
    %v1429 = vmul.f32 %v1418, %v1427
    %v1430 = vmul.f32 %v1420, %v1428
    %1431 = vrot.lane.b32.xlu0 %v913, 56
    %v1432 = vpop.permute.xlu0 %1431
    %v1435 = vsel %vm300, %v1429, 0
    %1437 = vmatprep.subr.mxu0 0.0
    %1438 = vmatpush1.msra.mxu0 %v1432
    %1439 = vmatprep.subr.mxu0 0.0
    %1440 = vmatpush1.msra.mxu0 0.0
    %1441 = vmatprep.subr.mxu0 0.0
    %1442 = vmatpush1.msra.mxu0 0.0
    %1443 = vmatprep.subr.mxu0 0.0
    %1444 = vmatpush1.msra.mxu0 0.0
    %1445 = vmatprep.subr.mxu0 0.0
    %1446 = vmatpush1.msra.mxu0 0.0
    %1447 = vmatprep.subr.mxu0 0.0
    %1448 = vmatpush1.msra.mxu0 0.0
    %1449 = vmatprep.subr.mxu0 0.0
    %1450 = vmatpush1.msra.mxu0 0.0
    %1451 = vmatprep.subr.mxu0 0.0
    %1452 = vmatpush1.msra.mxu0 0.0
    %1453 = vmatprep.subr.mxu0 0.0
    %1454 = vmatpush1.msra.mxu0 0.0
    %1455 = vmatprep.subr.mxu0 0.0
    %1456 = vmatpush1.msra.mxu0 0.0
    %1457 = vmatprep.subr.mxu0 0.0
    %1458 = vmatpush1.msra.mxu0 0.0
    %1459 = vmatprep.subr.mxu0 0.0
    %1460 = vmatpush1.msra.mxu0 0.0
    %1461 = vmatprep.subr.mxu0 0.0
    %1462 = vmatpush1.msra.mxu0 0.0
    %1463 = vmatprep.subr.mxu0 0.0
    %1464 = vmatpush1.msra.mxu0 0.0
    %1465 = vmatprep.subr.mxu0 0.0
    %1466 = vmatpush1.msra.mxu0 0.0
    %1467 = vmatprep.subr.mxu0 0.0
    %1468 = vmatpush1.msra.mxu0 0.0
    %1469 = vmatprep.subr.mxu0 0.0
    %1470 = vmatpush1.msra.mxu0 0.0
    %1471 = vmatprep.subr.mxu0 0.0
    %1472 = vmatpush1.msra.mxu0 0.0
    %1473 = vmatprep.subr.mxu0 0.0
    %1474 = vmatpush1.msra.mxu0 0.0
    %1475 = vmatprep.subr.mxu0 0.0
    %1476 = vmatpush1.msra.mxu0 0.0
    %1477 = vmatprep.subr.mxu0 0.0
    %1478 = vmatpush1.msra.mxu0 0.0
    %1479 = vmatprep.subr.mxu0 0.0
    %1480 = vmatpush1.msra.mxu0 0.0
    %1481 = vmatprep.subr.mxu0 0.0
    %1482 = vmatpush1.msra.mxu0 0.0
    %1483 = vmatprep.subr.mxu0 0.0
    %1484 = vmatpush1.msra.mxu0 0.0
    %1485 = vmatprep.subr.mxu0 0.0
    %1486 = vmatpush1.msra.mxu0 0.0
    %1487 = vmatprep.subr.mxu0 0.0
    %1488 = vmatpush1.msra.mxu0 0.0
    %1489 = vmatprep.subr.mxu0 0.0
    %1490 = vmatpush1.msra.mxu0 0.0
    %1491 = vmatprep.subr.mxu0 0.0
    %1492 = vmatpush1.msra.mxu0 0.0
    %1493 = vmatprep.subr.mxu0 0.0
    %1494 = vmatpush1.msra.mxu0 0.0
    %1495 = vmatprep.subr.mxu0 0.0
    %1496 = vmatpush1.msra.mxu0 0.0
    %1497 = vmatprep.subr.mxu0 0.0
    %1498 = vmatpush1.msra.mxu0 0.0
    %1499 = vmatprep.subr.mxu0 0.0
    %1500 = vmatpush1.msra.mxu0 0.0
    %1501 = vmatprep.mubr.f32.mxu0 0.0
    %1502 = vmatmul.mubr.f32.gmra.mrb[0].mxu0 %v1435
    %v1503 = vpop.f32.mrb[0].mxu0
    %v1504 = vadd.f32 0.0, %v1503
    %v1505 = vpop.f32.mrb[0].mxu0
    %1506 = vdwg.mxu0
    %1507 = vrot.lane.b32.xlu0 %v918, 56
    %v1508 = vpop.permute.xlu0 %1507
    %v1511 = vsel %vm300, %v1430, 0
    %1513 = vmatprep.subr.mxu0 0.0
    %1514 = vmatpush1.msra.mxu0 %v1508
    %1515 = vmatprep.subr.mxu0 0.0
    %1516 = vmatpush1.msra.mxu0 0.0
    %1517 = vmatprep.subr.mxu0 0.0
    %1518 = vmatpush1.msra.mxu0 0.0
    %1519 = vmatprep.subr.mxu0 0.0
    %1520 = vmatpush1.msra.mxu0 0.0
    %1521 = vmatprep.subr.mxu0 0.0
    %1522 = vmatpush1.msra.mxu0 0.0
    %1523 = vmatprep.subr.mxu0 0.0
    %1524 = vmatpush1.msra.mxu0 0.0
    %1525 = vmatprep.subr.mxu0 0.0
    %1526 = vmatpush1.msra.mxu0 0.0
    %1527 = vmatprep.subr.mxu0 0.0
    %1528 = vmatpush1.msra.mxu0 0.0
    %1529 = vmatprep.subr.mxu0 0.0
    %1530 = vmatpush1.msra.mxu0 0.0
    %1531 = vmatprep.subr.mxu0 0.0
    %1532 = vmatpush1.msra.mxu0 0.0
    %1533 = vmatprep.subr.mxu0 0.0
    %1534 = vmatpush1.msra.mxu0 0.0
    %1535 = vmatprep.subr.mxu0 0.0
    %1536 = vmatpush1.msra.mxu0 0.0
    %1537 = vmatprep.subr.mxu0 0.0
    %1538 = vmatpush1.msra.mxu0 0.0
    %1539 = vmatprep.subr.mxu0 0.0
    %1540 = vmatpush1.msra.mxu0 0.0
    %1541 = vmatprep.subr.mxu0 0.0
    %1542 = vmatpush1.msra.mxu0 0.0
    %1543 = vmatprep.subr.mxu0 0.0
    %1544 = vmatpush1.msra.mxu0 0.0
    %1545 = vmatprep.subr.mxu0 0.0
    %1546 = vmatpush1.msra.mxu0 0.0
    %1547 = vmatprep.subr.mxu0 0.0
    %1548 = vmatpush1.msra.mxu0 0.0
    %1549 = vmatprep.subr.mxu0 0.0
    %1550 = vmatpush1.msra.mxu0 0.0
    %1551 = vmatprep.subr.mxu0 0.0
    %1552 = vmatpush1.msra.mxu0 0.0
    %1553 = vmatprep.subr.mxu0 0.0
    %1554 = vmatpush1.msra.mxu0 0.0
    %1555 = vmatprep.subr.mxu0 0.0
    %1556 = vmatpush1.msra.mxu0 0.0
    %1557 = vmatprep.subr.mxu0 0.0
    %1558 = vmatpush1.msra.mxu0 0.0
    %1559 = vmatprep.subr.mxu0 0.0
    %1560 = vmatpush1.msra.mxu0 0.0
    %1561 = vmatprep.subr.mxu0 0.0
    %1562 = vmatpush1.msra.mxu0 0.0
    %1563 = vmatprep.subr.mxu0 0.0
    %1564 = vmatpush1.msra.mxu0 0.0
    %1565 = vmatprep.subr.mxu0 0.0
    %1566 = vmatpush1.msra.mxu0 0.0
    %1567 = vmatprep.subr.mxu0 0.0
    %1568 = vmatpush1.msra.mxu0 0.0
    %1569 = vmatprep.subr.mxu0 0.0
    %1570 = vmatpush1.msra.mxu0 0.0
    %1571 = vmatprep.subr.mxu0 0.0
    %1572 = vmatpush1.msra.mxu0 0.0
    %1573 = vmatprep.subr.mxu0 0.0
    %1574 = vmatpush1.msra.mxu0 0.0
    %1575 = vmatprep.subr.mxu0 0.0
    %1576 = vmatpush1.msra.mxu0 0.0
    %1577 = vmatprep.mubr.f32.mxu0 0.0
    %1578 = vmatmul.mubr.f32.gmra.mrb[0].mxu0 %v1511
    %v1579 = vpop.f32.mrb[0].mxu0
    %v1580 = vadd.f32 0.0, %v1579
    %v1581 = vpop.f32.mrb[0].mxu0
    %1582 = vdwg.mxu0
    %1583 = vrot.lane.b32.xlu0 %v921, 112
    %v1584 = vpop.permute.xlu0 %1583
    %1585 = vrot.lane.b32.xlu0 %v913, 80
    %v1586 = vpop.permute.xlu0 %1585
    %v1587 = vsel %vm300, %v1584, 0
    %v1589 = vsel %vm300, %v1586, 0
    %1591 = vmatprep.subr.mxu0 0.0
    %1592 = vmatpush1.xpose.msra.mxu0 %v1589
    %1593 = vmatprep.subr.mxu0 0.0
    %1594 = vmatpush1.xpose.msra.mxu0 0.0
    %1595 = vmatprep.subr.mxu0 0.0
    %1596 = vmatpush1.xpose.msra.mxu0 0.0
    %1597 = vmatprep.subr.mxu0 0.0
    %1598 = vmatpush1.xpose.msra.mxu0 0.0
    %1599 = vmatprep.subr.mxu0 0.0
    %1600 = vmatpush1.xpose.msra.mxu0 0.0
    %1601 = vmatprep.subr.mxu0 0.0
    %1602 = vmatpush1.xpose.msra.mxu0 0.0
    %1603 = vmatprep.subr.mxu0 0.0
    %1604 = vmatpush1.xpose.msra.mxu0 0.0
    %1605 = vmatprep.subr.mxu0 0.0
    %1606 = vmatpush1.xpose.msra.mxu0 0.0
    %1607 = vmatprep.subr.mxu0 0.0
    %1608 = vmatpush1.xpose.msra.mxu0 0.0
    %1609 = vmatprep.subr.mxu0 0.0
    %1610 = vmatpush1.xpose.msra.mxu0 0.0
    %1611 = vmatprep.subr.mxu0 0.0
    %1612 = vmatpush1.xpose.msra.mxu0 0.0
    %1613 = vmatprep.subr.mxu0 0.0
    %1614 = vmatpush1.xpose.msra.mxu0 0.0
    %1615 = vmatprep.subr.mxu0 0.0
    %1616 = vmatpush1.xpose.msra.mxu0 0.0
    %1617 = vmatprep.subr.mxu0 0.0
    %1618 = vmatpush1.xpose.msra.mxu0 0.0
    %1619 = vmatprep.subr.mxu0 0.0
    %1620 = vmatpush1.xpose.msra.mxu0 0.0
    %1621 = vmatprep.subr.mxu0 0.0
    %1622 = vmatpush1.xpose.msra.mxu0 0.0
    %1623 = vmatprep.subr.mxu0 0.0
    %1624 = vmatpush1.xpose.msra.mxu0 0.0
    %1625 = vmatprep.subr.mxu0 0.0
    %1626 = vmatpush1.xpose.msra.mxu0 0.0
    %1627 = vmatprep.subr.mxu0 0.0
    %1628 = vmatpush1.xpose.msra.mxu0 0.0
    %1629 = vmatprep.subr.mxu0 0.0
    %1630 = vmatpush1.xpose.msra.mxu0 0.0
    %1631 = vmatprep.subr.mxu0 0.0
    %1632 = vmatpush1.xpose.msra.mxu0 0.0
    %1633 = vmatprep.subr.mxu0 0.0
    %1634 = vmatpush1.xpose.msra.mxu0 0.0
    %1635 = vmatprep.subr.mxu0 0.0
    %1636 = vmatpush1.xpose.msra.mxu0 0.0
    %1637 = vmatprep.subr.mxu0 0.0
    %1638 = vmatpush1.xpose.msra.mxu0 0.0
    %1639 = vmatprep.subr.mxu0 0.0
    %1640 = vmatpush1.xpose.msra.mxu0 0.0
    %1641 = vmatprep.subr.mxu0 0.0
    %1642 = vmatpush1.xpose.msra.mxu0 0.0
    %1643 = vmatprep.subr.mxu0 0.0
    %1644 = vmatpush1.xpose.msra.mxu0 0.0
    %1645 = vmatprep.subr.mxu0 0.0
    %1646 = vmatpush1.xpose.msra.mxu0 0.0
    %1647 = vmatprep.subr.mxu0 0.0
    %1648 = vmatpush1.xpose.msra.mxu0 0.0
    %1649 = vmatprep.subr.mxu0 0.0
    %1650 = vmatpush1.xpose.msra.mxu0 0.0
    %1651 = vmatprep.subr.mxu0 0.0
    %1652 = vmatpush1.xpose.msra.mxu0 0.0
    %1653 = vmatprep.subr.mxu0 0.0
    %1654 = vmatpush1.xpose.msra.mxu0 0.0
    %1655 = vmatprep.mubr.f32.mxu0 0.0
    %1656 = vmatmul.mubr.f32.gmra.mrb[0].mxu0 %v1587
    %v1657 = vpop.f32.mrb[0].mxu0
    %v1658 = vadd.f32 %v788, %v1657
    %v1659 = vpop.f32.mrb[0].mxu0
    %1660 = vdwg.mxu0
    %1661 = vrot.lane.b32.xlu0 %v922, 112
    %v1662 = vpop.permute.xlu0 %1661
    %1663 = vrot.lane.b32.xlu0 %v918, 80
    %v1664 = vpop.permute.xlu0 %1663
    %v1665 = vsel %vm300, %v1662, 0
    %v1667 = vsel %vm300, %v1664, 0
    %1669 = vmatprep.subr.mxu0 0.0
    %1670 = vmatpush1.xpose.msra.mxu0 %v1667
    %1671 = vmatprep.subr.mxu0 0.0
    %1672 = vmatpush1.xpose.msra.mxu0 0.0
    %1673 = vmatprep.subr.mxu0 0.0
    %1674 = vmatpush1.xpose.msra.mxu0 0.0
    %1675 = vmatprep.subr.mxu0 0.0
    %1676 = vmatpush1.xpose.msra.mxu0 0.0
    %1677 = vmatprep.subr.mxu0 0.0
    %1678 = vmatpush1.xpose.msra.mxu0 0.0
    %1679 = vmatprep.subr.mxu0 0.0
    %1680 = vmatpush1.xpose.msra.mxu0 0.0
    %1681 = vmatprep.subr.mxu0 0.0
    %1682 = vmatpush1.xpose.msra.mxu0 0.0
    %1683 = vmatprep.subr.mxu0 0.0
    %1684 = vmatpush1.xpose.msra.mxu0 0.0
    %1685 = vmatprep.subr.mxu0 0.0
    %1686 = vmatpush1.xpose.msra.mxu0 0.0
    %1687 = vmatprep.subr.mxu0 0.0
    %1688 = vmatpush1.xpose.msra.mxu0 0.0
    %1689 = vmatprep.subr.mxu0 0.0
    %1690 = vmatpush1.xpose.msra.mxu0 0.0
    %1691 = vmatprep.subr.mxu0 0.0
    %1692 = vmatpush1.xpose.msra.mxu0 0.0
    %1693 = vmatprep.subr.mxu0 0.0
    %1694 = vmatpush1.xpose.msra.mxu0 0.0
    %1695 = vmatprep.subr.mxu0 0.0
    %1696 = vmatpush1.xpose.msra.mxu0 0.0
    %1697 = vmatprep.subr.mxu0 0.0
    %1698 = vmatpush1.xpose.msra.mxu0 0.0
    %1699 = vmatprep.subr.mxu0 0.0
    %1700 = vmatpush1.xpose.msra.mxu0 0.0
    %1701 = vmatprep.subr.mxu0 0.0
    %1702 = vmatpush1.xpose.msra.mxu0 0.0
    %1703 = vmatprep.subr.mxu0 0.0
    %1704 = vmatpush1.xpose.msra.mxu0 0.0
    %1705 = vmatprep.subr.mxu0 0.0
    %1706 = vmatpush1.xpose.msra.mxu0 0.0
    %1707 = vmatprep.subr.mxu0 0.0
    %1708 = vmatpush1.xpose.msra.mxu0 0.0
    %1709 = vmatprep.subr.mxu0 0.0
    %1710 = vmatpush1.xpose.msra.mxu0 0.0
    %1711 = vmatprep.subr.mxu0 0.0
    %1712 = vmatpush1.xpose.msra.mxu0 0.0
    %1713 = vmatprep.subr.mxu0 0.0
    %1714 = vmatpush1.xpose.msra.mxu0 0.0
    %1715 = vmatprep.subr.mxu0 0.0
    %1716 = vmatpush1.xpose.msra.mxu0 0.0
    %1717 = vmatprep.subr.mxu0 0.0
    %1718 = vmatpush1.xpose.msra.mxu0 0.0
    %1719 = vmatprep.subr.mxu0 0.0
    %1720 = vmatpush1.xpose.msra.mxu0 0.0
    %1721 = vmatprep.subr.mxu0 0.0
    %1722 = vmatpush1.xpose.msra.mxu0 0.0
    %1723 = vmatprep.subr.mxu0 0.0
    %1724 = vmatpush1.xpose.msra.mxu0 0.0
    %1725 = vmatprep.subr.mxu0 0.0
    %1726 = vmatpush1.xpose.msra.mxu0 0.0
    %1727 = vmatprep.subr.mxu0 0.0
    %1728 = vmatpush1.xpose.msra.mxu0 0.0
    %1729 = vmatprep.subr.mxu0 0.0
    %1730 = vmatpush1.xpose.msra.mxu0 0.0
    %1731 = vmatprep.subr.mxu0 0.0
    %1732 = vmatpush1.xpose.msra.mxu0 0.0
    %1733 = vmatprep.mubr.f32.mxu0 0.0
    %1734 = vmatmul.mubr.f32.gmra.mrb[0].mxu0 %v1665
    %v1735 = vpop.f32.mrb[0].mxu0
    %v1736 = vadd.f32 %v789, %v1735
    %v1737 = vpop.f32.mrb[0].mxu0
    %1738 = vdwg.mxu0
    %v1739 = vsel %vm300, %v1658, -inf
    %1740 = vmax.xlane.f32.xlu0 %v1739
    %v1741 = vpop.xlane.xlu0 %1740
    %v1742 = vsel %vm300, %v1736, -inf
    %1743 = vmax.xlane.f32.xlu0 %v1742
    %v1744 = vpop.xlane.xlu0 %1743
    %v1745 = vsub.f32 %v1658, %v1741
    %v1746 = vsub.f32 %v1736, %v1744
    %v1747 = vmul.f32 %v1745, 1.442695
    %v1748 = vpow.pop %v1747
    %v1749 = vmul.f32 %v1746, 1.442695
    %v1750 = vpow.pop %v1749
    %v1751 = vsel %vm300, %v1748, 0.0
    %1752 = vadd.xlane.f32.xlu0 %v1751
    %v1753 = vpop.xlane.xlu0 %1752
    %v1754 = vsel %vm300, %v1750, 0.0
    %1755 = vadd.xlane.f32.xlu0 %v1754
    %v1756 = vpop.xlane.xlu0 %1755
    %v1757 = vrcp.pop %v1753
    %v1758 = vrcp.pop %v1756
    %v1759 = vmul.f32 %v1748, %v1757
    %v1760 = vmul.f32 %v1750, %v1758
    %1761 = vrot.lane.b32.xlu0 %v913, 48
    %v1762 = vpop.permute.xlu0 %1761
    %v1765 = vsel %vm300, %v1759, 0
    %1767 = vmatprep.subr.mxu0 0.0
    %1768 = vmatpush1.msra.mxu0 %v1762
    %1769 = vmatprep.subr.mxu0 0.0
    %1770 = vmatpush1.msra.mxu0 0.0
    %1771 = vmatprep.subr.mxu0 0.0
    %1772 = vmatpush1.msra.mxu0 0.0
    %1773 = vmatprep.subr.mxu0 0.0
    %1774 = vmatpush1.msra.mxu0 0.0
    %1775 = vmatprep.subr.mxu0 0.0
    %1776 = vmatpush1.msra.mxu0 0.0
    %1777 = vmatprep.subr.mxu0 0.0
    %1778 = vmatpush1.msra.mxu0 0.0
    %1779 = vmatprep.subr.mxu0 0.0
    %1780 = vmatpush1.msra.mxu0 0.0
    %1781 = vmatprep.subr.mxu0 0.0
    %1782 = vmatpush1.msra.mxu0 0.0
    %1783 = vmatprep.subr.mxu0 0.0
    %1784 = vmatpush1.msra.mxu0 0.0
    %1785 = vmatprep.subr.mxu0 0.0
    %1786 = vmatpush1.msra.mxu0 0.0
    %1787 = vmatprep.subr.mxu0 0.0
    %1788 = vmatpush1.msra.mxu0 0.0
    %1789 = vmatprep.subr.mxu0 0.0
    %1790 = vmatpush1.msra.mxu0 0.0
    %1791 = vmatprep.subr.mxu0 0.0
    %1792 = vmatpush1.msra.mxu0 0.0
    %1793 = vmatprep.subr.mxu0 0.0
    %1794 = vmatpush1.msra.mxu0 0.0
    %1795 = vmatprep.subr.mxu0 0.0
    %1796 = vmatpush1.msra.mxu0 0.0
    %1797 = vmatprep.subr.mxu0 0.0
    %1798 = vmatpush1.msra.mxu0 0.0
    %1799 = vmatprep.subr.mxu0 0.0
    %1800 = vmatpush1.msra.mxu0 0.0
    %1801 = vmatprep.subr.mxu0 0.0
    %1802 = vmatpush1.msra.mxu0 0.0
    %1803 = vmatprep.subr.mxu0 0.0
    %1804 = vmatpush1.msra.mxu0 0.0
    %1805 = vmatprep.subr.mxu0 0.0
    %1806 = vmatpush1.msra.mxu0 0.0
    %1807 = vmatprep.subr.mxu0 0.0
    %1808 = vmatpush1.msra.mxu0 0.0
    %1809 = vmatprep.subr.mxu0 0.0
    %1810 = vmatpush1.msra.mxu0 0.0
    %1811 = vmatprep.subr.mxu0 0.0
    %1812 = vmatpush1.msra.mxu0 0.0
    %1813 = vmatprep.subr.mxu0 0.0
    %1814 = vmatpush1.msra.mxu0 0.0
    %1815 = vmatprep.subr.mxu0 0.0
    %1816 = vmatpush1.msra.mxu0 0.0
    %1817 = vmatprep.subr.mxu0 0.0
    %1818 = vmatpush1.msra.mxu0 0.0
    %1819 = vmatprep.subr.mxu0 0.0
    %1820 = vmatpush1.msra.mxu0 0.0
    %1821 = vmatprep.subr.mxu0 0.0
    %1822 = vmatpush1.msra.mxu0 0.0
    %1823 = vmatprep.subr.mxu0 0.0
    %1824 = vmatpush1.msra.mxu0 0.0
    %1825 = vmatprep.subr.mxu0 0.0
    %1826 = vmatpush1.msra.mxu0 0.0
    %1827 = vmatprep.subr.mxu0 0.0
    %1828 = vmatpush1.msra.mxu0 0.0
    %1829 = vmatprep.subr.mxu0 0.0
    %1830 = vmatpush1.msra.mxu0 0.0
    %1831 = vmatprep.mubr.f32.mxu0 0.0
    %1832 = vmatmul.mubr.f32.gmra.mrb[0].mxu0 %v1765
    %v1833 = vpop.f32.mrb[0].mxu0
    %v1834 = vadd.f32 0.0, %v1833
    %v1835 = vpop.f32.mrb[0].mxu0
    %1836 = vdwg.mxu0
    %1837 = vrot.lane.b32.xlu0 %v918, 48
    %v1838 = vpop.permute.xlu0 %1837
    %v1841 = vsel %vm300, %v1760, 0
    %1843 = vmatprep.subr.mxu0 0.0
    %1844 = vmatpush1.msra.mxu0 %v1838
    %1845 = vmatprep.subr.mxu0 0.0
    %1846 = vmatpush1.msra.mxu0 0.0
    %1847 = vmatprep.subr.mxu0 0.0
    %1848 = vmatpush1.msra.mxu0 0.0
    %1849 = vmatprep.subr.mxu0 0.0
    %1850 = vmatpush1.msra.mxu0 0.0
    %1851 = vmatprep.subr.mxu0 0.0
    %1852 = vmatpush1.msra.mxu0 0.0
    %1853 = vmatprep.subr.mxu0 0.0
    %1854 = vmatpush1.msra.mxu0 0.0
    %1855 = vmatprep.subr.mxu0 0.0
    %1856 = vmatpush1.msra.mxu0 0.0
    %1857 = vmatprep.subr.mxu0 0.0
    %1858 = vmatpush1.msra.mxu0 0.0
    %1859 = vmatprep.subr.mxu0 0.0
    %1860 = vmatpush1.msra.mxu0 0.0
    %1861 = vmatprep.subr.mxu0 0.0
    %1862 = vmatpush1.msra.mxu0 0.0
    %1863 = vmatprep.subr.mxu0 0.0
    %1864 = vmatpush1.msra.mxu0 0.0
    %1865 = vmatprep.subr.mxu0 0.0
    %1866 = vmatpush1.msra.mxu0 0.0
    %1867 = vmatprep.subr.mxu0 0.0
    %1868 = vmatpush1.msra.mxu0 0.0
    %1869 = vmatprep.subr.mxu0 0.0
    %1870 = vmatpush1.msra.mxu0 0.0
    %1871 = vmatprep.subr.mxu0 0.0
    %1872 = vmatpush1.msra.mxu0 0.0
    %1873 = vmatprep.subr.mxu0 0.0
    %1874 = vmatpush1.msra.mxu0 0.0
    %1875 = vmatprep.subr.mxu0 0.0
    %1876 = vmatpush1.msra.mxu0 0.0
    %1877 = vmatprep.subr.mxu0 0.0
    %1878 = vmatpush1.msra.mxu0 0.0
    %1879 = vmatprep.subr.mxu0 0.0
    %1880 = vmatpush1.msra.mxu0 0.0
    %1881 = vmatprep.subr.mxu0 0.0
    %1882 = vmatpush1.msra.mxu0 0.0
    %1883 = vmatprep.subr.mxu0 0.0
    %1884 = vmatpush1.msra.mxu0 0.0
    %1885 = vmatprep.subr.mxu0 0.0
    %1886 = vmatpush1.msra.mxu0 0.0
    %1887 = vmatprep.subr.mxu0 0.0
    %1888 = vmatpush1.msra.mxu0 0.0
    %1889 = vmatprep.subr.mxu0 0.0
    %1890 = vmatpush1.msra.mxu0 0.0
    %1891 = vmatprep.subr.mxu0 0.0
    %1892 = vmatpush1.msra.mxu0 0.0
    %1893 = vmatprep.subr.mxu0 0.0
    %1894 = vmatpush1.msra.mxu0 0.0
    %1895 = vmatprep.subr.mxu0 0.0
    %1896 = vmatpush1.msra.mxu0 0.0
    %1897 = vmatprep.subr.mxu0 0.0
    %1898 = vmatpush1.msra.mxu0 0.0
    %1899 = vmatprep.subr.mxu0 0.0
    %1900 = vmatpush1.msra.mxu0 0.0
    %1901 = vmatprep.subr.mxu0 0.0
    %1902 = vmatpush1.msra.mxu0 0.0
    %1903 = vmatprep.subr.mxu0 0.0
    %1904 = vmatpush1.msra.mxu0 0.0
    %1905 = vmatprep.subr.mxu0 0.0
    %1906 = vmatpush1.msra.mxu0 0.0
    %1907 = vmatprep.mubr.f32.mxu0 0.0
    %1908 = vmatmul.mubr.f32.gmra.mrb[0].mxu0 %v1841
    %v1909 = vpop.f32.mrb[0].mxu0
    %v1910 = vadd.f32 0.0, %v1909
    %v1911 = vpop.f32.mrb[0].mxu0
    %1912 = vdwg.mxu0
    %1913 = vrot.lane.b32.xlu0 %v921, 104
    %v1914 = vpop.permute.xlu0 %1913
    %1915 = vrot.lane.b32.xlu0 %v913, 72
    %v1916 = vpop.permute.xlu0 %1915
    %v1917 = vsel %vm300, %v1914, 0
    %v1919 = vsel %vm300, %v1916, 0
    %1921 = vmatprep.subr.mxu0 0.0
    %1922 = vmatpush1.xpose.msra.mxu0 %v1919
    %1923 = vmatprep.subr.mxu0 0.0
    %1924 = vmatpush1.xpose.msra.mxu0 0.0
    %1925 = vmatprep.subr.mxu0 0.0
    %1926 = vmatpush1.xpose.msra.mxu0 0.0
    %1927 = vmatprep.subr.mxu0 0.0
    %1928 = vmatpush1.xpose.msra.mxu0 0.0
    %1929 = vmatprep.subr.mxu0 0.0
    %1930 = vmatpush1.xpose.msra.mxu0 0.0
    %1931 = vmatprep.subr.mxu0 0.0
    %1932 = vmatpush1.xpose.msra.mxu0 0.0
    %1933 = vmatprep.subr.mxu0 0.0
    %1934 = vmatpush1.xpose.msra.mxu0 0.0
    %1935 = vmatprep.subr.mxu0 0.0
    %1936 = vmatpush1.xpose.msra.mxu0 0.0
    %1937 = vmatprep.subr.mxu0 0.0
    %1938 = vmatpush1.xpose.msra.mxu0 0.0
    %1939 = vmatprep.subr.mxu0 0.0
    %1940 = vmatpush1.xpose.msra.mxu0 0.0
    %1941 = vmatprep.subr.mxu0 0.0
    %1942 = vmatpush1.xpose.msra.mxu0 0.0
    %1943 = vmatprep.subr.mxu0 0.0
    %1944 = vmatpush1.xpose.msra.mxu0 0.0
    %1945 = vmatprep.subr.mxu0 0.0
    %1946 = vmatpush1.xpose.msra.mxu0 0.0
    %1947 = vmatprep.subr.mxu0 0.0
    %1948 = vmatpush1.xpose.msra.mxu0 0.0
    %1949 = vmatprep.subr.mxu0 0.0
    %1950 = vmatpush1.xpose.msra.mxu0 0.0
    %1951 = vmatprep.subr.mxu0 0.0
    %1952 = vmatpush1.xpose.msra.mxu0 0.0
    %1953 = vmatprep.subr.mxu0 0.0
    %1954 = vmatpush1.xpose.msra.mxu0 0.0
    %1955 = vmatprep.subr.mxu0 0.0
    %1956 = vmatpush1.xpose.msra.mxu0 0.0
    %1957 = vmatprep.subr.mxu0 0.0
    %1958 = vmatpush1.xpose.msra.mxu0 0.0
    %1959 = vmatprep.subr.mxu0 0.0
    %1960 = vmatpush1.xpose.msra.mxu0 0.0
    %1961 = vmatprep.subr.mxu0 0.0
    %1962 = vmatpush1.xpose.msra.mxu0 0.0
    %1963 = vmatprep.subr.mxu0 0.0
    %1964 = vmatpush1.xpose.msra.mxu0 0.0
    %1965 = vmatprep.subr.mxu0 0.0
    %1966 = vmatpush1.xpose.msra.mxu0 0.0
    %1967 = vmatprep.subr.mxu0 0.0
    %1968 = vmatpush1.xpose.msra.mxu0 0.0
    %1969 = vmatprep.subr.mxu0 0.0
    %1970 = vmatpush1.xpose.msra.mxu0 0.0
    %1971 = vmatprep.subr.mxu0 0.0
    %1972 = vmatpush1.xpose.msra.mxu0 0.0
    %1973 = vmatprep.subr.mxu0 0.0
    %1974 = vmatpush1.xpose.msra.mxu0 0.0
    %1975 = vmatprep.subr.mxu0 0.0
    %1976 = vmatpush1.xpose.msra.mxu0 0.0
    %1977 = vmatprep.subr.mxu0 0.0
    %1978 = vmatpush1.xpose.msra.mxu0 0.0
    %1979 = vmatprep.subr.mxu0 0.0
    %1980 = vmatpush1.xpose.msra.mxu0 0.0
    %1981 = vmatprep.subr.mxu0 0.0
    %1982 = vmatpush1.xpose.msra.mxu0 0.0
    %1983 = vmatprep.subr.mxu0 0.0
    %1984 = vmatpush1.xpose.msra.mxu0 0.0
    %1985 = vmatprep.mubr.f32.mxu0 0.0
    %1986 = vmatmul.mubr.f32.gmra.mrb[0].mxu0 %v1917
    %v1987 = vpop.f32.mrb[0].mxu0
    %v1988 = vadd.f32 %v825, %v1987
    %v1989 = vpop.f32.mrb[0].mxu0
    %1990 = vdwg.mxu0
    %1991 = vrot.lane.b32.xlu0 %v922, 104
    %v1992 = vpop.permute.xlu0 %1991
    %1993 = vrot.lane.b32.xlu0 %v918, 72
    %v1994 = vpop.permute.xlu0 %1993
    %v1995 = vsel %vm300, %v1992, 0
    %v1997 = vsel %vm300, %v1994, 0
    %1999 = vmatprep.subr.mxu0 0.0
    %2000 = vmatpush1.xpose.msra.mxu0 %v1997
    %2001 = vmatprep.subr.mxu0 0.0
    %2002 = vmatpush1.xpose.msra.mxu0 0.0
    %2003 = vmatprep.subr.mxu0 0.0
    %2004 = vmatpush1.xpose.msra.mxu0 0.0
    %2005 = vmatprep.subr.mxu0 0.0
    %2006 = vmatpush1.xpose.msra.mxu0 0.0
    %2007 = vmatprep.subr.mxu0 0.0
    %2008 = vmatpush1.xpose.msra.mxu0 0.0
    %2009 = vmatprep.subr.mxu0 0.0
    %2010 = vmatpush1.xpose.msra.mxu0 0.0
    %2011 = vmatprep.subr.mxu0 0.0
    %2012 = vmatpush1.xpose.msra.mxu0 0.0
    %2013 = vmatprep.subr.mxu0 0.0
    %2014 = vmatpush1.xpose.msra.mxu0 0.0
    %2015 = vmatprep.subr.mxu0 0.0
    %2016 = vmatpush1.xpose.msra.mxu0 0.0
    %2017 = vmatprep.subr.mxu0 0.0
    %2018 = vmatpush1.xpose.msra.mxu0 0.0
    %2019 = vmatprep.subr.mxu0 0.0
    %2020 = vmatpush1.xpose.msra.mxu0 0.0
    %2021 = vmatprep.subr.mxu0 0.0
    %2022 = vmatpush1.xpose.msra.mxu0 0.0
    %2023 = vmatprep.subr.mxu0 0.0
    %2024 = vmatpush1.xpose.msra.mxu0 0.0
    %2025 = vmatprep.subr.mxu0 0.0
    %2026 = vmatpush1.xpose.msra.mxu0 0.0
    %2027 = vmatprep.subr.mxu0 0.0
    %2028 = vmatpush1.xpose.msra.mxu0 0.0
    %2029 = vmatprep.subr.mxu0 0.0
    %2030 = vmatpush1.xpose.msra.mxu0 0.0
    %2031 = vmatprep.subr.mxu0 0.0
    %2032 = vmatpush1.xpose.msra.mxu0 0.0
    %2033 = vmatprep.subr.mxu0 0.0
    %2034 = vmatpush1.xpose.msra.mxu0 0.0
    %2035 = vmatprep.subr.mxu0 0.0
    %2036 = vmatpush1.xpose.msra.mxu0 0.0
    %2037 = vmatprep.subr.mxu0 0.0
    %2038 = vmatpush1.xpose.msra.mxu0 0.0
    %2039 = vmatprep.subr.mxu0 0.0
    %2040 = vmatpush1.xpose.msra.mxu0 0.0
    %2041 = vmatprep.subr.mxu0 0.0
    %2042 = vmatpush1.xpose.msra.mxu0 0.0
    %2043 = vmatprep.subr.mxu0 0.0
    %2044 = vmatpush1.xpose.msra.mxu0 0.0
    %2045 = vmatprep.subr.mxu0 0.0
    %2046 = vmatpush1.xpose.msra.mxu0 0.0
    %2047 = vmatprep.subr.mxu0 0.0
    %2048 = vmatpush1.xpose.msra.mxu0 0.0
    %2049 = vmatprep.subr.mxu0 0.0
    %2050 = vmatpush1.xpose.msra.mxu0 0.0
    %2051 = vmatprep.subr.mxu0 0.0
    %2052 = vmatpush1.xpose.msra.mxu0 0.0
    %2053 = vmatprep.subr.mxu0 0.0
    %2054 = vmatpush1.xpose.msra.mxu0 0.0
    %2055 = vmatprep.subr.mxu0 0.0
    %2056 = vmatpush1.xpose.msra.mxu0 0.0
    %2057 = vmatprep.subr.mxu0 0.0
    %2058 = vmatpush1.xpose.msra.mxu0 0.0
    %2059 = vmatprep.subr.mxu0 0.0
    %2060 = vmatpush1.xpose.msra.mxu0 0.0
    %2061 = vmatprep.subr.mxu0 0.0
    %2062 = vmatpush1.xpose.msra.mxu0 0.0
    %2063 = vmatprep.mubr.f32.mxu0 0.0
    %2064 = vmatmul.mubr.f32.gmra.mrb[0].mxu0 %v1995
    %v2065 = vpop.f32.mrb[0].mxu0
    %v2066 = vadd.f32 %v826, %v2065
    %v2067 = vpop.f32.mrb[0].mxu0
    %2068 = vdwg.mxu0
    %v2069 = vsel %vm300, %v1988, -inf
    %2070 = vmax.xlane.f32.xlu0 %v2069
    %v2071 = vpop.xlane.xlu0 %2070
    %v2072 = vsel %vm300, %v2066, -inf
    %2073 = vmax.xlane.f32.xlu0 %v2072
    %v2074 = vpop.xlane.xlu0 %2073
    %v2075 = vsub.f32 %v1988, %v2071
    %v2076 = vsub.f32 %v2066, %v2074
    %v2077 = vmul.f32 %v2075, 1.442695
    %v2078 = vpow.pop %v2077
    %v2079 = vmul.f32 %v2076, 1.442695
    %v2080 = vpow.pop %v2079
    %v2081 = vsel %vm300, %v2078, 0.0
    %2082 = vadd.xlane.f32.xlu0 %v2081
    %v2083 = vpop.xlane.xlu0 %2082
    %v2084 = vsel %vm300, %v2080, 0.0
    %2085 = vadd.xlane.f32.xlu0 %v2084
    %v2086 = vpop.xlane.xlu0 %2085
    %v2087 = vrcp.pop %v2083
    %v2088 = vrcp.pop %v2086
    %v2089 = vmul.f32 %v2078, %v2087
    %v2090 = vmul.f32 %v2080, %v2088
    %2091 = vrot.lane.b32.xlu0 %v913, 40
    %v2092 = vpop.permute.xlu0 %2091
    %v2095 = vsel %vm300, %v2089, 0
    %2097 = vmatprep.subr.mxu0 0.0
    %2098 = vmatpush1.msra.mxu0 %v2092
    %2099 = vmatprep.subr.mxu0 0.0
    %2100 = vmatpush1.msra.mxu0 0.0
    %2101 = vmatprep.subr.mxu0 0.0
    %2102 = vmatpush1.msra.mxu0 0.0
    %2103 = vmatprep.subr.mxu0 0.0
    %2104 = vmatpush1.msra.mxu0 0.0
    %2105 = vmatprep.subr.mxu0 0.0
    %2106 = vmatpush1.msra.mxu0 0.0
    %2107 = vmatprep.subr.mxu0 0.0
    %2108 = vmatpush1.msra.mxu0 0.0
    %2109 = vmatprep.subr.mxu0 0.0
    %2110 = vmatpush1.msra.mxu0 0.0
    %2111 = vmatprep.subr.mxu0 0.0
    %2112 = vmatpush1.msra.mxu0 0.0
    %2113 = vmatprep.subr.mxu0 0.0
    %2114 = vmatpush1.msra.mxu0 0.0
    %2115 = vmatprep.subr.mxu0 0.0
    %2116 = vmatpush1.msra.mxu0 0.0
    %2117 = vmatprep.subr.mxu0 0.0
    %2118 = vmatpush1.msra.mxu0 0.0
    %2119 = vmatprep.subr.mxu0 0.0
    %2120 = vmatpush1.msra.mxu0 0.0
    %2121 = vmatprep.subr.mxu0 0.0
    %2122 = vmatpush1.msra.mxu0 0.0
    %2123 = vmatprep.subr.mxu0 0.0
    %2124 = vmatpush1.msra.mxu0 0.0
    %2125 = vmatprep.subr.mxu0 0.0
    %2126 = vmatpush1.msra.mxu0 0.0
    %2127 = vmatprep.subr.mxu0 0.0
    %2128 = vmatpush1.msra.mxu0 0.0
    %2129 = vmatprep.subr.mxu0 0.0
    %2130 = vmatpush1.msra.mxu0 0.0
    %2131 = vmatprep.subr.mxu0 0.0
    %2132 = vmatpush1.msra.mxu0 0.0
    %2133 = vmatprep.subr.mxu0 0.0
    %2134 = vmatpush1.msra.mxu0 0.0
    %2135 = vmatprep.subr.mxu0 0.0
    %2136 = vmatpush1.msra.mxu0 0.0
    %2137 = vmatprep.subr.mxu0 0.0
    %2138 = vmatpush1.msra.mxu0 0.0
    %2139 = vmatprep.subr.mxu0 0.0
    %2140 = vmatpush1.msra.mxu0 0.0
    %2141 = vmatprep.subr.mxu0 0.0
    %2142 = vmatpush1.msra.mxu0 0.0
    %2143 = vmatprep.subr.mxu0 0.0
    %2144 = vmatpush1.msra.mxu0 0.0
    %2145 = vmatprep.subr.mxu0 0.0
    %2146 = vmatpush1.msra.mxu0 0.0
    %2147 = vmatprep.subr.mxu0 0.0
    %2148 = vmatpush1.msra.mxu0 0.0
    %2149 = vmatprep.subr.mxu0 0.0
    %2150 = vmatpush1.msra.mxu0 0.0
    %2151 = vmatprep.subr.mxu0 0.0
    %2152 = vmatpush1.msra.mxu0 0.0
    %2153 = vmatprep.subr.mxu0 0.0
    %2154 = vmatpush1.msra.mxu0 0.0
    %2155 = vmatprep.subr.mxu0 0.0
    %2156 = vmatpush1.msra.mxu0 0.0
    %2157 = vmatprep.subr.mxu0 0.0
    %2158 = vmatpush1.msra.mxu0 0.0
    %2159 = vmatprep.subr.mxu0 0.0
    %2160 = vmatpush1.msra.mxu0 0.0
    %2161 = vmatprep.mubr.f32.mxu0 0.0
    %2162 = vmatmul.mubr.f32.gmra.mrb[0].mxu0 %v2095
    %v2163 = vpop.f32.mrb[0].mxu0
    %v2164 = vadd.f32 0.0, %v2163
    %v2165 = vpop.f32.mrb[0].mxu0
    %2166 = vdwg.mxu0
    %2167 = vrot.lane.b32.xlu0 %v918, 40
    %v2168 = vpop.permute.xlu0 %2167
    %v2171 = vsel %vm300, %v2090, 0
    %2173 = vmatprep.subr.mxu0 0.0
    %2174 = vmatpush1.msra.mxu0 %v2168
    %2175 = vmatprep.subr.mxu0 0.0
    %2176 = vmatpush1.msra.mxu0 0.0
    %2177 = vmatprep.subr.mxu0 0.0
    %2178 = vmatpush1.msra.mxu0 0.0
    %2179 = vmatprep.subr.mxu0 0.0
    %2180 = vmatpush1.msra.mxu0 0.0
    %2181 = vmatprep.subr.mxu0 0.0
    %2182 = vmatpush1.msra.mxu0 0.0
    %2183 = vmatprep.subr.mxu0 0.0
    %2184 = vmatpush1.msra.mxu0 0.0
    %2185 = vmatprep.subr.mxu0 0.0
    %2186 = vmatpush1.msra.mxu0 0.0
    %2187 = vmatprep.subr.mxu0 0.0
    %2188 = vmatpush1.msra.mxu0 0.0
    %2189 = vmatprep.subr.mxu0 0.0
    %2190 = vmatpush1.msra.mxu0 0.0
    %2191 = vmatprep.subr.mxu0 0.0
    %2192 = vmatpush1.msra.mxu0 0.0
    %2193 = vmatprep.subr.mxu0 0.0
    %2194 = vmatpush1.msra.mxu0 0.0
    %2195 = vmatprep.subr.mxu0 0.0
    %2196 = vmatpush1.msra.mxu0 0.0
    %2197 = vmatprep.subr.mxu0 0.0
    %2198 = vmatpush1.msra.mxu0 0.0
    %2199 = vmatprep.subr.mxu0 0.0
    %2200 = vmatpush1.msra.mxu0 0.0
    %2201 = vmatprep.subr.mxu0 0.0
    %2202 = vmatpush1.msra.mxu0 0.0
    %2203 = vmatprep.subr.mxu0 0.0
    %2204 = vmatpush1.msra.mxu0 0.0
    %2205 = vmatprep.subr.mxu0 0.0
    %2206 = vmatpush1.msra.mxu0 0.0
    %2207 = vmatprep.subr.mxu0 0.0
    %2208 = vmatpush1.msra.mxu0 0.0
    %2209 = vmatprep.subr.mxu0 0.0
    %2210 = vmatpush1.msra.mxu0 0.0
    %2211 = vmatprep.subr.mxu0 0.0
    %2212 = vmatpush1.msra.mxu0 0.0
    %2213 = vmatprep.subr.mxu0 0.0
    %2214 = vmatpush1.msra.mxu0 0.0
    %2215 = vmatprep.subr.mxu0 0.0
    %2216 = vmatpush1.msra.mxu0 0.0
    %2217 = vmatprep.subr.mxu0 0.0
    %2218 = vmatpush1.msra.mxu0 0.0
    %2219 = vmatprep.subr.mxu0 0.0
    %2220 = vmatpush1.msra.mxu0 0.0
    %2221 = vmatprep.subr.mxu0 0.0
    %2222 = vmatpush1.msra.mxu0 0.0
    %2223 = vmatprep.subr.mxu0 0.0
    %2224 = vmatpush1.msra.mxu0 0.0
    %2225 = vmatprep.subr.mxu0 0.0
    %2226 = vmatpush1.msra.mxu0 0.0
    %2227 = vmatprep.subr.mxu0 0.0
    %2228 = vmatpush1.msra.mxu0 0.0
    %2229 = vmatprep.subr.mxu0 0.0
    %2230 = vmatpush1.msra.mxu0 0.0
    %2231 = vmatprep.subr.mxu0 0.0
    %2232 = vmatpush1.msra.mxu0 0.0
    %2233 = vmatprep.subr.mxu0 0.0
    %2234 = vmatpush1.msra.mxu0 0.0
    %2235 = vmatprep.subr.mxu0 0.0
    %2236 = vmatpush1.msra.mxu0 0.0
    %2237 = vmatprep.mubr.f32.mxu0 0.0
    %2238 = vmatmul.mubr.f32.gmra.mrb[0].mxu0 %v2171
    %v2239 = vpop.f32.mrb[0].mxu0
    %v2240 = vadd.f32 0.0, %v2239
    %v2241 = vpop.f32.mrb[0].mxu0
    %2242 = vdwg.mxu0
    %2245 = vrot.lane.b32.xlu0 %v1504, 8
    %v2246 = vpop.permute.xlu0 %2245
    %2247 = vrot.lane.b32.xlu0 %v1580, 8
    %v2248 = vpop.permute.xlu0 %2247
    %2253 = vrot.lane.b32.xlu0 %v1834, 16
    %v2254 = vpop.permute.xlu0 %2253
    %2255 = vrot.lane.b32.xlu0 %v1910, 16
    %v2256 = vpop.permute.xlu0 %2255
    %2261 = vrot.lane.b32.xlu0 %v2164, 24
    %v2262 = vpop.permute.xlu0 %2261
    %2263 = vrot.lane.b32.xlu0 %v2240, 24
    %v2264 = vpop.permute.xlu0 %2263
    %v2267 = vsel %vm300, %v1174, %v2246
    %v2268 = vsel %vm300, %v1250, %v2248
    %vm2269 = vcmask 130048
    %v2270 = vsel %vm2269, %v2267, %v2254
    %v2271 = vsel %vm2269, %v2268, %v2256
    %vm2272 = vcmask 195584
    %v2273 = vsel %vm2272, %v2270, %v2262
    %v2274 = vsel %vm2272, %v2271, %v2264
    %v2275 = vld [vmem:[%s11] sm:$0xff]
    %v2276 = vld [vmem:[%s11 + $0x8] sm:$0xff]
    %v2277 = vld [vmem:[%s11 + $0x10] sm:$0xff]
    %v2278 = vld [vmem:[%s11 + $0x18] sm:$0xff]
    %v2279 = vld [vmem:[%s12] sm:$0x1]
    %v2281 = vlaneseq
    %v2282 = vshrl.u32 %v2281, 7
    %v2283 = vsub.s32 0, %v2282
    %v2284 = vrot.slane %v2279, %v2283
    %v2287 = vsel %vm75, %v2273, 0
    %v2290 = vsel %vm75, %v2274, 0
    %2292 = vmatprep.subr.mxu0 0.0
    %2293 = vmatpush1.msra.mxu0 %v2275
    %2294 = vmatprep.subr.mxu0 0.0
    %2295 = vmatpush1.msra.mxu0 %v2276
    %2296 = vmatprep.subr.mxu0 0.0
    %2297 = vmatpush1.msra.mxu0 %v2277
    %2298 = vmatprep.subr.mxu0 0.0
    %2299 = vmatpush1.msra.mxu0 %v2278
    %2300 = vmatprep.subr.mxu0 0.0
    %2301 = vmatpush1.msra.mxu0 0.0
    %2302 = vmatprep.subr.mxu0 0.0
    %2303 = vmatpush1.msra.mxu0 0.0
    %2304 = vmatprep.subr.mxu0 0.0
    %2305 = vmatpush1.msra.mxu0 0.0
    %2306 = vmatprep.subr.mxu0 0.0
    %2307 = vmatpush1.msra.mxu0 0.0
    %2308 = vmatprep.subr.mxu0 0.0
    %2309 = vmatpush1.msra.mxu0 0.0
    %2310 = vmatprep.subr.mxu0 0.0
    %2311 = vmatpush1.msra.mxu0 0.0
    %2312 = vmatprep.subr.mxu0 0.0
    %2313 = vmatpush1.msra.mxu0 0.0
    %2314 = vmatprep.subr.mxu0 0.0
    %2315 = vmatpush1.msra.mxu0 0.0
    %2316 = vmatprep.subr.mxu0 0.0
    %2317 = vmatpush1.msra.mxu0 0.0
    %2318 = vmatprep.subr.mxu0 0.0
    %2319 = vmatpush1.msra.mxu0 0.0
    %2320 = vmatprep.subr.mxu0 0.0
    %2321 = vmatpush1.msra.mxu0 0.0
    %2322 = vmatprep.subr.mxu0 0.0
    %2323 = vmatpush1.msra.mxu0 0.0
    %2324 = vmatprep.subr.mxu0 0.0
    %2325 = vmatpush1.msra.mxu0 0.0
    %2326 = vmatprep.subr.mxu0 0.0
    %2327 = vmatpush1.msra.mxu0 0.0
    %2328 = vmatprep.subr.mxu0 0.0
    %2329 = vmatpush1.msra.mxu0 0.0
    %2330 = vmatprep.subr.mxu0 0.0
    %2331 = vmatpush1.msra.mxu0 0.0
    %2332 = vmatprep.subr.mxu0 0.0
    %2333 = vmatpush1.msra.mxu0 0.0
    %2334 = vmatprep.subr.mxu0 0.0
    %2335 = vmatpush1.msra.mxu0 0.0
    %2336 = vmatprep.subr.mxu0 0.0
    %2337 = vmatpush1.msra.mxu0 0.0
    %2338 = vmatprep.subr.mxu0 0.0
    %2339 = vmatpush1.msra.mxu0 0.0
    %2340 = vmatprep.subr.mxu0 0.0
    %2341 = vmatpush1.msra.mxu0 0.0
    %2342 = vmatprep.subr.mxu0 0.0
    %2343 = vmatpush1.msra.mxu0 0.0
    %2344 = vmatprep.subr.mxu0 0.0
    %2345 = vmatpush1.msra.mxu0 0.0
    %2346 = vmatprep.subr.mxu0 0.0
    %2347 = vmatpush1.msra.mxu0 0.0
    %2348 = vmatprep.subr.mxu0 0.0
    %2349 = vmatpush1.msra.mxu0 0.0
    %2350 = vmatprep.subr.mxu0 0.0
    %2351 = vmatpush1.msra.mxu0 0.0
    %2352 = vmatprep.subr.mxu0 0.0
    %2353 = vmatpush1.msra.mxu0 0.0
    %2354 = vmatprep.subr.mxu0 0.0
    %2355 = vmatpush1.msra.mxu0 0.0
    %2356 = vmatprep.mubr.f32.mxu0 0.0
    %2357 = vmatmul.mubr.f32.gmra.mrb[0].mxu0 %v2287
    %v2358 = vpop.f32.mrb[0].mxu0
    %v2359 = vadd.f32 %v2284, %v2358
    %v2360 = vpop.f32.mrb[0].mxu0
    %2361 = vmatprep.mubr.f32.mxu0 0.0
    %2362 = vmatmul.mubr.f32.gmra.mrb[0].mxu0 %v2290
    %v2363 = vpop.f32.mrb[0].mxu0
    %v2364 = vadd.f32 %v2284, %v2363
    %v2365 = vpop.f32.mrb[0].mxu0
    %2366 = vdwg.mxu0
    %v2367 = vadd.f32 %v827, %v2359
    %v2368 = vadd.f32 %v828, %v2364
    %v2369 = vld [vmem:[%s13] sm:$0x1]
    %v2370 = vld [vmem:[%s14] sm:$0x1]
    %v2371 = vsel %vm75, %v2367, 0.0
    %2372 = vadd.xlane.f32.xlu0 %v2371
    %v2373 = vpop.xlane.xlu0 %2372
    %v2374 = vsel %vm75, %v2368, 0.0
    %2375 = vadd.xlane.f32.xlu0 %v2374
    %v2376 = vpop.xlane.xlu0 %2375
    %v2377 = vmul.f32 %v2373, %v83
    %v2378 = vmul.f32 %v2376, %v83
    %v2379 = vsub.f32 %v2367, %v2377
    %v2380 = vsub.f32 %v2368, %v2378
    %v2381 = vmul.f32 %v2379, %v2379
    %v2382 = vmul.f32 %v2380, %v2380
    %v2383 = vsel %vm75, %v2381, 0.0
    %2384 = vadd.xlane.f32.xlu0 %v2383
    %v2385 = vpop.xlane.xlu0 %2384
    %v2386 = vsel %vm75, %v2382, 0.0
    %2387 = vadd.xlane.f32.xlu0 %v2386
    %v2388 = vpop.xlane.xlu0 %2387
    %v2389 = vmul.f32 %v2385, %v83
    %v2390 = vmul.f32 %v2388, %v83
    %v2391 = vadd.f32 %v2389, 1e-05
    %v2392 = vadd.f32 %v2390, 1e-05
    %v2393 = vrsqrt.pop %v2391
    %v2394 = vrsqrt.pop %v2392
    %v2395 = vmul.f32 %v2379, %v2393
    %v2396 = vmul.f32 %v2380, %v2394
    %v2398 = vlaneseq
    %v2399 = vshrl.u32 %v2398, 7
    %v2400 = vsub.s32 0, %v2399
    %v2401 = vrot.slane %v2369, %v2400
    %v2403 = vmul.f32 %v2395, %v2401
    %v2404 = vmul.f32 %v2396, %v2401
    %v2406 = vlaneseq
    %v2407 = vshrl.u32 %v2406, 7
    %v2408 = vsub.s32 0, %v2407
    %v2409 = vrot.slane %v2370, %v2408
    %v2411 = vadd.f32 %v2403, %v2409
    %v2412 = vadd.f32 %v2404, %v2409
    %v2413 = vld [vmem:[%s15] sm:$0xff]
    %v2414 = vld [vmem:[%s15 + $0x8] sm:$0xff]
    %v2415 = vld [vmem:[%s15 + $0x10] sm:$0xff]
    %v2416 = vld [vmem:[%s15 + $0x18] sm:$0xff]
    %v2417 = vld [vmem:[%s16] sm:$0x1]
    %v2419 = vlaneseq
    %v2420 = vshrl.u32 %v2419, 7
    %v2421 = vsub.s32 0, %v2420
    %v2422 = vrot.slane %v2417, %v2421
    %v2425 = vsel %vm75, %v2411, 0
    %v2428 = vsel %vm75, %v2412, 0
    %2430 = vmatprep.subr.mxu0 0.0
    %2431 = vmatpush1.msra.mxu0 %v2413
    %2432 = vmatprep.subr.mxu0 0.0
    %2433 = vmatpush1.msra.mxu0 %v2414
    %2434 = vmatprep.subr.mxu0 0.0
    %2435 = vmatpush1.msra.mxu0 %v2415
    %2436 = vmatprep.subr.mxu0 0.0
    %2437 = vmatpush1.msra.mxu0 %v2416
    %2438 = vmatprep.subr.mxu0 0.0
    %2439 = vmatpush1.msra.mxu0 0.0
    %2440 = vmatprep.subr.mxu0 0.0
    %2441 = vmatpush1.msra.mxu0 0.0
    %2442 = vmatprep.subr.mxu0 0.0
    %2443 = vmatpush1.msra.mxu0 0.0
    %2444 = vmatprep.subr.mxu0 0.0
    %2445 = vmatpush1.msra.mxu0 0.0
    %2446 = vmatprep.subr.mxu0 0.0
    %2447 = vmatpush1.msra.mxu0 0.0
    %2448 = vmatprep.subr.mxu0 0.0
    %2449 = vmatpush1.msra.mxu0 0.0
    %2450 = vmatprep.subr.mxu0 0.0
    %2451 = vmatpush1.msra.mxu0 0.0
    %2452 = vmatprep.subr.mxu0 0.0
    %2453 = vmatpush1.msra.mxu0 0.0
    %2454 = vmatprep.subr.mxu0 0.0
    %2455 = vmatpush1.msra.mxu0 0.0
    %2456 = vmatprep.subr.mxu0 0.0
    %2457 = vmatpush1.msra.mxu0 0.0
    %2458 = vmatprep.subr.mxu0 0.0
    %2459 = vmatpush1.msra.mxu0 0.0
    %2460 = vmatprep.subr.mxu0 0.0
    %2461 = vmatpush1.msra.mxu0 0.0
    %2462 = vmatprep.subr.mxu0 0.0
    %2463 = vmatpush1.msra.mxu0 0.0
    %2464 = vmatprep.subr.mxu0 0.0
    %2465 = vmatpush1.msra.mxu0 0.0
    %2466 = vmatprep.subr.mxu0 0.0
    %2467 = vmatpush1.msra.mxu0 0.0
    %2468 = vmatprep.subr.mxu0 0.0
    %2469 = vmatpush1.msra.mxu0 0.0
    %2470 = vmatprep.subr.mxu0 0.0
    %2471 = vmatpush1.msra.mxu0 0.0
    %2472 = vmatprep.subr.mxu0 0.0
    %2473 = vmatpush1.msra.mxu0 0.0
    %2474 = vmatprep.subr.mxu0 0.0
    %2475 = vmatpush1.msra.mxu0 0.0
    %2476 = vmatprep.subr.mxu0 0.0
    %2477 = vmatpush1.msra.mxu0 0.0
    %2478 = vmatprep.subr.mxu0 0.0
    %2479 = vmatpush1.msra.mxu0 0.0
    %2480 = vmatprep.subr.mxu0 0.0
    %2481 = vmatpush1.msra.mxu0 0.0
    %2482 = vmatprep.subr.mxu0 0.0
    %2483 = vmatpush1.msra.mxu0 0.0
    %2484 = vmatprep.subr.mxu0 0.0
    %2485 = vmatpush1.msra.mxu0 0.0
    %2486 = vmatprep.subr.mxu0 0.0
    %2487 = vmatpush1.msra.mxu0 0.0
    %2488 = vmatprep.subr.mxu0 0.0
    %2489 = vmatpush1.msra.mxu0 0.0
    %2490 = vmatprep.subr.mxu0 0.0
    %2491 = vmatpush1.msra.mxu0 0.0
    %2492 = vmatprep.subr.mxu0 0.0
    %2493 = vmatpush1.msra.mxu0 0.0
    %2494 = vmatprep.mubr.f32.mxu0 0.0
    %2495 = vmatmul.mubr.f32.gmra.mrb[0].mxu0 %v2425
    %v2496 = vpop.f32.mrb[0].mxu0
    %v2497 = vadd.f32 %v2422, %v2496
    %v2498 = vpop.f32.mrb[0].mxu0
    %2499 = vmatprep.mubr.f32.mxu0 0.0
    %2500 = vmatmul.mubr.f32.gmra.mrb[0].mxu0 %v2428
    %v2501 = vpop.f32.mrb[0].mxu0
    %v2502 = vadd.f32 %v2422, %v2501
    %v2503 = vpop.f32.mrb[0].mxu0
    %2504 = vdwg.mxu0
    %v2505 = vmax.f32 %v2497, 0.0
    %v2506 = vmax.f32 %v2502, 0.0
    %v2507 = vld [vmem:[%s17] sm:$0xff]
    %v2508 = vld [vmem:[%s17 + $0x8] sm:$0xff]
    %v2509 = vld [vmem:[%s17 + $0x10] sm:$0xff]
    %v2510 = vld [vmem:[%s17 + $0x18] sm:$0xff]
    %v2511 = vld [vmem:[%s17 + $0x20] sm:$0xff]
    %v2512 = vld [vmem:[%s17 + $0x28] sm:$0xff]
    %v2513 = vld [vmem:[%s17 + $0x30] sm:$0xff]
    %v2514 = vld [vmem:[%s17 + $0x38] sm:$0xff]
    %v2515 = vld [vmem:[%s18] sm:$0x1]
    %v2517 = vlaneseq
    %v2518 = vshrl.u32 %v2517, 7
    %v2519 = vsub.s32 0, %v2518
    %v2520 = vrot.slane %v2515, %v2519
    %vm2522 = vcmask 523264
    %v2524 = vsel %vm2522, %v2505, 0
    %v2527 = vsel %vm2522, %v2506, 0
    %2529 = vmatprep.subr.mxu0 0.0
    %2530 = vmatpush1.msra.mxu0 %v2507
    %2531 = vmatprep.subr.mxu0 0.0
    %2532 = vmatpush1.msra.mxu0 %v2508
    %2533 = vmatprep.subr.mxu0 0.0
    %2534 = vmatpush1.msra.mxu0 %v2509
    %2535 = vmatprep.subr.mxu0 0.0
    %2536 = vmatpush1.msra.mxu0 %v2510
    %2537 = vmatprep.subr.mxu0 0.0
    %2538 = vmatpush1.msra.mxu0 %v2511
    %2539 = vmatprep.subr.mxu0 0.0
    %2540 = vmatpush1.msra.mxu0 %v2512
    %2541 = vmatprep.subr.mxu0 0.0
    %2542 = vmatpush1.msra.mxu0 %v2513
    %2543 = vmatprep.subr.mxu0 0.0
    %2544 = vmatpush1.msra.mxu0 %v2514
    %2545 = vmatprep.subr.mxu0 0.0
    %2546 = vmatpush1.msra.mxu0 0.0
    %2547 = vmatprep.subr.mxu0 0.0
    %2548 = vmatpush1.msra.mxu0 0.0
    %2549 = vmatprep.subr.mxu0 0.0
    %2550 = vmatpush1.msra.mxu0 0.0
    %2551 = vmatprep.subr.mxu0 0.0
    %2552 = vmatpush1.msra.mxu0 0.0
    %2553 = vmatprep.subr.mxu0 0.0
    %2554 = vmatpush1.msra.mxu0 0.0
    %2555 = vmatprep.subr.mxu0 0.0
    %2556 = vmatpush1.msra.mxu0 0.0
    %2557 = vmatprep.subr.mxu0 0.0
    %2558 = vmatpush1.msra.mxu0 0.0
    %2559 = vmatprep.subr.mxu0 0.0
    %2560 = vmatpush1.msra.mxu0 0.0
    %2561 = vmatprep.subr.mxu0 0.0
    %2562 = vmatpush1.msra.mxu0 0.0
    %2563 = vmatprep.subr.mxu0 0.0
    %2564 = vmatpush1.msra.mxu0 0.0
    %2565 = vmatprep.subr.mxu0 0.0
    %2566 = vmatpush1.msra.mxu0 0.0
    %2567 = vmatprep.subr.mxu0 0.0
    %2568 = vmatpush1.msra.mxu0 0.0
    %2569 = vmatprep.subr.mxu0 0.0
    %2570 = vmatpush1.msra.mxu0 0.0
    %2571 = vmatprep.subr.mxu0 0.0
    %2572 = vmatpush1.msra.mxu0 0.0
    %2573 = vmatprep.subr.mxu0 0.0
    %2574 = vmatpush1.msra.mxu0 0.0
    %2575 = vmatprep.subr.mxu0 0.0
    %2576 = vmatpush1.msra.mxu0 0.0
    %2577 = vmatprep.subr.mxu0 0.0
    %2578 = vmatpush1.msra.mxu0 0.0
    %2579 = vmatprep.subr.mxu0 0.0
    %2580 = vmatpush1.msra.mxu0 0.0
    %2581 = vmatprep.subr.mxu0 0.0
    %2582 = vmatpush1.msra.mxu0 0.0
    %2583 = vmatprep.subr.mxu0 0.0
    %2584 = vmatpush1.msra.mxu0 0.0
    %2585 = vmatprep.subr.mxu0 0.0
    %2586 = vmatpush1.msra.mxu0 0.0
    %2587 = vmatprep.subr.mxu0 0.0
    %2588 = vmatpush1.msra.mxu0 0.0
    %2589 = vmatprep.subr.mxu0 0.0
    %2590 = vmatpush1.msra.mxu0 0.0
    %2591 = vmatprep.subr.mxu0 0.0
    %2592 = vmatpush1.msra.mxu0 0.0
    %2593 = vmatprep.mubr.f32.mxu0 0.0
    %2594 = vmatmul.mubr.f32.gmra.mrb[0].mxu0 %v2524
    %v2595 = vpop.f32.mrb[0].mxu0
    %v2596 = vadd.f32 %v2520, %v2595
    %v2597 = vpop.f32.mrb[0].mxu0
    %2598 = vmatprep.mubr.f32.mxu0 0.0
    %2599 = vmatmul.mubr.f32.gmra.mrb[0].mxu0 %v2527
    %v2600 = vpop.f32.mrb[0].mxu0
    %v2601 = vadd.f32 %v2520, %v2600
    %v2602 = vpop.f32.mrb[0].mxu0
    %2603 = vdwg.mxu0
    %v2604 = vadd.f32 %v2411, %v2596
    %v2605 = vadd.f32 %v2412, %v2601
    %v2606 = vld [vmem:[%s19] sm:$0x1]
    %v2607 = vld [vmem:[%s20] sm:$0x1]
    %v2608 = vsel %vm75, %v2604, 0.0
    %2609 = vadd.xlane.f32.xlu0 %v2608
    %v2610 = vpop.xlane.xlu0 %2609
    %v2611 = vsel %vm75, %v2605, 0.0
    %2612 = vadd.xlane.f32.xlu0 %v2611
    %v2613 = vpop.xlane.xlu0 %2612
    %v2614 = vmul.f32 %v2610, %v83
    %v2615 = vmul.f32 %v2613, %v83
    %v2616 = vsub.f32 %v2604, %v2614
    %v2617 = vsub.f32 %v2605, %v2615
    %v2618 = vmul.f32 %v2616, %v2616
    %v2619 = vmul.f32 %v2617, %v2617
    %v2620 = vsel %vm75, %v2618, 0.0
    %2621 = vadd.xlane.f32.xlu0 %v2620
    %v2622 = vpop.xlane.xlu0 %2621
    %v2623 = vsel %vm75, %v2619, 0.0
    %2624 = vadd.xlane.f32.xlu0 %v2623
    %v2625 = vpop.xlane.xlu0 %2624
    %v2626 = vmul.f32 %v2622, %v83
    %v2627 = vmul.f32 %v2625, %v83
    %v2628 = vadd.f32 %v2626, 1e-05
    %v2629 = vadd.f32 %v2627, 1e-05
    %v2630 = vrsqrt.pop %v2628
    %v2631 = vrsqrt.pop %v2629
    %v2632 = vmul.f32 %v2616, %v2630
    %v2633 = vmul.f32 %v2617, %v2631
    %v2635 = vlaneseq
    %v2636 = vshrl.u32 %v2635, 7
    %v2637 = vsub.s32 0, %v2636
    %v2638 = vrot.slane %v2606, %v2637
    %v2640 = vmul.f32 %v2632, %v2638
    %v2641 = vmul.f32 %v2633, %v2638
    %v2643 = vlaneseq
    %v2644 = vshrl.u32 %v2643, 7
    %v2645 = vsub.s32 0, %v2644
    %v2646 = vrot.slane %v2607, %v2645
    %v2648 = vadd.f32 %v2640, %v2646
    %v2649 = vadd.f32 %v2641, %v2646
    %2650 = vst.msk [vmem:[%s21] sm:$0xff] %vm75, %v2648
    %2651 = vst.msk [vmem:[%s21 + $0x8] sm:$0xff] %vm75, %v2649
    %s2652 = scalar_lea.vmem %s9, 32
    %v2653 = vld [vmem:[%s2652] sm:$0xff]
    %v2654 = vld [vmem:[%s2652 + $0x8] sm:$0xff]
    %v2655 = vld [vmem:[%s2652 + $0x10] sm:$0xff]
    %v2656 = vld [vmem:[%s2652 + $0x18] sm:$0xff]
    %s2657 = scalar_lea.vmem %s10, 1
    %v2658 = vld [vmem:[%s2657] sm:$0x1]
    %v2660 = vlaneseq
    %v2661 = vshrl.u32 %v2660, 7
    %v2662 = vsub.s32 0, %v2661
    %v2663 = vrot.slane %v2658, %v2662
    %v2666 = vsel %vm75, %v2648, 0
    %v2669 = vsel %vm75, %v2649, 0
    %2671 = vmatprep.subr.mxu0 0.0
    %2672 = vmatpush1.msra.mxu0 %v2653
    %2673 = vmatprep.subr.mxu0 0.0
    %2674 = vmatpush1.msra.mxu0 %v2654
    %2675 = vmatprep.subr.mxu0 0.0
    %2676 = vmatpush1.msra.mxu0 %v2655
    %2677 = vmatprep.subr.mxu0 0.0
    %2678 = vmatpush1.msra.mxu0 %v2656
    %2679 = vmatprep.subr.mxu0 0.0
    %2680 = vmatpush1.msra.mxu0 0.0
    %2681 = vmatprep.subr.mxu0 0.0
    %2682 = vmatpush1.msra.mxu0 0.0
    %2683 = vmatprep.subr.mxu0 0.0
    %2684 = vmatpush1.msra.mxu0 0.0
    %2685 = vmatprep.subr.mxu0 0.0
    %2686 = vmatpush1.msra.mxu0 0.0
    %2687 = vmatprep.subr.mxu0 0.0
    %2688 = vmatpush1.msra.mxu0 0.0
    %2689 = vmatprep.subr.mxu0 0.0
    %2690 = vmatpush1.msra.mxu0 0.0
    %2691 = vmatprep.subr.mxu0 0.0
    %2692 = vmatpush1.msra.mxu0 0.0
    %2693 = vmatprep.subr.mxu0 0.0
    %2694 = vmatpush1.msra.mxu0 0.0
    %2695 = vmatprep.subr.mxu0 0.0
    %2696 = vmatpush1.msra.mxu0 0.0
    %2697 = vmatprep.subr.mxu0 0.0
    %2698 = vmatpush1.msra.mxu0 0.0
    %2699 = vmatprep.subr.mxu0 0.0
    %2700 = vmatpush1.msra.mxu0 0.0
    %2701 = vmatprep.subr.mxu0 0.0
    %2702 = vmatpush1.msra.mxu0 0.0
    %2703 = vmatprep.subr.mxu0 0.0
    %2704 = vmatpush1.msra.mxu0 0.0
    %2705 = vmatprep.subr.mxu0 0.0
    %2706 = vmatpush1.msra.mxu0 0.0
    %2707 = vmatprep.subr.mxu0 0.0
    %2708 = vmatpush1.msra.mxu0 0.0
    %2709 = vmatprep.subr.mxu0 0.0
    %2710 = vmatpush1.msra.mxu0 0.0
    %2711 = vmatprep.subr.mxu0 0.0
    %2712 = vmatpush1.msra.mxu0 0.0
    %2713 = vmatprep.subr.mxu0 0.0
    %2714 = vmatpush1.msra.mxu0 0.0
    %2715 = vmatprep.subr.mxu0 0.0
    %2716 = vmatpush1.msra.mxu0 0.0
    %2717 = vmatprep.subr.mxu0 0.0
    %2718 = vmatpush1.msra.mxu0 0.0
    %2719 = vmatprep.subr.mxu0 0.0
    %2720 = vmatpush1.msra.mxu0 0.0
    %2721 = vmatprep.subr.mxu0 0.0
    %2722 = vmatpush1.msra.mxu0 0.0
    %2723 = vmatprep.subr.mxu0 0.0
    %2724 = vmatpush1.msra.mxu0 0.0
    %2725 = vmatprep.subr.mxu0 0.0
    %2726 = vmatpush1.msra.mxu0 0.0
    %2727 = vmatprep.subr.mxu0 0.0
    %2728 = vmatpush1.msra.mxu0 0.0
    %2729 = vmatprep.subr.mxu0 0.0
    %2730 = vmatpush1.msra.mxu0 0.0
    %2731 = vmatprep.subr.mxu0 0.0
    %2732 = vmatpush1.msra.mxu0 0.0
    %2733 = vmatprep.subr.mxu0 0.0
    %2734 = vmatpush1.msra.mxu0 0.0
    %2735 = vmatprep.mubr.f32.mxu0 0.0
    %2736 = vmatmul.mubr.f32.gmra.mrb[0].mxu0 %v2666
    %v2737 = vpop.f32.mrb[0].mxu0
    %v2738 = vadd.f32 %v2663, %v2737
    %v2739 = vpop.f32.mrb[0].mxu0
    %2740 = vmatprep.mubr.f32.mxu0 0.0
    %2741 = vmatmul.mubr.f32.gmra.mrb[0].mxu0 %v2669
    %v2742 = vpop.f32.mrb[0].mxu0
    %v2743 = vadd.f32 %v2663, %v2742
    %v2744 = vpop.f32.mrb[0].mxu0
    %2745 = vdwg.mxu0
    %v2746 = vmul.f32 %v2738, 0.25
    %v2747 = vmul.f32 %v2743, 0.25
    %2749 = vrot.lane.b32.xlu0 %v2738, 96
    %v2750 = vpop.permute.xlu0 %2749
    %v2752 = vsel %vm300, %v2746, 0
    %v2754 = vsel %vm300, %v2750, 0
    %2756 = vmatprep.subr.mxu0 0.0
    %2757 = vmatpush1.xpose.msra.mxu0 %v2754
    %2758 = vmatprep.subr.mxu0 0.0
    %2759 = vmatpush1.xpose.msra.mxu0 0.0
    %2760 = vmatprep.subr.mxu0 0.0
    %2761 = vmatpush1.xpose.msra.mxu0 0.0
    %2762 = vmatprep.subr.mxu0 0.0
    %2763 = vmatpush1.xpose.msra.mxu0 0.0
    %2764 = vmatprep.subr.mxu0 0.0
    %2765 = vmatpush1.xpose.msra.mxu0 0.0
    %2766 = vmatprep.subr.mxu0 0.0
    %2767 = vmatpush1.xpose.msra.mxu0 0.0
    %2768 = vmatprep.subr.mxu0 0.0
    %2769 = vmatpush1.xpose.msra.mxu0 0.0
    %2770 = vmatprep.subr.mxu0 0.0
    %2771 = vmatpush1.xpose.msra.mxu0 0.0
    %2772 = vmatprep.subr.mxu0 0.0
    %2773 = vmatpush1.xpose.msra.mxu0 0.0
    %2774 = vmatprep.subr.mxu0 0.0
    %2775 = vmatpush1.xpose.msra.mxu0 0.0
    %2776 = vmatprep.subr.mxu0 0.0
    %2777 = vmatpush1.xpose.msra.mxu0 0.0
    %2778 = vmatprep.subr.mxu0 0.0
    %2779 = vmatpush1.xpose.msra.mxu0 0.0
    %2780 = vmatprep.subr.mxu0 0.0
    %2781 = vmatpush1.xpose.msra.mxu0 0.0
    %2782 = vmatprep.subr.mxu0 0.0
    %2783 = vmatpush1.xpose.msra.mxu0 0.0
    %2784 = vmatprep.subr.mxu0 0.0
    %2785 = vmatpush1.xpose.msra.mxu0 0.0
    %2786 = vmatprep.subr.mxu0 0.0
    %2787 = vmatpush1.xpose.msra.mxu0 0.0
    %2788 = vmatprep.subr.mxu0 0.0
    %2789 = vmatpush1.xpose.msra.mxu0 0.0
    %2790 = vmatprep.subr.mxu0 0.0
    %2791 = vmatpush1.xpose.msra.mxu0 0.0
    %2792 = vmatprep.subr.mxu0 0.0
    %2793 = vmatpush1.xpose.msra.mxu0 0.0
    %2794 = vmatprep.subr.mxu0 0.0
    %2795 = vmatpush1.xpose.msra.mxu0 0.0
    %2796 = vmatprep.subr.mxu0 0.0
    %2797 = vmatpush1.xpose.msra.mxu0 0.0
    %2798 = vmatprep.subr.mxu0 0.0
    %2799 = vmatpush1.xpose.msra.mxu0 0.0
    %2800 = vmatprep.subr.mxu0 0.0
    %2801 = vmatpush1.xpose.msra.mxu0 0.0
    %2802 = vmatprep.subr.mxu0 0.0
    %2803 = vmatpush1.xpose.msra.mxu0 0.0
    %2804 = vmatprep.subr.mxu0 0.0
    %2805 = vmatpush1.xpose.msra.mxu0 0.0
    %2806 = vmatprep.subr.mxu0 0.0
    %2807 = vmatpush1.xpose.msra.mxu0 0.0
    %2808 = vmatprep.subr.mxu0 0.0
    %2809 = vmatpush1.xpose.msra.mxu0 0.0
    %2810 = vmatprep.subr.mxu0 0.0
    %2811 = vmatpush1.xpose.msra.mxu0 0.0
    %2812 = vmatprep.subr.mxu0 0.0
    %2813 = vmatpush1.xpose.msra.mxu0 0.0
    %2814 = vmatprep.subr.mxu0 0.0
    %2815 = vmatpush1.xpose.msra.mxu0 0.0
    %2816 = vmatprep.subr.mxu0 0.0
    %2817 = vmatpush1.xpose.msra.mxu0 0.0
    %2818 = vmatprep.subr.mxu0 0.0
    %2819 = vmatpush1.xpose.msra.mxu0 0.0
    %2820 = vmatprep.mubr.f32.mxu0 0.0
    %2821 = vmatmul.mubr.f32.gmra.mrb[0].mxu0 %v2752
    %v2822 = vpop.f32.mrb[0].mxu0
    %v2823 = vadd.f32 %v714, %v2822
    %v2824 = vpop.f32.mrb[0].mxu0
    %2825 = vdwg.mxu0
    %2827 = vrot.lane.b32.xlu0 %v2743, 96
    %v2828 = vpop.permute.xlu0 %2827
    %v2830 = vsel %vm300, %v2747, 0
    %v2832 = vsel %vm300, %v2828, 0
    %2834 = vmatprep.subr.mxu0 0.0
    %2835 = vmatpush1.xpose.msra.mxu0 %v2832
    %2836 = vmatprep.subr.mxu0 0.0
    %2837 = vmatpush1.xpose.msra.mxu0 0.0
    %2838 = vmatprep.subr.mxu0 0.0
    %2839 = vmatpush1.xpose.msra.mxu0 0.0
    %2840 = vmatprep.subr.mxu0 0.0
    %2841 = vmatpush1.xpose.msra.mxu0 0.0
    %2842 = vmatprep.subr.mxu0 0.0
    %2843 = vmatpush1.xpose.msra.mxu0 0.0
    %2844 = vmatprep.subr.mxu0 0.0
    %2845 = vmatpush1.xpose.msra.mxu0 0.0
    %2846 = vmatprep.subr.mxu0 0.0
    %2847 = vmatpush1.xpose.msra.mxu0 0.0
    %2848 = vmatprep.subr.mxu0 0.0
    %2849 = vmatpush1.xpose.msra.mxu0 0.0
    %2850 = vmatprep.subr.mxu0 0.0
    %2851 = vmatpush1.xpose.msra.mxu0 0.0
    %2852 = vmatprep.subr.mxu0 0.0
    %2853 = vmatpush1.xpose.msra.mxu0 0.0
    %2854 = vmatprep.subr.mxu0 0.0
    %2855 = vmatpush1.xpose.msra.mxu0 0.0
    %2856 = vmatprep.subr.mxu0 0.0
    %2857 = vmatpush1.xpose.msra.mxu0 0.0
    %2858 = vmatprep.subr.mxu0 0.0
    %2859 = vmatpush1.xpose.msra.mxu0 0.0
    %2860 = vmatprep.subr.mxu0 0.0
    %2861 = vmatpush1.xpose.msra.mxu0 0.0
    %2862 = vmatprep.subr.mxu0 0.0
    %2863 = vmatpush1.xpose.msra.mxu0 0.0
    %2864 = vmatprep.subr.mxu0 0.0
    %2865 = vmatpush1.xpose.msra.mxu0 0.0
    %2866 = vmatprep.subr.mxu0 0.0
    %2867 = vmatpush1.xpose.msra.mxu0 0.0
    %2868 = vmatprep.subr.mxu0 0.0
    %2869 = vmatpush1.xpose.msra.mxu0 0.0
    %2870 = vmatprep.subr.mxu0 0.0
    %2871 = vmatpush1.xpose.msra.mxu0 0.0
    %2872 = vmatprep.subr.mxu0 0.0
    %2873 = vmatpush1.xpose.msra.mxu0 0.0
    %2874 = vmatprep.subr.mxu0 0.0
    %2875 = vmatpush1.xpose.msra.mxu0 0.0
    %2876 = vmatprep.subr.mxu0 0.0
    %2877 = vmatpush1.xpose.msra.mxu0 0.0
    %2878 = vmatprep.subr.mxu0 0.0
    %2879 = vmatpush1.xpose.msra.mxu0 0.0
    %2880 = vmatprep.subr.mxu0 0.0
    %2881 = vmatpush1.xpose.msra.mxu0 0.0
    %2882 = vmatprep.subr.mxu0 0.0
    %2883 = vmatpush1.xpose.msra.mxu0 0.0
    %2884 = vmatprep.subr.mxu0 0.0
    %2885 = vmatpush1.xpose.msra.mxu0 0.0
    %2886 = vmatprep.subr.mxu0 0.0
    %2887 = vmatpush1.xpose.msra.mxu0 0.0
    %2888 = vmatprep.subr.mxu0 0.0
    %2889 = vmatpush1.xpose.msra.mxu0 0.0
    %2890 = vmatprep.subr.mxu0 0.0
    %2891 = vmatpush1.xpose.msra.mxu0 0.0
    %2892 = vmatprep.subr.mxu0 0.0
    %2893 = vmatpush1.xpose.msra.mxu0 0.0
    %2894 = vmatprep.subr.mxu0 0.0
    %2895 = vmatpush1.xpose.msra.mxu0 0.0
    %2896 = vmatprep.subr.mxu0 0.0
    %2897 = vmatpush1.xpose.msra.mxu0 0.0
    %2898 = vmatprep.mubr.f32.mxu0 0.0
    %2899 = vmatmul.mubr.f32.gmra.mrb[0].mxu0 %v2830
    %v2900 = vpop.f32.mrb[0].mxu0
    %v2901 = vadd.f32 %v715, %v2900
    %v2902 = vpop.f32.mrb[0].mxu0
    %2903 = vdwg.mxu0
    %v2904 = vsel %vm300, %v2823, -inf
    %2905 = vmax.xlane.f32.xlu0 %v2904
    %v2906 = vpop.xlane.xlu0 %2905
    %v2907 = vsel %vm300, %v2901, -inf
    %2908 = vmax.xlane.f32.xlu0 %v2907
    %v2909 = vpop.xlane.xlu0 %2908
    %v2910 = vsub.f32 %v2823, %v2906
    %v2911 = vsub.f32 %v2901, %v2909
    %v2912 = vmul.f32 %v2910, 1.442695
    %v2913 = vpow.pop %v2912
    %v2914 = vmul.f32 %v2911, 1.442695
    %v2915 = vpow.pop %v2914
    %v2916 = vsel %vm300, %v2913, 0.0
    %2917 = vadd.xlane.f32.xlu0 %v2916
    %v2918 = vpop.xlane.xlu0 %2917
    %v2919 = vsel %vm300, %v2915, 0.0
    %2920 = vadd.xlane.f32.xlu0 %v2919
    %v2921 = vpop.xlane.xlu0 %2920
    %v2922 = vrcp.pop %v2918
    %v2923 = vrcp.pop %v2921
    %v2924 = vmul.f32 %v2913, %v2922
    %v2925 = vmul.f32 %v2915, %v2923
    %2926 = vrot.lane.b32.xlu0 %v2738, 64
    %v2927 = vpop.permute.xlu0 %2926
    %v2930 = vsel %vm300, %v2924, 0
    %2932 = vmatprep.subr.mxu0 0.0
    %2933 = vmatpush1.msra.mxu0 %v2927
    %2934 = vmatprep.subr.mxu0 0.0
    %2935 = vmatpush1.msra.mxu0 0.0
    %2936 = vmatprep.subr.mxu0 0.0
    %2937 = vmatpush1.msra.mxu0 0.0
    %2938 = vmatprep.subr.mxu0 0.0
    %2939 = vmatpush1.msra.mxu0 0.0
    %2940 = vmatprep.subr.mxu0 0.0
    %2941 = vmatpush1.msra.mxu0 0.0
    %2942 = vmatprep.subr.mxu0 0.0
    %2943 = vmatpush1.msra.mxu0 0.0
    %2944 = vmatprep.subr.mxu0 0.0
    %2945 = vmatpush1.msra.mxu0 0.0
    %2946 = vmatprep.subr.mxu0 0.0
    %2947 = vmatpush1.msra.mxu0 0.0
    %2948 = vmatprep.subr.mxu0 0.0
    %2949 = vmatpush1.msra.mxu0 0.0
    %2950 = vmatprep.subr.mxu0 0.0
    %2951 = vmatpush1.msra.mxu0 0.0
    %2952 = vmatprep.subr.mxu0 0.0
    %2953 = vmatpush1.msra.mxu0 0.0
    %2954 = vmatprep.subr.mxu0 0.0
    %2955 = vmatpush1.msra.mxu0 0.0
    %2956 = vmatprep.subr.mxu0 0.0
    %2957 = vmatpush1.msra.mxu0 0.0
    %2958 = vmatprep.subr.mxu0 0.0
    %2959 = vmatpush1.msra.mxu0 0.0
    %2960 = vmatprep.subr.mxu0 0.0
    %2961 = vmatpush1.msra.mxu0 0.0
    %2962 = vmatprep.subr.mxu0 0.0
    %2963 = vmatpush1.msra.mxu0 0.0
    %2964 = vmatprep.subr.mxu0 0.0
    %2965 = vmatpush1.msra.mxu0 0.0
    %2966 = vmatprep.subr.mxu0 0.0
    %2967 = vmatpush1.msra.mxu0 0.0
    %2968 = vmatprep.subr.mxu0 0.0
    %2969 = vmatpush1.msra.mxu0 0.0
    %2970 = vmatprep.subr.mxu0 0.0
    %2971 = vmatpush1.msra.mxu0 0.0
    %2972 = vmatprep.subr.mxu0 0.0
    %2973 = vmatpush1.msra.mxu0 0.0
    %2974 = vmatprep.subr.mxu0 0.0
    %2975 = vmatpush1.msra.mxu0 0.0
    %2976 = vmatprep.subr.mxu0 0.0
    %2977 = vmatpush1.msra.mxu0 0.0
    %2978 = vmatprep.subr.mxu0 0.0
    %2979 = vmatpush1.msra.mxu0 0.0
    %2980 = vmatprep.subr.mxu0 0.0
    %2981 = vmatpush1.msra.mxu0 0.0
    %2982 = vmatprep.subr.mxu0 0.0
    %2983 = vmatpush1.msra.mxu0 0.0
    %2984 = vmatprep.subr.mxu0 0.0
    %2985 = vmatpush1.msra.mxu0 0.0
    %2986 = vmatprep.subr.mxu0 0.0
    %2987 = vmatpush1.msra.mxu0 0.0
    %2988 = vmatprep.subr.mxu0 0.0
    %2989 = vmatpush1.msra.mxu0 0.0
    %2990 = vmatprep.subr.mxu0 0.0
    %2991 = vmatpush1.msra.mxu0 0.0
    %2992 = vmatprep.subr.mxu0 0.0
    %2993 = vmatpush1.msra.mxu0 0.0
    %2994 = vmatprep.subr.mxu0 0.0
    %2995 = vmatpush1.msra.mxu0 0.0
    %2996 = vmatprep.mubr.f32.mxu0 0.0
    %2997 = vmatmul.mubr.f32.gmra.mrb[0].mxu0 %v2930
    %v2998 = vpop.f32.mrb[0].mxu0
    %v2999 = vadd.f32 0.0, %v2998
    %v3000 = vpop.f32.mrb[0].mxu0
    %3001 = vdwg.mxu0
    %3002 = vrot.lane.b32.xlu0 %v2743, 64
    %v3003 = vpop.permute.xlu0 %3002
    %v3006 = vsel %vm300, %v2925, 0
    %3008 = vmatprep.subr.mxu0 0.0
    %3009 = vmatpush1.msra.mxu0 %v3003
    %3010 = vmatprep.subr.mxu0 0.0
    %3011 = vmatpush1.msra.mxu0 0.0
    %3012 = vmatprep.subr.mxu0 0.0
    %3013 = vmatpush1.msra.mxu0 0.0
    %3014 = vmatprep.subr.mxu0 0.0
    %3015 = vmatpush1.msra.mxu0 0.0
    %3016 = vmatprep.subr.mxu0 0.0
    %3017 = vmatpush1.msra.mxu0 0.0
    %3018 = vmatprep.subr.mxu0 0.0
    %3019 = vmatpush1.msra.mxu0 0.0
    %3020 = vmatprep.subr.mxu0 0.0
    %3021 = vmatpush1.msra.mxu0 0.0
    %3022 = vmatprep.subr.mxu0 0.0
    %3023 = vmatpush1.msra.mxu0 0.0
    %3024 = vmatprep.subr.mxu0 0.0
    %3025 = vmatpush1.msra.mxu0 0.0
    %3026 = vmatprep.subr.mxu0 0.0
    %3027 = vmatpush1.msra.mxu0 0.0
    %3028 = vmatprep.subr.mxu0 0.0
    %3029 = vmatpush1.msra.mxu0 0.0
    %3030 = vmatprep.subr.mxu0 0.0
    %3031 = vmatpush1.msra.mxu0 0.0
    %3032 = vmatprep.subr.mxu0 0.0
    %3033 = vmatpush1.msra.mxu0 0.0
    %3034 = vmatprep.subr.mxu0 0.0
    %3035 = vmatpush1.msra.mxu0 0.0
    %3036 = vmatprep.subr.mxu0 0.0
    %3037 = vmatpush1.msra.mxu0 0.0
    %3038 = vmatprep.subr.mxu0 0.0
    %3039 = vmatpush1.msra.mxu0 0.0
    %3040 = vmatprep.subr.mxu0 0.0
    %3041 = vmatpush1.msra.mxu0 0.0
    %3042 = vmatprep.subr.mxu0 0.0
    %3043 = vmatpush1.msra.mxu0 0.0
    %3044 = vmatprep.subr.mxu0 0.0
    %3045 = vmatpush1.msra.mxu0 0.0
    %3046 = vmatprep.subr.mxu0 0.0
    %3047 = vmatpush1.msra.mxu0 0.0
    %3048 = vmatprep.subr.mxu0 0.0
    %3049 = vmatpush1.msra.mxu0 0.0
    %3050 = vmatprep.subr.mxu0 0.0
    %3051 = vmatpush1.msra.mxu0 0.0
    %3052 = vmatprep.subr.mxu0 0.0
    %3053 = vmatpush1.msra.mxu0 0.0
    %3054 = vmatprep.subr.mxu0 0.0
    %3055 = vmatpush1.msra.mxu0 0.0
    %3056 = vmatprep.subr.mxu0 0.0
    %3057 = vmatpush1.msra.mxu0 0.0
    %3058 = vmatprep.subr.mxu0 0.0
    %3059 = vmatpush1.msra.mxu0 0.0
    %3060 = vmatprep.subr.mxu0 0.0
    %3061 = vmatpush1.msra.mxu0 0.0
    %3062 = vmatprep.subr.mxu0 0.0
    %3063 = vmatpush1.msra.mxu0 0.0
    %3064 = vmatprep.subr.mxu0 0.0
    %3065 = vmatpush1.msra.mxu0 0.0
    %3066 = vmatprep.subr.mxu0 0.0
    %3067 = vmatpush1.msra.mxu0 0.0
    %3068 = vmatprep.subr.mxu0 0.0
    %3069 = vmatpush1.msra.mxu0 0.0
    %3070 = vmatprep.subr.mxu0 0.0
    %3071 = vmatpush1.msra.mxu0 0.0
    %3072 = vmatprep.mubr.f32.mxu0 0.0
    %3073 = vmatmul.mubr.f32.gmra.mrb[0].mxu0 %v3006
    %v3074 = vpop.f32.mrb[0].mxu0
    %v3075 = vadd.f32 0.0, %v3074
    %v3076 = vpop.f32.mrb[0].mxu0
    %3077 = vdwg.mxu0
    %3078 = vrot.lane.b32.xlu0 %v2746, 120
    %v3079 = vpop.permute.xlu0 %3078
    %3080 = vrot.lane.b32.xlu0 %v2738, 88
    %v3081 = vpop.permute.xlu0 %3080
    %v3082 = vsel %vm300, %v3079, 0
    %v3084 = vsel %vm300, %v3081, 0
    %3086 = vmatprep.subr.mxu0 0.0
    %3087 = vmatpush1.xpose.msra.mxu0 %v3084
    %3088 = vmatprep.subr.mxu0 0.0
    %3089 = vmatpush1.xpose.msra.mxu0 0.0
    %3090 = vmatprep.subr.mxu0 0.0
    %3091 = vmatpush1.xpose.msra.mxu0 0.0
    %3092 = vmatprep.subr.mxu0 0.0
    %3093 = vmatpush1.xpose.msra.mxu0 0.0
    %3094 = vmatprep.subr.mxu0 0.0
    %3095 = vmatpush1.xpose.msra.mxu0 0.0
    %3096 = vmatprep.subr.mxu0 0.0
    %3097 = vmatpush1.xpose.msra.mxu0 0.0
    %3098 = vmatprep.subr.mxu0 0.0
    %3099 = vmatpush1.xpose.msra.mxu0 0.0
    %3100 = vmatprep.subr.mxu0 0.0
    %3101 = vmatpush1.xpose.msra.mxu0 0.0
    %3102 = vmatprep.subr.mxu0 0.0
    %3103 = vmatpush1.xpose.msra.mxu0 0.0
    %3104 = vmatprep.subr.mxu0 0.0
    %3105 = vmatpush1.xpose.msra.mxu0 0.0
    %3106 = vmatprep.subr.mxu0 0.0
    %3107 = vmatpush1.xpose.msra.mxu0 0.0
    %3108 = vmatprep.subr.mxu0 0.0
    %3109 = vmatpush1.xpose.msra.mxu0 0.0
    %3110 = vmatprep.subr.mxu0 0.0
    %3111 = vmatpush1.xpose.msra.mxu0 0.0
    %3112 = vmatprep.subr.mxu0 0.0
    %3113 = vmatpush1.xpose.msra.mxu0 0.0
    %3114 = vmatprep.subr.mxu0 0.0
    %3115 = vmatpush1.xpose.msra.mxu0 0.0
    %3116 = vmatprep.subr.mxu0 0.0
    %3117 = vmatpush1.xpose.msra.mxu0 0.0
    %3118 = vmatprep.subr.mxu0 0.0
    %3119 = vmatpush1.xpose.msra.mxu0 0.0
    %3120 = vmatprep.subr.mxu0 0.0
    %3121 = vmatpush1.xpose.msra.mxu0 0.0
    %3122 = vmatprep.subr.mxu0 0.0
    %3123 = vmatpush1.xpose.msra.mxu0 0.0
    %3124 = vmatprep.subr.mxu0 0.0
    %3125 = vmatpush1.xpose.msra.mxu0 0.0
    %3126 = vmatprep.subr.mxu0 0.0
    %3127 = vmatpush1.xpose.msra.mxu0 0.0
    %3128 = vmatprep.subr.mxu0 0.0
    %3129 = vmatpush1.xpose.msra.mxu0 0.0
    %3130 = vmatprep.subr.mxu0 0.0
    %3131 = vmatpush1.xpose.msra.mxu0 0.0
    %3132 = vmatprep.subr.mxu0 0.0
    %3133 = vmatpush1.xpose.msra.mxu0 0.0
    %3134 = vmatprep.subr.mxu0 0.0
    %3135 = vmatpush1.xpose.msra.mxu0 0.0
    %3136 = vmatprep.subr.mxu0 0.0
    %3137 = vmatpush1.xpose.msra.mxu0 0.0
    %3138 = vmatprep.subr.mxu0 0.0
    %3139 = vmatpush1.xpose.msra.mxu0 0.0
    %3140 = vmatprep.subr.mxu0 0.0
    %3141 = vmatpush1.xpose.msra.mxu0 0.0
    %3142 = vmatprep.subr.mxu0 0.0
    %3143 = vmatpush1.xpose.msra.mxu0 0.0
    %3144 = vmatprep.subr.mxu0 0.0
    %3145 = vmatpush1.xpose.msra.mxu0 0.0
    %3146 = vmatprep.subr.mxu0 0.0
    %3147 = vmatpush1.xpose.msra.mxu0 0.0
    %3148 = vmatprep.subr.mxu0 0.0
    %3149 = vmatpush1.xpose.msra.mxu0 0.0
    %3150 = vmatprep.mubr.f32.mxu0 0.0
    %3151 = vmatmul.mubr.f32.gmra.mrb[0].mxu0 %v3082
    %v3152 = vpop.f32.mrb[0].mxu0
    %v3153 = vadd.f32 %v751, %v3152
    %v3154 = vpop.f32.mrb[0].mxu0
    %3155 = vdwg.mxu0
    %3156 = vrot.lane.b32.xlu0 %v2747, 120
    %v3157 = vpop.permute.xlu0 %3156
    %3158 = vrot.lane.b32.xlu0 %v2743, 88
    %v3159 = vpop.permute.xlu0 %3158
    %v3160 = vsel %vm300, %v3157, 0
    %v3162 = vsel %vm300, %v3159, 0
    %3164 = vmatprep.subr.mxu0 0.0
    %3165 = vmatpush1.xpose.msra.mxu0 %v3162
    %3166 = vmatprep.subr.mxu0 0.0
    %3167 = vmatpush1.xpose.msra.mxu0 0.0
    %3168 = vmatprep.subr.mxu0 0.0
    %3169 = vmatpush1.xpose.msra.mxu0 0.0
    %3170 = vmatprep.subr.mxu0 0.0
    %3171 = vmatpush1.xpose.msra.mxu0 0.0
    %3172 = vmatprep.subr.mxu0 0.0
    %3173 = vmatpush1.xpose.msra.mxu0 0.0
    %3174 = vmatprep.subr.mxu0 0.0
    %3175 = vmatpush1.xpose.msra.mxu0 0.0
    %3176 = vmatprep.subr.mxu0 0.0
    %3177 = vmatpush1.xpose.msra.mxu0 0.0
    %3178 = vmatprep.subr.mxu0 0.0
    %3179 = vmatpush1.xpose.msra.mxu0 0.0
    %3180 = vmatprep.subr.mxu0 0.0
    %3181 = vmatpush1.xpose.msra.mxu0 0.0
    %3182 = vmatprep.subr.mxu0 0.0
    %3183 = vmatpush1.xpose.msra.mxu0 0.0
    %3184 = vmatprep.subr.mxu0 0.0
    %3185 = vmatpush1.xpose.msra.mxu0 0.0
    %3186 = vmatprep.subr.mxu0 0.0
    %3187 = vmatpush1.xpose.msra.mxu0 0.0
    %3188 = vmatprep.subr.mxu0 0.0
    %3189 = vmatpush1.xpose.msra.mxu0 0.0
    %3190 = vmatprep.subr.mxu0 0.0
    %3191 = vmatpush1.xpose.msra.mxu0 0.0
    %3192 = vmatprep.subr.mxu0 0.0
    %3193 = vmatpush1.xpose.msra.mxu0 0.0
    %3194 = vmatprep.subr.mxu0 0.0
    %3195 = vmatpush1.xpose.msra.mxu0 0.0
    %3196 = vmatprep.subr.mxu0 0.0
    %3197 = vmatpush1.xpose.msra.mxu0 0.0
    %3198 = vmatprep.subr.mxu0 0.0
    %3199 = vmatpush1.xpose.msra.mxu0 0.0
    %3200 = vmatprep.subr.mxu0 0.0
    %3201 = vmatpush1.xpose.msra.mxu0 0.0
    %3202 = vmatprep.subr.mxu0 0.0
    %3203 = vmatpush1.xpose.msra.mxu0 0.0
    %3204 = vmatprep.subr.mxu0 0.0
    %3205 = vmatpush1.xpose.msra.mxu0 0.0
    %3206 = vmatprep.subr.mxu0 0.0
    %3207 = vmatpush1.xpose.msra.mxu0 0.0
    %3208 = vmatprep.subr.mxu0 0.0
    %3209 = vmatpush1.xpose.msra.mxu0 0.0
    %3210 = vmatprep.subr.mxu0 0.0
    %3211 = vmatpush1.xpose.msra.mxu0 0.0
    %3212 = vmatprep.subr.mxu0 0.0
    %3213 = vmatpush1.xpose.msra.mxu0 0.0
    %3214 = vmatprep.subr.mxu0 0.0
    %3215 = vmatpush1.xpose.msra.mxu0 0.0
    %3216 = vmatprep.subr.mxu0 0.0
    %3217 = vmatpush1.xpose.msra.mxu0 0.0
    %3218 = vmatprep.subr.mxu0 0.0
    %3219 = vmatpush1.xpose.msra.mxu0 0.0
    %3220 = vmatprep.subr.mxu0 0.0
    %3221 = vmatpush1.xpose.msra.mxu0 0.0
    %3222 = vmatprep.subr.mxu0 0.0
    %3223 = vmatpush1.xpose.msra.mxu0 0.0
    %3224 = vmatprep.subr.mxu0 0.0
    %3225 = vmatpush1.xpose.msra.mxu0 0.0
    %3226 = vmatprep.subr.mxu0 0.0
    %3227 = vmatpush1.xpose.msra.mxu0 0.0
    %3228 = vmatprep.mubr.f32.mxu0 0.0
    %3229 = vmatmul.mubr.f32.gmra.mrb[0].mxu0 %v3160
    %v3230 = vpop.f32.mrb[0].mxu0
    %v3231 = vadd.f32 %v752, %v3230
    %v3232 = vpop.f32.mrb[0].mxu0
    %3233 = vdwg.mxu0
    %v3234 = vsel %vm300, %v3153, -inf
    %3235 = vmax.xlane.f32.xlu0 %v3234
    %v3236 = vpop.xlane.xlu0 %3235
    %v3237 = vsel %vm300, %v3231, -inf
    %3238 = vmax.xlane.f32.xlu0 %v3237
    %v3239 = vpop.xlane.xlu0 %3238
    %v3240 = vsub.f32 %v3153, %v3236
    %v3241 = vsub.f32 %v3231, %v3239
    %v3242 = vmul.f32 %v3240, 1.442695
    %v3243 = vpow.pop %v3242
    %v3244 = vmul.f32 %v3241, 1.442695
    %v3245 = vpow.pop %v3244
    %v3246 = vsel %vm300, %v3243, 0.0
    %3247 = vadd.xlane.f32.xlu0 %v3246
    %v3248 = vpop.xlane.xlu0 %3247
    %v3249 = vsel %vm300, %v3245, 0.0
    %3250 = vadd.xlane.f32.xlu0 %v3249
    %v3251 = vpop.xlane.xlu0 %3250
    %v3252 = vrcp.pop %v3248
    %v3253 = vrcp.pop %v3251
    %v3254 = vmul.f32 %v3243, %v3252
    %v3255 = vmul.f32 %v3245, %v3253
    %3256 = vrot.lane.b32.xlu0 %v2738, 56
    %v3257 = vpop.permute.xlu0 %3256
    %v3260 = vsel %vm300, %v3254, 0
    %3262 = vmatprep.subr.mxu0 0.0
    %3263 = vmatpush1.msra.mxu0 %v3257
    %3264 = vmatprep.subr.mxu0 0.0
    %3265 = vmatpush1.msra.mxu0 0.0
    %3266 = vmatprep.subr.mxu0 0.0
    %3267 = vmatpush1.msra.mxu0 0.0
    %3268 = vmatprep.subr.mxu0 0.0
    %3269 = vmatpush1.msra.mxu0 0.0
    %3270 = vmatprep.subr.mxu0 0.0
    %3271 = vmatpush1.msra.mxu0 0.0
    %3272 = vmatprep.subr.mxu0 0.0
    %3273 = vmatpush1.msra.mxu0 0.0
    %3274 = vmatprep.subr.mxu0 0.0
    %3275 = vmatpush1.msra.mxu0 0.0
    %3276 = vmatprep.subr.mxu0 0.0
    %3277 = vmatpush1.msra.mxu0 0.0
    %3278 = vmatprep.subr.mxu0 0.0
    %3279 = vmatpush1.msra.mxu0 0.0
    %3280 = vmatprep.subr.mxu0 0.0
    %3281 = vmatpush1.msra.mxu0 0.0
    %3282 = vmatprep.subr.mxu0 0.0
    %3283 = vmatpush1.msra.mxu0 0.0
    %3284 = vmatprep.subr.mxu0 0.0
    %3285 = vmatpush1.msra.mxu0 0.0
    %3286 = vmatprep.subr.mxu0 0.0
    %3287 = vmatpush1.msra.mxu0 0.0
    %3288 = vmatprep.subr.mxu0 0.0
    %3289 = vmatpush1.msra.mxu0 0.0
    %3290 = vmatprep.subr.mxu0 0.0
    %3291 = vmatpush1.msra.mxu0 0.0
    %3292 = vmatprep.subr.mxu0 0.0
    %3293 = vmatpush1.msra.mxu0 0.0
    %3294 = vmatprep.subr.mxu0 0.0
    %3295 = vmatpush1.msra.mxu0 0.0
    %3296 = vmatprep.subr.mxu0 0.0
    %3297 = vmatpush1.msra.mxu0 0.0
    %3298 = vmatprep.subr.mxu0 0.0
    %3299 = vmatpush1.msra.mxu0 0.0
    %3300 = vmatprep.subr.mxu0 0.0
    %3301 = vmatpush1.msra.mxu0 0.0
    %3302 = vmatprep.subr.mxu0 0.0
    %3303 = vmatpush1.msra.mxu0 0.0
    %3304 = vmatprep.subr.mxu0 0.0
    %3305 = vmatpush1.msra.mxu0 0.0
    %3306 = vmatprep.subr.mxu0 0.0
    %3307 = vmatpush1.msra.mxu0 0.0
    %3308 = vmatprep.subr.mxu0 0.0
    %3309 = vmatpush1.msra.mxu0 0.0
    %3310 = vmatprep.subr.mxu0 0.0
    %3311 = vmatpush1.msra.mxu0 0.0
    %3312 = vmatprep.subr.mxu0 0.0
    %3313 = vmatpush1.msra.mxu0 0.0
    %3314 = vmatprep.subr.mxu0 0.0
    %3315 = vmatpush1.msra.mxu0 0.0
    %3316 = vmatprep.subr.mxu0 0.0
    %3317 = vmatpush1.msra.mxu0 0.0
    %3318 = vmatprep.subr.mxu0 0.0
    %3319 = vmatpush1.msra.mxu0 0.0
    %3320 = vmatprep.subr.mxu0 0.0
    %3321 = vmatpush1.msra.mxu0 0.0
    %3322 = vmatprep.subr.mxu0 0.0
    %3323 = vmatpush1.msra.mxu0 0.0
    %3324 = vmatprep.subr.mxu0 0.0
    %3325 = vmatpush1.msra.mxu0 0.0
    %3326 = vmatprep.mubr.f32.mxu0 0.0
    %3327 = vmatmul.mubr.f32.gmra.mrb[0].mxu0 %v3260
    %v3328 = vpop.f32.mrb[0].mxu0
    %v3329 = vadd.f32 0.0, %v3328
    %v3330 = vpop.f32.mrb[0].mxu0
    %3331 = vdwg.mxu0
    %3332 = vrot.lane.b32.xlu0 %v2743, 56
    %v3333 = vpop.permute.xlu0 %3332
    %v3336 = vsel %vm300, %v3255, 0
    %3338 = vmatprep.subr.mxu0 0.0
    %3339 = vmatpush1.msra.mxu0 %v3333
    %3340 = vmatprep.subr.mxu0 0.0
    %3341 = vmatpush1.msra.mxu0 0.0
    %3342 = vmatprep.subr.mxu0 0.0
    %3343 = vmatpush1.msra.mxu0 0.0
    %3344 = vmatprep.subr.mxu0 0.0
    %3345 = vmatpush1.msra.mxu0 0.0
    %3346 = vmatprep.subr.mxu0 0.0
    %3347 = vmatpush1.msra.mxu0 0.0
    %3348 = vmatprep.subr.mxu0 0.0
    %3349 = vmatpush1.msra.mxu0 0.0
    %3350 = vmatprep.subr.mxu0 0.0
    %3351 = vmatpush1.msra.mxu0 0.0
    %3352 = vmatprep.subr.mxu0 0.0
    %3353 = vmatpush1.msra.mxu0 0.0
    %3354 = vmatprep.subr.mxu0 0.0
    %3355 = vmatpush1.msra.mxu0 0.0
    %3356 = vmatprep.subr.mxu0 0.0
    %3357 = vmatpush1.msra.mxu0 0.0
    %3358 = vmatprep.subr.mxu0 0.0
    %3359 = vmatpush1.msra.mxu0 0.0
    %3360 = vmatprep.subr.mxu0 0.0
    %3361 = vmatpush1.msra.mxu0 0.0
    %3362 = vmatprep.subr.mxu0 0.0
    %3363 = vmatpush1.msra.mxu0 0.0
    %3364 = vmatprep.subr.mxu0 0.0
    %3365 = vmatpush1.msra.mxu0 0.0
    %3366 = vmatprep.subr.mxu0 0.0
    %3367 = vmatpush1.msra.mxu0 0.0
    %3368 = vmatprep.subr.mxu0 0.0
    %3369 = vmatpush1.msra.mxu0 0.0
    %3370 = vmatprep.subr.mxu0 0.0
    %3371 = vmatpush1.msra.mxu0 0.0
    %3372 = vmatprep.subr.mxu0 0.0
    %3373 = vmatpush1.msra.mxu0 0.0
    %3374 = vmatprep.subr.mxu0 0.0
    %3375 = vmatpush1.msra.mxu0 0.0
    %3376 = vmatprep.subr.mxu0 0.0
    %3377 = vmatpush1.msra.mxu0 0.0
    %3378 = vmatprep.subr.mxu0 0.0
    %3379 = vmatpush1.msra.mxu0 0.0
    %3380 = vmatprep.subr.mxu0 0.0
    %3381 = vmatpush1.msra.mxu0 0.0
    %3382 = vmatprep.subr.mxu0 0.0
    %3383 = vmatpush1.msra.mxu0 0.0
    %3384 = vmatprep.subr.mxu0 0.0
    %3385 = vmatpush1.msra.mxu0 0.0
    %3386 = vmatprep.subr.mxu0 0.0
    %3387 = vmatpush1.msra.mxu0 0.0
    %3388 = vmatprep.subr.mxu0 0.0
    %3389 = vmatpush1.msra.mxu0 0.0
    %3390 = vmatprep.subr.mxu0 0.0
    %3391 = vmatpush1.msra.mxu0 0.0
    %3392 = vmatprep.subr.mxu0 0.0
    %3393 = vmatpush1.msra.mxu0 0.0
    %3394 = vmatprep.subr.mxu0 0.0
    %3395 = vmatpush1.msra.mxu0 0.0
    %3396 = vmatprep.subr.mxu0 0.0
    %3397 = vmatpush1.msra.mxu0 0.0
    %3398 = vmatprep.subr.mxu0 0.0
    %3399 = vmatpush1.msra.mxu0 0.0
    %3400 = vmatprep.subr.mxu0 0.0
    %3401 = vmatpush1.msra.mxu0 0.0
    %3402 = vmatprep.mubr.f32.mxu0 0.0
    %3403 = vmatmul.mubr.f32.gmra.mrb[0].mxu0 %v3336
    %v3404 = vpop.f32.mrb[0].mxu0
    %v3405 = vadd.f32 0.0, %v3404
    %v3406 = vpop.f32.mrb[0].mxu0
    %3407 = vdwg.mxu0
    %3408 = vrot.lane.b32.xlu0 %v2746, 112
    %v3409 = vpop.permute.xlu0 %3408
    %3410 = vrot.lane.b32.xlu0 %v2738, 80
    %v3411 = vpop.permute.xlu0 %3410
    %v3412 = vsel %vm300, %v3409, 0
    %v3414 = vsel %vm300, %v3411, 0
    %3416 = vmatprep.subr.mxu0 0.0
    %3417 = vmatpush1.xpose.msra.mxu0 %v3414
    %3418 = vmatprep.subr.mxu0 0.0
    %3419 = vmatpush1.xpose.msra.mxu0 0.0
    %3420 = vmatprep.subr.mxu0 0.0
    %3421 = vmatpush1.xpose.msra.mxu0 0.0
    %3422 = vmatprep.subr.mxu0 0.0
    %3423 = vmatpush1.xpose.msra.mxu0 0.0
    %3424 = vmatprep.subr.mxu0 0.0
    %3425 = vmatpush1.xpose.msra.mxu0 0.0
    %3426 = vmatprep.subr.mxu0 0.0
    %3427 = vmatpush1.xpose.msra.mxu0 0.0
    %3428 = vmatprep.subr.mxu0 0.0
    %3429 = vmatpush1.xpose.msra.mxu0 0.0
    %3430 = vmatprep.subr.mxu0 0.0
    %3431 = vmatpush1.xpose.msra.mxu0 0.0
    %3432 = vmatprep.subr.mxu0 0.0
    %3433 = vmatpush1.xpose.msra.mxu0 0.0
    %3434 = vmatprep.subr.mxu0 0.0
    %3435 = vmatpush1.xpose.msra.mxu0 0.0
    %3436 = vmatprep.subr.mxu0 0.0
    %3437 = vmatpush1.xpose.msra.mxu0 0.0
    %3438 = vmatprep.subr.mxu0 0.0
    %3439 = vmatpush1.xpose.msra.mxu0 0.0
    %3440 = vmatprep.subr.mxu0 0.0
    %3441 = vmatpush1.xpose.msra.mxu0 0.0
    %3442 = vmatprep.subr.mxu0 0.0
    %3443 = vmatpush1.xpose.msra.mxu0 0.0
    %3444 = vmatprep.subr.mxu0 0.0
    %3445 = vmatpush1.xpose.msra.mxu0 0.0
    %3446 = vmatprep.subr.mxu0 0.0
    %3447 = vmatpush1.xpose.msra.mxu0 0.0
    %3448 = vmatprep.subr.mxu0 0.0
    %3449 = vmatpush1.xpose.msra.mxu0 0.0
    %3450 = vmatprep.subr.mxu0 0.0
    %3451 = vmatpush1.xpose.msra.mxu0 0.0
    %3452 = vmatprep.subr.mxu0 0.0
    %3453 = vmatpush1.xpose.msra.mxu0 0.0
    %3454 = vmatprep.subr.mxu0 0.0
    %3455 = vmatpush1.xpose.msra.mxu0 0.0
    %3456 = vmatprep.subr.mxu0 0.0
    %3457 = vmatpush1.xpose.msra.mxu0 0.0
    %3458 = vmatprep.subr.mxu0 0.0
    %3459 = vmatpush1.xpose.msra.mxu0 0.0
    %3460 = vmatprep.subr.mxu0 0.0
    %3461 = vmatpush1.xpose.msra.mxu0 0.0
    %3462 = vmatprep.subr.mxu0 0.0
    %3463 = vmatpush1.xpose.msra.mxu0 0.0
    %3464 = vmatprep.subr.mxu0 0.0
    %3465 = vmatpush1.xpose.msra.mxu0 0.0
    %3466 = vmatprep.subr.mxu0 0.0
    %3467 = vmatpush1.xpose.msra.mxu0 0.0
    %3468 = vmatprep.subr.mxu0 0.0
    %3469 = vmatpush1.xpose.msra.mxu0 0.0
    %3470 = vmatprep.subr.mxu0 0.0
    %3471 = vmatpush1.xpose.msra.mxu0 0.0
    %3472 = vmatprep.subr.mxu0 0.0
    %3473 = vmatpush1.xpose.msra.mxu0 0.0
    %3474 = vmatprep.subr.mxu0 0.0
    %3475 = vmatpush1.xpose.msra.mxu0 0.0
    %3476 = vmatprep.subr.mxu0 0.0
    %3477 = vmatpush1.xpose.msra.mxu0 0.0
    %3478 = vmatprep.subr.mxu0 0.0
    %3479 = vmatpush1.xpose.msra.mxu0 0.0
    %3480 = vmatprep.mubr.f32.mxu0 0.0
    %3481 = vmatmul.mubr.f32.gmra.mrb[0].mxu0 %v3412
    %v3482 = vpop.f32.mrb[0].mxu0
    %v3483 = vadd.f32 %v788, %v3482
    %v3484 = vpop.f32.mrb[0].mxu0
    %3485 = vdwg.mxu0
    %3486 = vrot.lane.b32.xlu0 %v2747, 112
    %v3487 = vpop.permute.xlu0 %3486
    %3488 = vrot.lane.b32.xlu0 %v2743, 80
    %v3489 = vpop.permute.xlu0 %3488
    %v3490 = vsel %vm300, %v3487, 0
    %v3492 = vsel %vm300, %v3489, 0
    %3494 = vmatprep.subr.mxu0 0.0
    %3495 = vmatpush1.xpose.msra.mxu0 %v3492
    %3496 = vmatprep.subr.mxu0 0.0
    %3497 = vmatpush1.xpose.msra.mxu0 0.0
    %3498 = vmatprep.subr.mxu0 0.0
    %3499 = vmatpush1.xpose.msra.mxu0 0.0
    %3500 = vmatprep.subr.mxu0 0.0
    %3501 = vmatpush1.xpose.msra.mxu0 0.0
    %3502 = vmatprep.subr.mxu0 0.0
    %3503 = vmatpush1.xpose.msra.mxu0 0.0
    %3504 = vmatprep.subr.mxu0 0.0
    %3505 = vmatpush1.xpose.msra.mxu0 0.0
    %3506 = vmatprep.subr.mxu0 0.0
    %3507 = vmatpush1.xpose.msra.mxu0 0.0
    %3508 = vmatprep.subr.mxu0 0.0
    %3509 = vmatpush1.xpose.msra.mxu0 0.0
    %3510 = vmatprep.subr.mxu0 0.0
    %3511 = vmatpush1.xpose.msra.mxu0 0.0
    %3512 = vmatprep.subr.mxu0 0.0
    %3513 = vmatpush1.xpose.msra.mxu0 0.0
    %3514 = vmatprep.subr.mxu0 0.0
    %3515 = vmatpush1.xpose.msra.mxu0 0.0
    %3516 = vmatprep.subr.mxu0 0.0
    %3517 = vmatpush1.xpose.msra.mxu0 0.0
    %3518 = vmatprep.subr.mxu0 0.0
    %3519 = vmatpush1.xpose.msra.mxu0 0.0
    %3520 = vmatprep.subr.mxu0 0.0
    %3521 = vmatpush1.xpose.msra.mxu0 0.0
    %3522 = vmatprep.subr.mxu0 0.0
    %3523 = vmatpush1.xpose.msra.mxu0 0.0
    %3524 = vmatprep.subr.mxu0 0.0
    %3525 = vmatpush1.xpose.msra.mxu0 0.0
    %3526 = vmatprep.subr.mxu0 0.0
    %3527 = vmatpush1.xpose.msra.mxu0 0.0
    %3528 = vmatprep.subr.mxu0 0.0
    %3529 = vmatpush1.xpose.msra.mxu0 0.0
    %3530 = vmatprep.subr.mxu0 0.0
    %3531 = vmatpush1.xpose.msra.mxu0 0.0
    %3532 = vmatprep.subr.mxu0 0.0
    %3533 = vmatpush1.xpose.msra.mxu0 0.0
    %3534 = vmatprep.subr.mxu0 0.0
    %3535 = vmatpush1.xpose.msra.mxu0 0.0
    %3536 = vmatprep.subr.mxu0 0.0
    %3537 = vmatpush1.xpose.msra.mxu0 0.0
    %3538 = vmatprep.subr.mxu0 0.0
    %3539 = vmatpush1.xpose.msra.mxu0 0.0
    %3540 = vmatprep.subr.mxu0 0.0
    %3541 = vmatpush1.xpose.msra.mxu0 0.0
    %3542 = vmatprep.subr.mxu0 0.0
    %3543 = vmatpush1.xpose.msra.mxu0 0.0
    %3544 = vmatprep.subr.mxu0 0.0
    %3545 = vmatpush1.xpose.msra.mxu0 0.0
    %3546 = vmatprep.subr.mxu0 0.0
    %3547 = vmatpush1.xpose.msra.mxu0 0.0
    %3548 = vmatprep.subr.mxu0 0.0
    %3549 = vmatpush1.xpose.msra.mxu0 0.0
    %3550 = vmatprep.subr.mxu0 0.0
    %3551 = vmatpush1.xpose.msra.mxu0 0.0
    %3552 = vmatprep.subr.mxu0 0.0
    %3553 = vmatpush1.xpose.msra.mxu0 0.0
    %3554 = vmatprep.subr.mxu0 0.0
    %3555 = vmatpush1.xpose.msra.mxu0 0.0
    %3556 = vmatprep.subr.mxu0 0.0
    %3557 = vmatpush1.xpose.msra.mxu0 0.0
    %3558 = vmatprep.mubr.f32.mxu0 0.0
    %3559 = vmatmul.mubr.f32.gmra.mrb[0].mxu0 %v3490
    %v3560 = vpop.f32.mrb[0].mxu0
    %v3561 = vadd.f32 %v789, %v3560
    %v3562 = vpop.f32.mrb[0].mxu0
    %3563 = vdwg.mxu0
    %v3564 = vsel %vm300, %v3483, -inf
    %3565 = vmax.xlane.f32.xlu0 %v3564
    %v3566 = vpop.xlane.xlu0 %3565
    %v3567 = vsel %vm300, %v3561, -inf
    %3568 = vmax.xlane.f32.xlu0 %v3567
    %v3569 = vpop.xlane.xlu0 %3568
    %v3570 = vsub.f32 %v3483, %v3566
    %v3571 = vsub.f32 %v3561, %v3569
    %v3572 = vmul.f32 %v3570, 1.442695
    %v3573 = vpow.pop %v3572
    %v3574 = vmul.f32 %v3571, 1.442695
    %v3575 = vpow.pop %v3574
    %v3576 = vsel %vm300, %v3573, 0.0
    %3577 = vadd.xlane.f32.xlu0 %v3576
    %v3578 = vpop.xlane.xlu0 %3577
    %v3579 = vsel %vm300, %v3575, 0.0
    %3580 = vadd.xlane.f32.xlu0 %v3579
    %v3581 = vpop.xlane.xlu0 %3580
    %v3582 = vrcp.pop %v3578
    %v3583 = vrcp.pop %v3581
    %v3584 = vmul.f32 %v3573, %v3582
    %v3585 = vmul.f32 %v3575, %v3583
    %3586 = vrot.lane.b32.xlu0 %v2738, 48
    %v3587 = vpop.permute.xlu0 %3586
    %v3590 = vsel %vm300, %v3584, 0
    %3592 = vmatprep.subr.mxu0 0.0
    %3593 = vmatpush1.msra.mxu0 %v3587
    %3594 = vmatprep.subr.mxu0 0.0
    %3595 = vmatpush1.msra.mxu0 0.0
    %3596 = vmatprep.subr.mxu0 0.0
    %3597 = vmatpush1.msra.mxu0 0.0
    %3598 = vmatprep.subr.mxu0 0.0
    %3599 = vmatpush1.msra.mxu0 0.0
    %3600 = vmatprep.subr.mxu0 0.0
    %3601 = vmatpush1.msra.mxu0 0.0
    %3602 = vmatprep.subr.mxu0 0.0
    %3603 = vmatpush1.msra.mxu0 0.0
    %3604 = vmatprep.subr.mxu0 0.0
    %3605 = vmatpush1.msra.mxu0 0.0
    %3606 = vmatprep.subr.mxu0 0.0
    %3607 = vmatpush1.msra.mxu0 0.0
    %3608 = vmatprep.subr.mxu0 0.0
    %3609 = vmatpush1.msra.mxu0 0.0
    %3610 = vmatprep.subr.mxu0 0.0
    %3611 = vmatpush1.msra.mxu0 0.0
    %3612 = vmatprep.subr.mxu0 0.0
    %3613 = vmatpush1.msra.mxu0 0.0
    %3614 = vmatprep.subr.mxu0 0.0
    %3615 = vmatpush1.msra.mxu0 0.0
    %3616 = vmatprep.subr.mxu0 0.0
    %3617 = vmatpush1.msra.mxu0 0.0
    %3618 = vmatprep.subr.mxu0 0.0
    %3619 = vmatpush1.msra.mxu0 0.0
    %3620 = vmatprep.subr.mxu0 0.0
    %3621 = vmatpush1.msra.mxu0 0.0
    %3622 = vmatprep.subr.mxu0 0.0
    %3623 = vmatpush1.msra.mxu0 0.0
    %3624 = vmatprep.subr.mxu0 0.0
    %3625 = vmatpush1.msra.mxu0 0.0
    %3626 = vmatprep.subr.mxu0 0.0
    %3627 = vmatpush1.msra.mxu0 0.0
    %3628 = vmatprep.subr.mxu0 0.0
    %3629 = vmatpush1.msra.mxu0 0.0
    %3630 = vmatprep.subr.mxu0 0.0
    %3631 = vmatpush1.msra.mxu0 0.0
    %3632 = vmatprep.subr.mxu0 0.0
    %3633 = vmatpush1.msra.mxu0 0.0
    %3634 = vmatprep.subr.mxu0 0.0
    %3635 = vmatpush1.msra.mxu0 0.0
    %3636 = vmatprep.subr.mxu0 0.0
    %3637 = vmatpush1.msra.mxu0 0.0
    %3638 = vmatprep.subr.mxu0 0.0
    %3639 = vmatpush1.msra.mxu0 0.0
    %3640 = vmatprep.subr.mxu0 0.0
    %3641 = vmatpush1.msra.mxu0 0.0
    %3642 = vmatprep.subr.mxu0 0.0
    %3643 = vmatpush1.msra.mxu0 0.0
    %3644 = vmatprep.subr.mxu0 0.0
    %3645 = vmatpush1.msra.mxu0 0.0
    %3646 = vmatprep.subr.mxu0 0.0
    %3647 = vmatpush1.msra.mxu0 0.0
    %3648 = vmatprep.subr.mxu0 0.0
    %3649 = vmatpush1.msra.mxu0 0.0
    %3650 = vmatprep.subr.mxu0 0.0
    %3651 = vmatpush1.msra.mxu0 0.0
    %3652 = vmatprep.subr.mxu0 0.0
    %3653 = vmatpush1.msra.mxu0 0.0
    %3654 = vmatprep.subr.mxu0 0.0
    %3655 = vmatpush1.msra.mxu0 0.0
    %3656 = vmatprep.mubr.f32.mxu0 0.0
    %3657 = vmatmul.mubr.f32.gmra.mrb[0].mxu0 %v3590
    %v3658 = vpop.f32.mrb[0].mxu0
    %v3659 = vadd.f32 0.0, %v3658
    %v3660 = vpop.f32.mrb[0].mxu0
    %3661 = vdwg.mxu0
    %3662 = vrot.lane.b32.xlu0 %v2743, 48
    %v3663 = vpop.permute.xlu0 %3662
    %v3666 = vsel %vm300, %v3585, 0
    %3668 = vmatprep.subr.mxu0 0.0
    %3669 = vmatpush1.msra.mxu0 %v3663
    %3670 = vmatprep.subr.mxu0 0.0
    %3671 = vmatpush1.msra.mxu0 0.0
    %3672 = vmatprep.subr.mxu0 0.0
    %3673 = vmatpush1.msra.mxu0 0.0
    %3674 = vmatprep.subr.mxu0 0.0
    %3675 = vmatpush1.msra.mxu0 0.0
    %3676 = vmatprep.subr.mxu0 0.0
    %3677 = vmatpush1.msra.mxu0 0.0
    %3678 = vmatprep.subr.mxu0 0.0
    %3679 = vmatpush1.msra.mxu0 0.0
    %3680 = vmatprep.subr.mxu0 0.0
    %3681 = vmatpush1.msra.mxu0 0.0
    %3682 = vmatprep.subr.mxu0 0.0
    %3683 = vmatpush1.msra.mxu0 0.0
    %3684 = vmatprep.subr.mxu0 0.0
    %3685 = vmatpush1.msra.mxu0 0.0
    %3686 = vmatprep.subr.mxu0 0.0
    %3687 = vmatpush1.msra.mxu0 0.0
    %3688 = vmatprep.subr.mxu0 0.0
    %3689 = vmatpush1.msra.mxu0 0.0
    %3690 = vmatprep.subr.mxu0 0.0
    %3691 = vmatpush1.msra.mxu0 0.0
    %3692 = vmatprep.subr.mxu0 0.0
    %3693 = vmatpush1.msra.mxu0 0.0
    %3694 = vmatprep.subr.mxu0 0.0
    %3695 = vmatpush1.msra.mxu0 0.0
    %3696 = vmatprep.subr.mxu0 0.0
    %3697 = vmatpush1.msra.mxu0 0.0
    %3698 = vmatprep.subr.mxu0 0.0
    %3699 = vmatpush1.msra.mxu0 0.0
    %3700 = vmatprep.subr.mxu0 0.0
    %3701 = vmatpush1.msra.mxu0 0.0
    %3702 = vmatprep.subr.mxu0 0.0
    %3703 = vmatpush1.msra.mxu0 0.0
    %3704 = vmatprep.subr.mxu0 0.0
    %3705 = vmatpush1.msra.mxu0 0.0
    %3706 = vmatprep.subr.mxu0 0.0
    %3707 = vmatpush1.msra.mxu0 0.0
    %3708 = vmatprep.subr.mxu0 0.0
    %3709 = vmatpush1.msra.mxu0 0.0
    %3710 = vmatprep.subr.mxu0 0.0
    %3711 = vmatpush1.msra.mxu0 0.0
    %3712 = vmatprep.subr.mxu0 0.0
    %3713 = vmatpush1.msra.mxu0 0.0
    %3714 = vmatprep.subr.mxu0 0.0
    %3715 = vmatpush1.msra.mxu0 0.0
    %3716 = vmatprep.subr.mxu0 0.0
    %3717 = vmatpush1.msra.mxu0 0.0
    %3718 = vmatprep.subr.mxu0 0.0
    %3719 = vmatpush1.msra.mxu0 0.0
    %3720 = vmatprep.subr.mxu0 0.0
    %3721 = vmatpush1.msra.mxu0 0.0
    %3722 = vmatprep.subr.mxu0 0.0
    %3723 = vmatpush1.msra.mxu0 0.0
    %3724 = vmatprep.subr.mxu0 0.0
    %3725 = vmatpush1.msra.mxu0 0.0
    %3726 = vmatprep.subr.mxu0 0.0
    %3727 = vmatpush1.msra.mxu0 0.0
    %3728 = vmatprep.subr.mxu0 0.0
    %3729 = vmatpush1.msra.mxu0 0.0
    %3730 = vmatprep.subr.mxu0 0.0
    %3731 = vmatpush1.msra.mxu0 0.0
    %3732 = vmatprep.mubr.f32.mxu0 0.0
    %3733 = vmatmul.mubr.f32.gmra.mrb[0].mxu0 %v3666
    %v3734 = vpop.f32.mrb[0].mxu0
    %v3735 = vadd.f32 0.0, %v3734
    %v3736 = vpop.f32.mrb[0].mxu0
    %3737 = vdwg.mxu0
    %3738 = vrot.lane.b32.xlu0 %v2746, 104
    %v3739 = vpop.permute.xlu0 %3738
    %3740 = vrot.lane.b32.xlu0 %v2738, 72
    %v3741 = vpop.permute.xlu0 %3740
    %v3742 = vsel %vm300, %v3739, 0
    %v3744 = vsel %vm300, %v3741, 0
    %3746 = vmatprep.subr.mxu0 0.0
    %3747 = vmatpush1.xpose.msra.mxu0 %v3744
    %3748 = vmatprep.subr.mxu0 0.0
    %3749 = vmatpush1.xpose.msra.mxu0 0.0
    %3750 = vmatprep.subr.mxu0 0.0
    %3751 = vmatpush1.xpose.msra.mxu0 0.0
    %3752 = vmatprep.subr.mxu0 0.0
    %3753 = vmatpush1.xpose.msra.mxu0 0.0
    %3754 = vmatprep.subr.mxu0 0.0
    %3755 = vmatpush1.xpose.msra.mxu0 0.0
    %3756 = vmatprep.subr.mxu0 0.0
    %3757 = vmatpush1.xpose.msra.mxu0 0.0
    %3758 = vmatprep.subr.mxu0 0.0
    %3759 = vmatpush1.xpose.msra.mxu0 0.0
    %3760 = vmatprep.subr.mxu0 0.0
    %3761 = vmatpush1.xpose.msra.mxu0 0.0
    %3762 = vmatprep.subr.mxu0 0.0
    %3763 = vmatpush1.xpose.msra.mxu0 0.0
    %3764 = vmatprep.subr.mxu0 0.0
    %3765 = vmatpush1.xpose.msra.mxu0 0.0
    %3766 = vmatprep.subr.mxu0 0.0
    %3767 = vmatpush1.xpose.msra.mxu0 0.0
    %3768 = vmatprep.subr.mxu0 0.0
    %3769 = vmatpush1.xpose.msra.mxu0 0.0
    %3770 = vmatprep.subr.mxu0 0.0
    %3771 = vmatpush1.xpose.msra.mxu0 0.0
    %3772 = vmatprep.subr.mxu0 0.0
    %3773 = vmatpush1.xpose.msra.mxu0 0.0
    %3774 = vmatprep.subr.mxu0 0.0
    %3775 = vmatpush1.xpose.msra.mxu0 0.0
    %3776 = vmatprep.subr.mxu0 0.0
    %3777 = vmatpush1.xpose.msra.mxu0 0.0
    %3778 = vmatprep.subr.mxu0 0.0
    %3779 = vmatpush1.xpose.msra.mxu0 0.0
    %3780 = vmatprep.subr.mxu0 0.0
    %3781 = vmatpush1.xpose.msra.mxu0 0.0
    %3782 = vmatprep.subr.mxu0 0.0
    %3783 = vmatpush1.xpose.msra.mxu0 0.0
    %3784 = vmatprep.subr.mxu0 0.0
    %3785 = vmatpush1.xpose.msra.mxu0 0.0
    %3786 = vmatprep.subr.mxu0 0.0
    %3787 = vmatpush1.xpose.msra.mxu0 0.0
    %3788 = vmatprep.subr.mxu0 0.0
    %3789 = vmatpush1.xpose.msra.mxu0 0.0
    %3790 = vmatprep.subr.mxu0 0.0
    %3791 = vmatpush1.xpose.msra.mxu0 0.0
    %3792 = vmatprep.subr.mxu0 0.0
    %3793 = vmatpush1.xpose.msra.mxu0 0.0
    %3794 = vmatprep.subr.mxu0 0.0
    %3795 = vmatpush1.xpose.msra.mxu0 0.0
    %3796 = vmatprep.subr.mxu0 0.0
    %3797 = vmatpush1.xpose.msra.mxu0 0.0
    %3798 = vmatprep.subr.mxu0 0.0
    %3799 = vmatpush1.xpose.msra.mxu0 0.0
    %3800 = vmatprep.subr.mxu0 0.0
    %3801 = vmatpush1.xpose.msra.mxu0 0.0
    %3802 = vmatprep.subr.mxu0 0.0
    %3803 = vmatpush1.xpose.msra.mxu0 0.0
    %3804 = vmatprep.subr.mxu0 0.0
    %3805 = vmatpush1.xpose.msra.mxu0 0.0
    %3806 = vmatprep.subr.mxu0 0.0
    %3807 = vmatpush1.xpose.msra.mxu0 0.0
    %3808 = vmatprep.subr.mxu0 0.0
    %3809 = vmatpush1.xpose.msra.mxu0 0.0
    %3810 = vmatprep.mubr.f32.mxu0 0.0
    %3811 = vmatmul.mubr.f32.gmra.mrb[0].mxu0 %v3742
    %v3812 = vpop.f32.mrb[0].mxu0
    %v3813 = vadd.f32 %v825, %v3812
    %v3814 = vpop.f32.mrb[0].mxu0
    %3815 = vdwg.mxu0
    %3816 = vrot.lane.b32.xlu0 %v2747, 104
    %v3817 = vpop.permute.xlu0 %3816
    %3818 = vrot.lane.b32.xlu0 %v2743, 72
    %v3819 = vpop.permute.xlu0 %3818
    %v3820 = vsel %vm300, %v3817, 0
    %v3822 = vsel %vm300, %v3819, 0
    %3824 = vmatprep.subr.mxu0 0.0
    %3825 = vmatpush1.xpose.msra.mxu0 %v3822
    %3826 = vmatprep.subr.mxu0 0.0
    %3827 = vmatpush1.xpose.msra.mxu0 0.0
    %3828 = vmatprep.subr.mxu0 0.0
    %3829 = vmatpush1.xpose.msra.mxu0 0.0
    %3830 = vmatprep.subr.mxu0 0.0
    %3831 = vmatpush1.xpose.msra.mxu0 0.0
    %3832 = vmatprep.subr.mxu0 0.0
    %3833 = vmatpush1.xpose.msra.mxu0 0.0
    %3834 = vmatprep.subr.mxu0 0.0
    %3835 = vmatpush1.xpose.msra.mxu0 0.0
    %3836 = vmatprep.subr.mxu0 0.0
    %3837 = vmatpush1.xpose.msra.mxu0 0.0
    %3838 = vmatprep.subr.mxu0 0.0
    %3839 = vmatpush1.xpose.msra.mxu0 0.0
    %3840 = vmatprep.subr.mxu0 0.0
    %3841 = vmatpush1.xpose.msra.mxu0 0.0
    %3842 = vmatprep.subr.mxu0 0.0
    %3843 = vmatpush1.xpose.msra.mxu0 0.0
    %3844 = vmatprep.subr.mxu0 0.0
    %3845 = vmatpush1.xpose.msra.mxu0 0.0
    %3846 = vmatprep.subr.mxu0 0.0
    %3847 = vmatpush1.xpose.msra.mxu0 0.0
    %3848 = vmatprep.subr.mxu0 0.0
    %3849 = vmatpush1.xpose.msra.mxu0 0.0
    %3850 = vmatprep.subr.mxu0 0.0
    %3851 = vmatpush1.xpose.msra.mxu0 0.0
    %3852 = vmatprep.subr.mxu0 0.0
    %3853 = vmatpush1.xpose.msra.mxu0 0.0
    %3854 = vmatprep.subr.mxu0 0.0
    %3855 = vmatpush1.xpose.msra.mxu0 0.0
    %3856 = vmatprep.subr.mxu0 0.0
    %3857 = vmatpush1.xpose.msra.mxu0 0.0
    %3858 = vmatprep.subr.mxu0 0.0
    %3859 = vmatpush1.xpose.msra.mxu0 0.0
    %3860 = vmatprep.subr.mxu0 0.0
    %3861 = vmatpush1.xpose.msra.mxu0 0.0
    %3862 = vmatprep.subr.mxu0 0.0
    %3863 = vmatpush1.xpose.msra.mxu0 0.0
    %3864 = vmatprep.subr.mxu0 0.0
    %3865 = vmatpush1.xpose.msra.mxu0 0.0
    %3866 = vmatprep.subr.mxu0 0.0
    %3867 = vmatpush1.xpose.msra.mxu0 0.0
    %3868 = vmatprep.subr.mxu0 0.0
    %3869 = vmatpush1.xpose.msra.mxu0 0.0
    %3870 = vmatprep.subr.mxu0 0.0
    %3871 = vmatpush1.xpose.msra.mxu0 0.0
    %3872 = vmatprep.subr.mxu0 0.0
    %3873 = vmatpush1.xpose.msra.mxu0 0.0
    %3874 = vmatprep.subr.mxu0 0.0
    %3875 = vmatpush1.xpose.msra.mxu0 0.0
    %3876 = vmatprep.subr.mxu0 0.0
    %3877 = vmatpush1.xpose.msra.mxu0 0.0
    %3878 = vmatprep.subr.mxu0 0.0
    %3879 = vmatpush1.xpose.msra.mxu0 0.0
    %3880 = vmatprep.subr.mxu0 0.0
    %3881 = vmatpush1.xpose.msra.mxu0 0.0
    %3882 = vmatprep.subr.mxu0 0.0
    %3883 = vmatpush1.xpose.msra.mxu0 0.0
    %3884 = vmatprep.subr.mxu0 0.0
    %3885 = vmatpush1.xpose.msra.mxu0 0.0
    %3886 = vmatprep.subr.mxu0 0.0
    %3887 = vmatpush1.xpose.msra.mxu0 0.0
    %3888 = vmatprep.mubr.f32.mxu0 0.0
    %3889 = vmatmul.mubr.f32.gmra.mrb[0].mxu0 %v3820
    %v3890 = vpop.f32.mrb[0].mxu0
    %v3891 = vadd.f32 %v826, %v3890
    %v3892 = vpop.f32.mrb[0].mxu0
    %3893 = vdwg.mxu0
    %v3894 = vsel %vm300, %v3813, -inf
    %3895 = vmax.xlane.f32.xlu0 %v3894
    %v3896 = vpop.xlane.xlu0 %3895
    %v3897 = vsel %vm300, %v3891, -inf
    %3898 = vmax.xlane.f32.xlu0 %v3897
    %v3899 = vpop.xlane.xlu0 %3898
    %v3900 = vsub.f32 %v3813, %v3896
    %v3901 = vsub.f32 %v3891, %v3899
    %v3902 = vmul.f32 %v3900, 1.442695
    %v3903 = vpow.pop %v3902
    %v3904 = vmul.f32 %v3901, 1.442695
    %v3905 = vpow.pop %v3904
    %v3906 = vsel %vm300, %v3903, 0.0
    %3907 = vadd.xlane.f32.xlu0 %v3906
    %v3908 = vpop.xlane.xlu0 %3907
    %v3909 = vsel %vm300, %v3905, 0.0
    %3910 = vadd.xlane.f32.xlu0 %v3909
    %v3911 = vpop.xlane.xlu0 %3910
    %v3912 = vrcp.pop %v3908
    %v3913 = vrcp.pop %v3911
    %v3914 = vmul.f32 %v3903, %v3912
    %v3915 = vmul.f32 %v3905, %v3913
    %3916 = vrot.lane.b32.xlu0 %v2738, 40
    %v3917 = vpop.permute.xlu0 %3916
    %v3920 = vsel %vm300, %v3914, 0
    %3922 = vmatprep.subr.mxu0 0.0
    %3923 = vmatpush1.msra.mxu0 %v3917
    %3924 = vmatprep.subr.mxu0 0.0
    %3925 = vmatpush1.msra.mxu0 0.0
    %3926 = vmatprep.subr.mxu0 0.0
    %3927 = vmatpush1.msra.mxu0 0.0
    %3928 = vmatprep.subr.mxu0 0.0
    %3929 = vmatpush1.msra.mxu0 0.0
    %3930 = vmatprep.subr.mxu0 0.0
    %3931 = vmatpush1.msra.mxu0 0.0
    %3932 = vmatprep.subr.mxu0 0.0
    %3933 = vmatpush1.msra.mxu0 0.0
    %3934 = vmatprep.subr.mxu0 0.0
    %3935 = vmatpush1.msra.mxu0 0.0
    %3936 = vmatprep.subr.mxu0 0.0
    %3937 = vmatpush1.msra.mxu0 0.0
    %3938 = vmatprep.subr.mxu0 0.0
    %3939 = vmatpush1.msra.mxu0 0.0
    %3940 = vmatprep.subr.mxu0 0.0
    %3941 = vmatpush1.msra.mxu0 0.0
    %3942 = vmatprep.subr.mxu0 0.0
    %3943 = vmatpush1.msra.mxu0 0.0
    %3944 = vmatprep.subr.mxu0 0.0
    %3945 = vmatpush1.msra.mxu0 0.0
    %3946 = vmatprep.subr.mxu0 0.0
    %3947 = vmatpush1.msra.mxu0 0.0
    %3948 = vmatprep.subr.mxu0 0.0
    %3949 = vmatpush1.msra.mxu0 0.0
    %3950 = vmatprep.subr.mxu0 0.0
    %3951 = vmatpush1.msra.mxu0 0.0
    %3952 = vmatprep.subr.mxu0 0.0
    %3953 = vmatpush1.msra.mxu0 0.0
    %3954 = vmatprep.subr.mxu0 0.0
    %3955 = vmatpush1.msra.mxu0 0.0
    %3956 = vmatprep.subr.mxu0 0.0
    %3957 = vmatpush1.msra.mxu0 0.0
    %3958 = vmatprep.subr.mxu0 0.0
    %3959 = vmatpush1.msra.mxu0 0.0
    %3960 = vmatprep.subr.mxu0 0.0
    %3961 = vmatpush1.msra.mxu0 0.0
    %3962 = vmatprep.subr.mxu0 0.0
    %3963 = vmatpush1.msra.mxu0 0.0
    %3964 = vmatprep.subr.mxu0 0.0
    %3965 = vmatpush1.msra.mxu0 0.0
    %3966 = vmatprep.subr.mxu0 0.0
    %3967 = vmatpush1.msra.mxu0 0.0
    %3968 = vmatprep.subr.mxu0 0.0
    %3969 = vmatpush1.msra.mxu0 0.0
    %3970 = vmatprep.subr.mxu0 0.0
    %3971 = vmatpush1.msra.mxu0 0.0
    %3972 = vmatprep.subr.mxu0 0.0
    %3973 = vmatpush1.msra.mxu0 0.0
    %3974 = vmatprep.subr.mxu0 0.0
    %3975 = vmatpush1.msra.mxu0 0.0
    %3976 = vmatprep.subr.mxu0 0.0
    %3977 = vmatpush1.msra.mxu0 0.0
    %3978 = vmatprep.subr.mxu0 0.0
    %3979 = vmatpush1.msra.mxu0 0.0
    %3980 = vmatprep.subr.mxu0 0.0
    %3981 = vmatpush1.msra.mxu0 0.0
    %3982 = vmatprep.subr.mxu0 0.0
    %3983 = vmatpush1.msra.mxu0 0.0
    %3984 = vmatprep.subr.mxu0 0.0
    %3985 = vmatpush1.msra.mxu0 0.0
    %3986 = vmatprep.mubr.f32.mxu0 0.0
    %3987 = vmatmul.mubr.f32.gmra.mrb[0].mxu0 %v3920
    %v3988 = vpop.f32.mrb[0].mxu0
    %v3989 = vadd.f32 0.0, %v3988
    %v3990 = vpop.f32.mrb[0].mxu0
    %3991 = vdwg.mxu0
    %3992 = vrot.lane.b32.xlu0 %v2743, 40
    %v3993 = vpop.permute.xlu0 %3992
    %v3996 = vsel %vm300, %v3915, 0
    %3998 = vmatprep.subr.mxu0 0.0
    %3999 = vmatpush1.msra.mxu0 %v3993
    %4000 = vmatprep.subr.mxu0 0.0
    %4001 = vmatpush1.msra.mxu0 0.0
    %4002 = vmatprep.subr.mxu0 0.0
    %4003 = vmatpush1.msra.mxu0 0.0
    %4004 = vmatprep.subr.mxu0 0.0
    %4005 = vmatpush1.msra.mxu0 0.0
    %4006 = vmatprep.subr.mxu0 0.0
    %4007 = vmatpush1.msra.mxu0 0.0
    %4008 = vmatprep.subr.mxu0 0.0
    %4009 = vmatpush1.msra.mxu0 0.0
    %4010 = vmatprep.subr.mxu0 0.0
    %4011 = vmatpush1.msra.mxu0 0.0
    %4012 = vmatprep.subr.mxu0 0.0
    %4013 = vmatpush1.msra.mxu0 0.0
    %4014 = vmatprep.subr.mxu0 0.0
    %4015 = vmatpush1.msra.mxu0 0.0
    %4016 = vmatprep.subr.mxu0 0.0
    %4017 = vmatpush1.msra.mxu0 0.0
    %4018 = vmatprep.subr.mxu0 0.0
    %4019 = vmatpush1.msra.mxu0 0.0
    %4020 = vmatprep.subr.mxu0 0.0
    %4021 = vmatpush1.msra.mxu0 0.0
    %4022 = vmatprep.subr.mxu0 0.0
    %4023 = vmatpush1.msra.mxu0 0.0
    %4024 = vmatprep.subr.mxu0 0.0
    %4025 = vmatpush1.msra.mxu0 0.0
    %4026 = vmatprep.subr.mxu0 0.0
    %4027 = vmatpush1.msra.mxu0 0.0
    %4028 = vmatprep.subr.mxu0 0.0
    %4029 = vmatpush1.msra.mxu0 0.0
    %4030 = vmatprep.subr.mxu0 0.0
    %4031 = vmatpush1.msra.mxu0 0.0
    %4032 = vmatprep.subr.mxu0 0.0
    %4033 = vmatpush1.msra.mxu0 0.0
    %4034 = vmatprep.subr.mxu0 0.0
    %4035 = vmatpush1.msra.mxu0 0.0
    %4036 = vmatprep.subr.mxu0 0.0
    %4037 = vmatpush1.msra.mxu0 0.0
    %4038 = vmatprep.subr.mxu0 0.0
    %4039 = vmatpush1.msra.mxu0 0.0
    %4040 = vmatprep.subr.mxu0 0.0
    %4041 = vmatpush1.msra.mxu0 0.0
    %4042 = vmatprep.subr.mxu0 0.0
    %4043 = vmatpush1.msra.mxu0 0.0
    %4044 = vmatprep.subr.mxu0 0.0
    %4045 = vmatpush1.msra.mxu0 0.0
    %4046 = vmatprep.subr.mxu0 0.0
    %4047 = vmatpush1.msra.mxu0 0.0
    %4048 = vmatprep.subr.mxu0 0.0
    %4049 = vmatpush1.msra.mxu0 0.0
    %4050 = vmatprep.subr.mxu0 0.0
    %4051 = vmatpush1.msra.mxu0 0.0
    %4052 = vmatprep.subr.mxu0 0.0
    %4053 = vmatpush1.msra.mxu0 0.0
    %4054 = vmatprep.subr.mxu0 0.0
    %4055 = vmatpush1.msra.mxu0 0.0
    %4056 = vmatprep.subr.mxu0 0.0
    %4057 = vmatpush1.msra.mxu0 0.0
    %4058 = vmatprep.subr.mxu0 0.0
    %4059 = vmatpush1.msra.mxu0 0.0
    %4060 = vmatprep.subr.mxu0 0.0
    %4061 = vmatpush1.msra.mxu0 0.0
    %4062 = vmatprep.mubr.f32.mxu0 0.0
    %4063 = vmatmul.mubr.f32.gmra.mrb[0].mxu0 %v3996
    %v4064 = vpop.f32.mrb[0].mxu0
    %v4065 = vadd.f32 0.0, %v4064
    %v4066 = vpop.f32.mrb[0].mxu0
    %4067 = vdwg.mxu0
    %4070 = vrot.lane.b32.xlu0 %v3329, 8
    %v4071 = vpop.permute.xlu0 %4070
    %4072 = vrot.lane.b32.xlu0 %v3405, 8
    %v4073 = vpop.permute.xlu0 %4072
    %4078 = vrot.lane.b32.xlu0 %v3659, 16
    %v4079 = vpop.permute.xlu0 %4078
    %4080 = vrot.lane.b32.xlu0 %v3735, 16
    %v4081 = vpop.permute.xlu0 %4080
    %4086 = vrot.lane.b32.xlu0 %v3989, 24
    %v4087 = vpop.permute.xlu0 %4086
    %4088 = vrot.lane.b32.xlu0 %v4065, 24
    %v4089 = vpop.permute.xlu0 %4088
    %v4092 = vsel %vm300, %v2999, %v4071
    %v4093 = vsel %vm300, %v3075, %v4073
    %v4094 = vsel %vm2269, %v4092, %v4079
    %v4095 = vsel %vm2269, %v4093, %v4081
    %v4096 = vsel %vm2272, %v4094, %v4087
    %v4097 = vsel %vm2272, %v4095, %v4089
    %s4098 = scalar_lea.vmem %s11, 32
    %v4099 = vld [vmem:[%s4098] sm:$0xff]
    %v4100 = vld [vmem:[%s4098 + $0x8] sm:$0xff]
    %v4101 = vld [vmem:[%s4098 + $0x10] sm:$0xff]
    %v4102 = vld [vmem:[%s4098 + $0x18] sm:$0xff]
    %s4103 = scalar_lea.vmem %s12, 1
    %v4104 = vld [vmem:[%s4103] sm:$0x1]
    %v4106 = vlaneseq
    %v4107 = vshrl.u32 %v4106, 7
    %v4108 = vsub.s32 0, %v4107
    %v4109 = vrot.slane %v4104, %v4108
    %v4112 = vsel %vm75, %v4096, 0
    %v4115 = vsel %vm75, %v4097, 0
    %4117 = vmatprep.subr.mxu0 0.0
    %4118 = vmatpush1.msra.mxu0 %v4099
    %4119 = vmatprep.subr.mxu0 0.0
    %4120 = vmatpush1.msra.mxu0 %v4100
    %4121 = vmatprep.subr.mxu0 0.0
    %4122 = vmatpush1.msra.mxu0 %v4101
    %4123 = vmatprep.subr.mxu0 0.0
    %4124 = vmatpush1.msra.mxu0 %v4102
    %4125 = vmatprep.subr.mxu0 0.0
    %4126 = vmatpush1.msra.mxu0 0.0
    %4127 = vmatprep.subr.mxu0 0.0
    %4128 = vmatpush1.msra.mxu0 0.0
    %4129 = vmatprep.subr.mxu0 0.0
    %4130 = vmatpush1.msra.mxu0 0.0
    %4131 = vmatprep.subr.mxu0 0.0
    %4132 = vmatpush1.msra.mxu0 0.0
    %4133 = vmatprep.subr.mxu0 0.0
    %4134 = vmatpush1.msra.mxu0 0.0
    %4135 = vmatprep.subr.mxu0 0.0
    %4136 = vmatpush1.msra.mxu0 0.0
    %4137 = vmatprep.subr.mxu0 0.0
    %4138 = vmatpush1.msra.mxu0 0.0
    %4139 = vmatprep.subr.mxu0 0.0
    %4140 = vmatpush1.msra.mxu0 0.0
    %4141 = vmatprep.subr.mxu0 0.0
    %4142 = vmatpush1.msra.mxu0 0.0
    %4143 = vmatprep.subr.mxu0 0.0
    %4144 = vmatpush1.msra.mxu0 0.0
    %4145 = vmatprep.subr.mxu0 0.0
    %4146 = vmatpush1.msra.mxu0 0.0
    %4147 = vmatprep.subr.mxu0 0.0
    %4148 = vmatpush1.msra.mxu0 0.0
    %4149 = vmatprep.subr.mxu0 0.0
    %4150 = vmatpush1.msra.mxu0 0.0
    %4151 = vmatprep.subr.mxu0 0.0
    %4152 = vmatpush1.msra.mxu0 0.0
    %4153 = vmatprep.subr.mxu0 0.0
    %4154 = vmatpush1.msra.mxu0 0.0
    %4155 = vmatprep.subr.mxu0 0.0
    %4156 = vmatpush1.msra.mxu0 0.0
    %4157 = vmatprep.subr.mxu0 0.0
    %4158 = vmatpush1.msra.mxu0 0.0
    %4159 = vmatprep.subr.mxu0 0.0
    %4160 = vmatpush1.msra.mxu0 0.0
    %4161 = vmatprep.subr.mxu0 0.0
    %4162 = vmatpush1.msra.mxu0 0.0
    %4163 = vmatprep.subr.mxu0 0.0
    %4164 = vmatpush1.msra.mxu0 0.0
    %4165 = vmatprep.subr.mxu0 0.0
    %4166 = vmatpush1.msra.mxu0 0.0
    %4167 = vmatprep.subr.mxu0 0.0
    %4168 = vmatpush1.msra.mxu0 0.0
    %4169 = vmatprep.subr.mxu0 0.0
    %4170 = vmatpush1.msra.mxu0 0.0
    %4171 = vmatprep.subr.mxu0 0.0
    %4172 = vmatpush1.msra.mxu0 0.0
    %4173 = vmatprep.subr.mxu0 0.0
    %4174 = vmatpush1.msra.mxu0 0.0
    %4175 = vmatprep.subr.mxu0 0.0
    %4176 = vmatpush1.msra.mxu0 0.0
    %4177 = vmatprep.subr.mxu0 0.0
    %4178 = vmatpush1.msra.mxu0 0.0
    %4179 = vmatprep.subr.mxu0 0.0
    %4180 = vmatpush1.msra.mxu0 0.0
    %4181 = vmatprep.mubr.f32.mxu0 0.0
    %4182 = vmatmul.mubr.f32.gmra.mrb[0].mxu0 %v4112
    %v4183 = vpop.f32.mrb[0].mxu0
    %v4184 = vadd.f32 %v4109, %v4183
    %v4185 = vpop.f32.mrb[0].mxu0
    %4186 = vmatprep.mubr.f32.mxu0 0.0
    %4187 = vmatmul.mubr.f32.gmra.mrb[0].mxu0 %v4115
    %v4188 = vpop.f32.mrb[0].mxu0
    %v4189 = vadd.f32 %v4109, %v4188
    %v4190 = vpop.f32.mrb[0].mxu0
    %4191 = vdwg.mxu0
    %v4192 = vadd.f32 %v2648, %v4184
    %v4193 = vadd.f32 %v2649, %v4189
    %s4194 = scalar_lea.vmem %s13, 1
    %v4195 = vld [vmem:[%s4194] sm:$0x1]
    %s4196 = scalar_lea.vmem %s14, 1
    %v4197 = vld [vmem:[%s4196] sm:$0x1]
    %v4198 = vsel %vm75, %v4192, 0.0
    %4199 = vadd.xlane.f32.xlu0 %v4198
    %v4200 = vpop.xlane.xlu0 %4199
    %v4201 = vsel %vm75, %v4193, 0.0
    %4202 = vadd.xlane.f32.xlu0 %v4201
    %v4203 = vpop.xlane.xlu0 %4202
    %v4204 = vmul.f32 %v4200, %v83
    %v4205 = vmul.f32 %v4203, %v83
    %v4206 = vsub.f32 %v4192, %v4204
    %v4207 = vsub.f32 %v4193, %v4205
    %v4208 = vmul.f32 %v4206, %v4206
    %v4209 = vmul.f32 %v4207, %v4207
    %v4210 = vsel %vm75, %v4208, 0.0
    %4211 = vadd.xlane.f32.xlu0 %v4210
    %v4212 = vpop.xlane.xlu0 %4211
    %v4213 = vsel %vm75, %v4209, 0.0
    %4214 = vadd.xlane.f32.xlu0 %v4213
    %v4215 = vpop.xlane.xlu0 %4214
    %v4216 = vmul.f32 %v4212, %v83
    %v4217 = vmul.f32 %v4215, %v83
    %v4218 = vadd.f32 %v4216, 1e-05
    %v4219 = vadd.f32 %v4217, 1e-05
    %v4220 = vrsqrt.pop %v4218
    %v4221 = vrsqrt.pop %v4219
    %v4222 = vmul.f32 %v4206, %v4220
    %v4223 = vmul.f32 %v4207, %v4221
    %v4225 = vlaneseq
    %v4226 = vshrl.u32 %v4225, 7
    %v4227 = vsub.s32 0, %v4226
    %v4228 = vrot.slane %v4195, %v4227
    %v4230 = vmul.f32 %v4222, %v4228
    %v4231 = vmul.f32 %v4223, %v4228
    %v4233 = vlaneseq
    %v4234 = vshrl.u32 %v4233, 7
    %v4235 = vsub.s32 0, %v4234
    %v4236 = vrot.slane %v4197, %v4235
    %v4238 = vadd.f32 %v4230, %v4236
    %v4239 = vadd.f32 %v4231, %v4236
    %s4240 = scalar_lea.vmem %s15, 32
    %v4241 = vld [vmem:[%s4240] sm:$0xff]
    %v4242 = vld [vmem:[%s4240 + $0x8] sm:$0xff]
    %v4243 = vld [vmem:[%s4240 + $0x10] sm:$0xff]
    %v4244 = vld [vmem:[%s4240 + $0x18] sm:$0xff]
    %s4245 = scalar_lea.vmem %s16, 1
    %v4246 = vld [vmem:[%s4245] sm:$0x1]
    %v4248 = vlaneseq
    %v4249 = vshrl.u32 %v4248, 7
    %v4250 = vsub.s32 0, %v4249
    %v4251 = vrot.slane %v4246, %v4250
    %v4254 = vsel %vm75, %v4238, 0
    %v4257 = vsel %vm75, %v4239, 0
    %4259 = vmatprep.subr.mxu0 0.0
    %4260 = vmatpush1.msra.mxu0 %v4241
    %4261 = vmatprep.subr.mxu0 0.0
    %4262 = vmatpush1.msra.mxu0 %v4242
    %4263 = vmatprep.subr.mxu0 0.0
    %4264 = vmatpush1.msra.mxu0 %v4243
    %4265 = vmatprep.subr.mxu0 0.0
    %4266 = vmatpush1.msra.mxu0 %v4244
    %4267 = vmatprep.subr.mxu0 0.0
    %4268 = vmatpush1.msra.mxu0 0.0
    %4269 = vmatprep.subr.mxu0 0.0
    %4270 = vmatpush1.msra.mxu0 0.0
    %4271 = vmatprep.subr.mxu0 0.0
    %4272 = vmatpush1.msra.mxu0 0.0
    %4273 = vmatprep.subr.mxu0 0.0
    %4274 = vmatpush1.msra.mxu0 0.0
    %4275 = vmatprep.subr.mxu0 0.0
    %4276 = vmatpush1.msra.mxu0 0.0
    %4277 = vmatprep.subr.mxu0 0.0
    %4278 = vmatpush1.msra.mxu0 0.0
    %4279 = vmatprep.subr.mxu0 0.0
    %4280 = vmatpush1.msra.mxu0 0.0
    %4281 = vmatprep.subr.mxu0 0.0
    %4282 = vmatpush1.msra.mxu0 0.0
    %4283 = vmatprep.subr.mxu0 0.0
    %4284 = vmatpush1.msra.mxu0 0.0
    %4285 = vmatprep.subr.mxu0 0.0
    %4286 = vmatpush1.msra.mxu0 0.0
    %4287 = vmatprep.subr.mxu0 0.0
    %4288 = vmatpush1.msra.mxu0 0.0
    %4289 = vmatprep.subr.mxu0 0.0
    %4290 = vmatpush1.msra.mxu0 0.0
    %4291 = vmatprep.subr.mxu0 0.0
    %4292 = vmatpush1.msra.mxu0 0.0
    %4293 = vmatprep.subr.mxu0 0.0
    %4294 = vmatpush1.msra.mxu0 0.0
    %4295 = vmatprep.subr.mxu0 0.0
    %4296 = vmatpush1.msra.mxu0 0.0
    %4297 = vmatprep.subr.mxu0 0.0
    %4298 = vmatpush1.msra.mxu0 0.0
    %4299 = vmatprep.subr.mxu0 0.0
    %4300 = vmatpush1.msra.mxu0 0.0
    %4301 = vmatprep.subr.mxu0 0.0
    %4302 = vmatpush1.msra.mxu0 0.0
    %4303 = vmatprep.subr.mxu0 0.0
    %4304 = vmatpush1.msra.mxu0 0.0
    %4305 = vmatprep.subr.mxu0 0.0
    %4306 = vmatpush1.msra.mxu0 0.0
    %4307 = vmatprep.subr.mxu0 0.0
    %4308 = vmatpush1.msra.mxu0 0.0
    %4309 = vmatprep.subr.mxu0 0.0
    %4310 = vmatpush1.msra.mxu0 0.0
    %4311 = vmatprep.subr.mxu0 0.0
    %4312 = vmatpush1.msra.mxu0 0.0
    %4313 = vmatprep.subr.mxu0 0.0
    %4314 = vmatpush1.msra.mxu0 0.0
    %4315 = vmatprep.subr.mxu0 0.0
    %4316 = vmatpush1.msra.mxu0 0.0
    %4317 = vmatprep.subr.mxu0 0.0
    %4318 = vmatpush1.msra.mxu0 0.0
    %4319 = vmatprep.subr.mxu0 0.0
    %4320 = vmatpush1.msra.mxu0 0.0
    %4321 = vmatprep.subr.mxu0 0.0
    %4322 = vmatpush1.msra.mxu0 0.0
    %4323 = vmatprep.mubr.f32.mxu0 0.0
    %4324 = vmatmul.mubr.f32.gmra.mrb[0].mxu0 %v4254
    %v4325 = vpop.f32.mrb[0].mxu0
    %v4326 = vadd.f32 %v4251, %v4325
    %v4327 = vpop.f32.mrb[0].mxu0
    %4328 = vmatprep.mubr.f32.mxu0 0.0
    %4329 = vmatmul.mubr.f32.gmra.mrb[0].mxu0 %v4257
    %v4330 = vpop.f32.mrb[0].mxu0
    %v4331 = vadd.f32 %v4251, %v4330
    %v4332 = vpop.f32.mrb[0].mxu0
    %4333 = vdwg.mxu0
    %v4334 = vmax.f32 %v4326, 0.0
    %v4335 = vmax.f32 %v4331, 0.0
    %s4336 = scalar_lea.vmem %s17, 64
    %v4337 = vld [vmem:[%s4336] sm:$0xff]
    %v4338 = vld [vmem:[%s4336 + $0x8] sm:$0xff]
    %v4339 = vld [vmem:[%s4336 + $0x10] sm:$0xff]
    %v4340 = vld [vmem:[%s4336 + $0x18] sm:$0xff]
    %v4341 = vld [vmem:[%s4336 + $0x20] sm:$0xff]
    %v4342 = vld [vmem:[%s4336 + $0x28] sm:$0xff]
    %v4343 = vld [vmem:[%s4336 + $0x30] sm:$0xff]
    %v4344 = vld [vmem:[%s4336 + $0x38] sm:$0xff]
    %s4345 = scalar_lea.vmem %s18, 1
    %v4346 = vld [vmem:[%s4345] sm:$0x1]
    %v4348 = vlaneseq
    %v4349 = vshrl.u32 %v4348, 7
    %v4350 = vsub.s32 0, %v4349
    %v4351 = vrot.slane %v4346, %v4350
    %v4354 = vsel %vm2522, %v4334, 0
    %v4357 = vsel %vm2522, %v4335, 0
    %4359 = vmatprep.subr.mxu0 0.0
    %4360 = vmatpush1.msra.mxu0 %v4337
    %4361 = vmatprep.subr.mxu0 0.0
    %4362 = vmatpush1.msra.mxu0 %v4338
    %4363 = vmatprep.subr.mxu0 0.0
    %4364 = vmatpush1.msra.mxu0 %v4339
    %4365 = vmatprep.subr.mxu0 0.0
    %4366 = vmatpush1.msra.mxu0 %v4340
    %4367 = vmatprep.subr.mxu0 0.0
    %4368 = vmatpush1.msra.mxu0 %v4341
    %4369 = vmatprep.subr.mxu0 0.0
    %4370 = vmatpush1.msra.mxu0 %v4342
    %4371 = vmatprep.subr.mxu0 0.0
    %4372 = vmatpush1.msra.mxu0 %v4343
    %4373 = vmatprep.subr.mxu0 0.0
    %4374 = vmatpush1.msra.mxu0 %v4344
    %4375 = vmatprep.subr.mxu0 0.0
    %4376 = vmatpush1.msra.mxu0 0.0
    %4377 = vmatprep.subr.mxu0 0.0
    %4378 = vmatpush1.msra.mxu0 0.0
    %4379 = vmatprep.subr.mxu0 0.0
    %4380 = vmatpush1.msra.mxu0 0.0
    %4381 = vmatprep.subr.mxu0 0.0
    %4382 = vmatpush1.msra.mxu0 0.0
    %4383 = vmatprep.subr.mxu0 0.0
    %4384 = vmatpush1.msra.mxu0 0.0
    %4385 = vmatprep.subr.mxu0 0.0
    %4386 = vmatpush1.msra.mxu0 0.0
    %4387 = vmatprep.subr.mxu0 0.0
    %4388 = vmatpush1.msra.mxu0 0.0
    %4389 = vmatprep.subr.mxu0 0.0
    %4390 = vmatpush1.msra.mxu0 0.0
    %4391 = vmatprep.subr.mxu0 0.0
    %4392 = vmatpush1.msra.mxu0 0.0
    %4393 = vmatprep.subr.mxu0 0.0
    %4394 = vmatpush1.msra.mxu0 0.0
    %4395 = vmatprep.subr.mxu0 0.0
    %4396 = vmatpush1.msra.mxu0 0.0
    %4397 = vmatprep.subr.mxu0 0.0
    %4398 = vmatpush1.msra.mxu0 0.0
    %4399 = vmatprep.subr.mxu0 0.0
    %4400 = vmatpush1.msra.mxu0 0.0
    %4401 = vmatprep.subr.mxu0 0.0
    %4402 = vmatpush1.msra.mxu0 0.0
    %4403 = vmatprep.subr.mxu0 0.0
    %4404 = vmatpush1.msra.mxu0 0.0
    %4405 = vmatprep.subr.mxu0 0.0
    %4406 = vmatpush1.msra.mxu0 0.0
    %4407 = vmatprep.subr.mxu0 0.0
    %4408 = vmatpush1.msra.mxu0 0.0
    %4409 = vmatprep.subr.mxu0 0.0
    %4410 = vmatpush1.msra.mxu0 0.0
    %4411 = vmatprep.subr.mxu0 0.0
    %4412 = vmatpush1.msra.mxu0 0.0
    %4413 = vmatprep.subr.mxu0 0.0
    %4414 = vmatpush1.msra.mxu0 0.0
    %4415 = vmatprep.subr.mxu0 0.0
    %4416 = vmatpush1.msra.mxu0 0.0
    %4417 = vmatprep.subr.mxu0 0.0
    %4418 = vmatpush1.msra.mxu0 0.0
    %4419 = vmatprep.subr.mxu0 0.0
    %4420 = vmatpush1.msra.mxu0 0.0
    %4421 = vmatprep.subr.mxu0 0.0
    %4422 = vmatpush1.msra.mxu0 0.0
    %4423 = vmatprep.mubr.f32.mxu0 0.0
    %4424 = vmatmul.mubr.f32.gmra.mrb[0].mxu0 %v4354
    %v4425 = vpop.f32.mrb[0].mxu0
    %v4426 = vadd.f32 %v4351, %v4425
    %v4427 = vpop.f32.mrb[0].mxu0
    %4428 = vmatprep.mubr.f32.mxu0 0.0
    %4429 = vmatmul.mubr.f32.gmra.mrb[0].mxu0 %v4357
    %v4430 = vpop.f32.mrb[0].mxu0
    %v4431 = vadd.f32 %v4351, %v4430
    %v4432 = vpop.f32.mrb[0].mxu0
    %4433 = vdwg.mxu0
    %v4434 = vadd.f32 %v4238, %v4426
    %v4435 = vadd.f32 %v4239, %v4431
    %s4436 = scalar_lea.vmem %s19, 1
    %v4437 = vld [vmem:[%s4436] sm:$0x1]
    %s4438 = scalar_lea.vmem %s20, 1
    %v4439 = vld [vmem:[%s4438] sm:$0x1]
    %v4440 = vsel %vm75, %v4434, 0.0
    %4441 = vadd.xlane.f32.xlu0 %v4440
    %v4442 = vpop.xlane.xlu0 %4441
    %v4443 = vsel %vm75, %v4435, 0.0
    %4444 = vadd.xlane.f32.xlu0 %v4443
    %v4445 = vpop.xlane.xlu0 %4444
    %v4446 = vmul.f32 %v4442, %v83
    %v4447 = vmul.f32 %v4445, %v83
    %v4448 = vsub.f32 %v4434, %v4446
    %v4449 = vsub.f32 %v4435, %v4447
    %v4450 = vmul.f32 %v4448, %v4448
    %v4451 = vmul.f32 %v4449, %v4449
    %v4452 = vsel %vm75, %v4450, 0.0
    %4453 = vadd.xlane.f32.xlu0 %v4452
    %v4454 = vpop.xlane.xlu0 %4453
    %v4455 = vsel %vm75, %v4451, 0.0
    %4456 = vadd.xlane.f32.xlu0 %v4455
    %v4457 = vpop.xlane.xlu0 %4456
    %v4458 = vmul.f32 %v4454, %v83
    %v4459 = vmul.f32 %v4457, %v83
    %v4460 = vadd.f32 %v4458, 1e-05
    %v4461 = vadd.f32 %v4459, 1e-05
    %v4462 = vrsqrt.pop %v4460
    %v4463 = vrsqrt.pop %v4461
    %v4464 = vmul.f32 %v4448, %v4462
    %v4465 = vmul.f32 %v4449, %v4463
    %v4467 = vlaneseq
    %v4468 = vshrl.u32 %v4467, 7
    %v4469 = vsub.s32 0, %v4468
    %v4470 = vrot.slane %v4437, %v4469
    %v4472 = vmul.f32 %v4464, %v4470
    %v4473 = vmul.f32 %v4465, %v4470
    %v4475 = vlaneseq
    %v4476 = vshrl.u32 %v4475, 7
    %v4477 = vsub.s32 0, %v4476
    %v4478 = vrot.slane %v4439, %v4477
    %v4480 = vadd.f32 %v4472, %v4478
    %v4481 = vadd.f32 %v4473, %v4478
    %s4482 = scalar_lea.vmem %s21, 16
    %4483 = vst.msk [vmem:[%s4482] sm:$0xff] %vm75, %v4480
    %4484 = vst.msk [vmem:[%s4482 + $0x8] sm:$0xff] %vm75, %v4481
    // Predicated region
    $region86: #{forward.1} parent=1 // pred_check
      _
    $region87: #{forward.1} parent=1 // pred_check_branch
      %4486 = sbr.rel (0) target = $region89
    $region88: #{forward.1} parent=1 // pred_region
      _
    $region89: #{forward.1} parent=1 // pred_fallthru
      _
    // Predicated region
    $region90: #{forward.1} parent=1 // pred_check
      _
    $region91: #{forward.1} parent=1 // pred_check_branch
      %4488 = sbr.rel (0) target = $region93
    $region92: #{forward.1} parent=1 // pred_region
      %s4490 = ssub.s32 512, 512
      %4491 = vsyncadd [#allocation4], %s4490
      %s4492 = sshll.u32 [#allocation3], 4
      %s4493 = int_to_ptr.vmem [resolvable:$true] %s4492
      %4498 = dma.vmem_to_hbm [thread:$0]  %s4493, 512, %s22, [#allocation4], 128, 128, 8
    $region93: #{forward.1} parent=1 // pred_fallthru
      _
    // Predicated region
    $region94: #{forward.1} parent=1 // pred_check
      _
    $region95: #{forward.1} parent=1 // pred_check_branch
      %4500 = sbr.rel (0) target = $region97
    $region96: #{forward.1} parent=1 // pred_region
      _
    $region97: #{forward.1} parent=1 // pred_fallthru
      _
    // Predicated region
    $region98: #{forward.1} parent=1 // pred_check
      _
    $region99: #{forward.1} parent=1 // pred_check_branch
      %4502 = sbr.rel (0) target = $region101
    $region100: #{forward.1} parent=1 // pred_region
      %4503 = dma.done [#allocation4], 512
    $region101: #{forward.1} parent=1 // pred_fallthru
      _
    %4504 = vsyncpa [#allocation4], 1

</llo_original>
